<compile_context>
chip_gen: v5e
topology: v5e:2x2
jax: 0.10.0
libtpu: 0.0.40
codegen_flags: <defaults>
</compile_context>

<pallas_src>
import jax
import jax.numpy as jnp
import numpy as np
from jax.experimental import pallas as pl
from jax.experimental.pallas import tpu as pltpu

_BT = 8                           # images (rows) per grid step
_VMEM_LIMIT = 32 * 1024 * 1024    # explicit scoped-VMEM limit (safe on v5e/v6e/v7x)


# ----------------------------- Pallas kernels ------------------------------

def _convs_kernel(x_ref, psel_ref, c1w_ref, c1b_ref, c2w_ref, c2b_ref, o_ref):
    """conv1 -> 2x2 maxpool -> relu -> conv2 -> relu for one batch tile."""
    nb = x_ref.shape[0]

    # --- conv1 as 5 banded MXU matmuls: rows=(n, i), lanes = j*10 + co ---
    y = None
    for dh in range(5):
        xs = x_ref[:, dh:dh + 24, :].reshape(nb * 24, 28)           # (nb*24, 28)
        part = jnp.dot(xs, c1w_ref[dh], preferred_element_type=jnp.float32)
        y = part if y is None else y + part
    y = y + c1b_ref[...]                                            # (nb*24, 240)

    # --- 2x2 max-pool + ReLU ---
    # pool H: max of adjacent row pairs, keep even rows with a precomputed
    #         0/1 selection matrix (a plain matmul; cross-image pairs and the
    #         4 padding rows per image are never selected / never read).
    yadj = jnp.maximum(y[:nb * 24 - 1, :], y[1:, :])                # (nb*24-1, 240)
    ph = jnp.dot(psel_ref[...], yadj,
                 preferred_element_type=jnp.float32)                # (nb*16, 240)
    # pool W: column pairs are 10 lanes apart (lane = j*10 + co).
    pooled = jnp.maximum(jnp.maximum(ph[:, :230], ph[:, 10:]), 0.0)  # (nb*16, 230)
    pooled3 = pooled.reshape(nb, 16, 230)                           # rows 12..15 unused

    # --- conv2 (+ReLU) as 5 banded MXU matmuls: rows=(n, io), lanes = jo*20 + co ---
    acc = None
    for dh in range(5):
        s = pooled3[:, dh:dh + 8, :].reshape(nb * 8, 230).astype(jnp.bfloat16)
        part = jnp.dot(s, c2w_ref[dh], preferred_element_type=jnp.float32)
        acc = part if acc is None else acc + part
    c2 = jnp.maximum(acc + c2b_ref[...], 0.0)                       # (nb*8, 160)
    o_ref[...] = c2.reshape(nb, 8, 160).astype(o_ref.dtype)


def _head_kernel(x_ref, w1_ref, b1_ref, w2_ref, b2_ref, o_ref):
    """fc1 + ReLU + fc2 (padded to 128 lanes) + log_softmax for one row tile."""
    h = jnp.dot(x_ref[...].astype(jnp.bfloat16), w1_ref[...],
                preferred_element_type=jnp.float32) + b1_ref[...]
    h = jnp.maximum(h, 0.0)
    logits = jnp.dot(h.astype(jnp.bfloat16), w2_ref[...],
                     preferred_element_type=jnp.float32) + b2_ref[...]
    m = jnp.max(logits, axis=-1, keepdims=True)
    s = logits - m
    lse = jnp.log(jnp.sum(jnp.exp(s), axis=-1, keepdims=True))
    o_ref[...] = (s - lse).astype(o_ref.dtype)


# ------------------------ host-side weight packing --------------------------

def _conv1_bands(w1):
    """w1: torch layout (10, 1, 5, 5).  B[dh, j+dw, j*10+co] = w1[co, 0, dh, dw]."""
    b = np.zeros((5, 28, 240), np.float32)
    for dh in range(5):
        for j in range(24):
            for dw in range(5):
                for co in range(10):
                    b[dh, j + dw, j * 10 + co] = w1[co, 0, dh, dw]
    return b


def _conv2_bands(w2):
    """w2: torch layout (20, 10, 5, 5).
    Pooled lane layout is 20*j' + ci, so C[dh, 20*(jo+dw)+ci, jo*20+co] = w2[co,ci,dh,dw]."""
    c = np.zeros((5, 230, 160), np.float32)
    for dh in range(5):
        for jo in range(8):
            for dw in range(5):
                for ci in range(10):
                    for co in range(20):
                        c[dh, 20 * (jo + dw) + ci, jo * 20 + co] = w2[co, ci, dh, dw]
    return c


def _poolh_select(nb):
    """(nb*16, nb*24-1) 0/1 matrix: keep max-of-adjacent-rows at even rows."""
    p = np.zeros((nb * 16, nb * 24 - 1), np.float32)
    for n in range(nb):
        for i in range(12):
            p[n * 16 + i, n * 24 + 2 * i] = 1.0
    return p


def init_params(key):
    """Draw torch-equivalent parameters (uniform +/- 1/sqrt(fan_in)) and repack."""
    ks = jax.random.split(key, 8)

    def u(k, shape, fan_in):
        bound = 1.0 / np.sqrt(float(fan_in))
        return np.asarray(jax.random.uniform(k, shape, jnp.float32, -bound, bound))

    conv1_w = u(ks[0], (10, 1, 5, 5), 25)
    conv1_b = u(ks[1], (10,), 25)
    conv2_w = u(ks[2], (20, 10, 5, 5), 250)
    conv2_b = u(ks[3], (20,), 250)
    fc1_w = u(ks[4], (256, 1280), 1280)
    fc1_b = u(ks[5], (256,), 1280)
    fc2_w = u(ks[6], (62, 256), 256)
    fc2_b = u(ks[7], (62,), 256)

    # fc1 rows permuted once so the kernel-A (h, w, c) flatten needs no runtime
    # transpose: row h*160 + w*20 + c  <-  torch column c*64 + h*8 + w.
    fc1_wp = fc1_w.reshape(256, 20, 8, 8).transpose(2, 3, 1, 0).reshape(1280, 256)
    # fc2 padded to 128 output lanes; padded bias = -1e30 so exp() underflows to 0.
    fc2_wp = np.concatenate([fc2_w.T, np.zeros((256, 66), np.float32)], axis=1)
    fc2_bp = np.concatenate([fc2_b, np.full((66,), -1e30, np.float32)])

    return {
        "conv1_bands": jnp.asarray(_conv1_bands(conv1_w)),                 # f32 (5,28,240)
        "conv1_bias": jnp.asarray(np.tile(conv1_b, 24)[None, :]),          # f32 (1,240)
        "conv2_bands": jnp.asarray(_conv2_bands(conv2_w), dtype=jnp.bfloat16),  # (5,230,160)
        "conv2_bias": jnp.asarray(np.tile(conv2_b, 8)[None, :]),           # f32 (1,160)
        "fc1_w": jnp.asarray(fc1_wp, dtype=jnp.bfloat16),                  # (1280,256)
        "fc1_b": jnp.asarray(fc1_b[None, :]),                              # f32 (1,256)
        "fc2_w": jnp.asarray(fc2_wp, dtype=jnp.bfloat16),                  # (256,128)
        "fc2_b": jnp.asarray(fc2_bp[None, :]),                             # f32 (1,128)
    }


# --------------------------------- forward ----------------------------------

def emnist_forward(x, params):
    """x: (N, 1, 28, 28) float32 (NCHW as in the PyTorch model) -> (N, 62) log-probs."""
    n = int(x.shape[0])
    x2 = x.reshape(n, 28, 28).astype(jnp.float32)

    # Pad the batch to a multiple of the tile; use >=2 grid steps when there is
    # more than one sample so v7x can spread steps over both TensorCores.
    n_pad = -(-n // _BT) * _BT
    if n > 1 and n_pad // _BT < 2:
        n_pad = 2 * _BT
    if n_pad != n:
        x2 = jnp.pad(x2, ((0, n_pad - n), (0, 0), (0, 0)))
    grid = (n_pad // _BT,)

    psel = jnp.asarray(_poolh_select(_BT))                  # (128, 191) constant

    # --- kernel A: conv1 + maxpool + relu + conv2 + relu ---
    c2 = pl.pallas_call(
        _convs_kernel,
        out_shape=jax.ShapeDtypeStruct((n_pad, 8, 160), jnp.float32),
        grid_spec=pltpu.PrefetchScalarGridSpec(
            num_scalar_prefetch=0,
            grid=grid,
            in_specs=[
                pl.BlockSpec((_BT, 28, 28), lambda i: (i, 0, 0)),
                pl.BlockSpec((_BT * 16, _BT * 24 - 1), lambda i: (0, 0)),
                pl.BlockSpec((5, 28, 240), lambda i: (0, 0, 0)),
                pl.BlockSpec((1, 240), lambda i: (0, 0)),
                pl.BlockSpec((5, 230, 160), lambda i: (0, 0, 0)),
                pl.BlockSpec((1, 160), lambda i: (0, 0)),
            ],
            out_specs=pl.BlockSpec((_BT, 8, 160), lambda i: (i, 0, 0)),
        ),
        compiler_params=pltpu.CompilerParams(
            dimension_semantics=("parallel",),
            vmem_limit_bytes=_VMEM_LIMIT),
    )(x2, psel, params["conv1_bands"], params["conv1_bias"],
      params["conv2_bands"], params["conv2_bias"])

    # (h, w, c) flatten -- a free XLA reshape; fc1 weight rows were permuted to match.
    flat = c2.reshape(n_pad, 1280)

    # --- kernel B: fc1 + relu + fc2 + log_softmax ---
    out = pl.pallas_call(
        _head_kernel,
        out_shape=jax.ShapeDtypeStruct((n_pad, 128), jnp.float32),
        grid_spec=pltpu.PrefetchScalarGridSpec(
            num_scalar_prefetch=0,
            grid=grid,
            in_specs=[
                pl.BlockSpec((_BT, 1280), lambda i: (i, 0)),
                pl.BlockSpec((1280, 256), lambda i: (0, 0)),
                pl.BlockSpec((1, 256), lambda i: (0, 0)),
                pl.BlockSpec((256, 128), lambda i: (0, 0)),
                pl.BlockSpec((1, 128), lambda i: (0, 0)),
            ],
            out_specs=pl.BlockSpec((_BT, 128), lambda i: (i, 0)),
        ),
        compiler_params=pltpu.CompilerParams(
            dimension_semantics=("parallel",),
            vmem_limit_bytes=_VMEM_LIMIT),
    )(flat, params["fc1_w"], params["fc1_b"], params["fc2_w"], params["fc2_b"])

    return out[:n, :62]


if __name__ == "__main__":
    key = jax.random.PRNGKey(0)
    kx, kp = jax.random.split(key)
    # fc1 expects 1280 = 20*8*8 features, which forces 28x28 single-channel input.
    x = jax.random.normal(kx, (2, 1, 28, 28), jnp.float32)
    params = init_params(kp)

    out = jax.jit(emnist_forward)(x, params)
    out = jax.block_until_ready(out)
    assert out.shape == (2, 62), out.shape
    assert bool(jnp.all(jnp.isfinite(out)))
    print("KERNEL_OK")
</pallas_src>

<mosaic_0001>
module attributes {stable_mosaic.version = 11 : i64} {
  func.func @_convs_kernel(%arg0: i32, %arg1: memref<8x28x28xf32, #tpu.memory_space<vmem>>, %arg2: memref<128x191xf32, #tpu.memory_space<vmem>>, %arg3: memref<5x28x240xf32, #tpu.memory_space<vmem>>, %arg4: memref<1x240xf32, #tpu.memory_space<vmem>>, %arg5: memref<5x230x160xbf16, #tpu.memory_space<vmem>>, %arg6: memref<1x160xf32, #tpu.memory_space<vmem>>, %arg7: memref<8x8x160xf32, #tpu.memory_space<vmem>>) attributes {dimension_semantics = [#tpu.dimension_semantics<parallel>], iteration_bounds = array<i64: 2>, scalar_prefetch = 0 : i64, scratch_operands = 0 : i64, tpu.core_type = #tpu.core_type<tc>, window_params = [{transform_indices = @transform_0, window_bounds = array<i64: 8, 28, 28>}, {pipeline_mode = #tpu.pipeline_mode<synchronous>, transform_indices = @transform_1, window_bounds = array<i64: 128, 191>}, {pipeline_mode = #tpu.pipeline_mode<synchronous>, transform_indices = @transform_2, window_bounds = array<i64: 5, 28, 240>}, {pipeline_mode = #tpu.pipeline_mode<synchronous>, transform_indices = @transform_3, window_bounds = array<i64: 1, 240>}, {pipeline_mode = #tpu.pipeline_mode<synchronous>, transform_indices = @transform_4, window_bounds = array<i64: 5, 230, 160>}, {pipeline_mode = #tpu.pipeline_mode<synchronous>, transform_indices = @transform_5, window_bounds = array<i64: 1, 160>}, {transform_indices = @transform_6, window_bounds = array<i64: 8, 8, 160>}]} {
    %c0 = arith.constant 0 : index
    %c0_0 = arith.constant 0 : index
    %c0_1 = arith.constant 0 : index
    %0 = vector.load %arg1[%c0, %c0_0, %c0_1] : memref<8x28x28xf32, #tpu.memory_space<vmem>>, vector<8x24x28xf32>
    %1 = vector.shape_cast %0 : vector<8x24x28xf32> to vector<192x28xf32>
    %c0_2 = arith.constant 0 : index
    %c0_3 = arith.constant 0 : index
    %c0_4 = arith.constant 0 : index
    %2 = vector.load %arg3[%c0_2, %c0_3, %c0_4] : memref<5x28x240xf32, #tpu.memory_space<vmem>>, vector<1x28x240xf32>
    %3 = vector.shape_cast %2 : vector<1x28x240xf32> to vector<28x240xf32>
    %cst = arith.constant dense<0.000000e+00> : vector<192x240xf32>
    %4 = tpu.matmul %1, %3, %cst {dimension_numbers = #tpu.dot_dimension_numbers<[1], [0], [0], [1], [0, 0, 1, 1], [], []>} : vector<192x28xf32>, vector<28x240xf32>, vector<192x240xf32> -> vector<192x240xf32>
    %c0_5 = arith.constant 0 : index
    %c1 = arith.constant 1 : index
    %c0_6 = arith.constant 0 : index
    %5 = vector.load %arg1[%c0_5, %c1, %c0_6] : memref<8x28x28xf32, #tpu.memory_space<vmem>>, vector<8x24x28xf32>
    %6 = vector.shape_cast %5 : vector<8x24x28xf32> to vector<192x28xf32>
    %c1_7 = arith.constant 1 : index
    %c0_8 = arith.constant 0 : index
    %c0_9 = arith.constant 0 : index
    %7 = vector.load %arg3[%c1_7, %c0_8, %c0_9] : memref<5x28x240xf32, #tpu.memory_space<vmem>>, vector<1x28x240xf32>
    %8 = vector.shape_cast %7 : vector<1x28x240xf32> to vector<28x240xf32>
    %cst_10 = arith.constant dense<0.000000e+00> : vector<192x240xf32>
    %9 = tpu.matmul %6, %8, %cst_10 {dimension_numbers = #tpu.dot_dimension_numbers<[1], [0], [0], [1], [0, 0, 1, 1], [], []>} : vector<192x28xf32>, vector<28x240xf32>, vector<192x240xf32> -> vector<192x240xf32>
    %10 = arith.addf %4, %9 : vector<192x240xf32>
    %c0_11 = arith.constant 0 : index
    %c2 = arith.constant 2 : index
    %c0_12 = arith.constant 0 : index
    %11 = vector.load %arg1[%c0_11, %c2, %c0_12] : memref<8x28x28xf32, #tpu.memory_space<vmem>>, vector<8x24x28xf32>
    %12 = vector.shape_cast %11 : vector<8x24x28xf32> to vector<192x28xf32>
    %c2_13 = arith.constant 2 : index
    %c0_14 = arith.constant 0 : index
    %c0_15 = arith.constant 0 : index
    %13 = vector.load %arg3[%c2_13, %c0_14, %c0_15] : memref<5x28x240xf32, #tpu.memory_space<vmem>>, vector<1x28x240xf32>
    %14 = vector.shape_cast %13 : vector<1x28x240xf32> to vector<28x240xf32>
    %cst_16 = arith.constant dense<0.000000e+00> : vector<192x240xf32>
    %15 = tpu.matmul %12, %14, %cst_16 {dimension_numbers = #tpu.dot_dimension_numbers<[1], [0], [0], [1], [0, 0, 1, 1], [], []>} : vector<192x28xf32>, vector<28x240xf32>, vector<192x240xf32> -> vector<192x240xf32>
    %16 = arith.addf %10, %15 : vector<192x240xf32>
    %c0_17 = arith.constant 0 : index
    %c3 = arith.constant 3 : index
    %c0_18 = arith.constant 0 : index
    %17 = vector.load %arg1[%c0_17, %c3, %c0_18] : memref<8x28x28xf32, #tpu.memory_space<vmem>>, vector<8x24x28xf32>
    %18 = vector.shape_cast %17 : vector<8x24x28xf32> to vector<192x28xf32>
    %c3_19 = arith.constant 3 : index
    %c0_20 = arith.constant 0 : index
    %c0_21 = arith.constant 0 : index
    %19 = vector.load %arg3[%c3_19, %c0_20, %c0_21] : memref<5x28x240xf32, #tpu.memory_space<vmem>>, vector<1x28x240xf32>
    %20 = vector.shape_cast %19 : vector<1x28x240xf32> to vector<28x240xf32>
    %cst_22 = arith.constant dense<0.000000e+00> : vector<192x240xf32>
    %21 = tpu.matmul %18, %20, %cst_22 {dimension_numbers = #tpu.dot_dimension_numbers<[1], [0], [0], [1], [0, 0, 1, 1], [], []>} : vector<192x28xf32>, vector<28x240xf32>, vector<192x240xf32> -> vector<192x240xf32>
    %22 = arith.addf %16, %21 : vector<192x240xf32>
    %c0_23 = arith.constant 0 : index
    %c4 = arith.constant 4 : index
    %c0_24 = arith.constant 0 : index
    %23 = vector.load %arg1[%c0_23, %c4, %c0_24] : memref<8x28x28xf32, #tpu.memory_space<vmem>>, vector<8x24x28xf32>
    %24 = vector.shape_cast %23 : vector<8x24x28xf32> to vector<192x28xf32>
    %c4_25 = arith.constant 4 : index
    %c0_26 = arith.constant 0 : index
    %c0_27 = arith.constant 0 : index
    %25 = vector.load %arg3[%c4_25, %c0_26, %c0_27] : memref<5x28x240xf32, #tpu.memory_space<vmem>>, vector<1x28x240xf32>
    %26 = vector.shape_cast %25 : vector<1x28x240xf32> to vector<28x240xf32>
    %cst_28 = arith.constant dense<0.000000e+00> : vector<192x240xf32>
    %27 = tpu.matmul %24, %26, %cst_28 {dimension_numbers = #tpu.dot_dimension_numbers<[1], [0], [0], [1], [0, 0, 1, 1], [], []>} : vector<192x28xf32>, vector<28x240xf32>, vector<192x240xf32> -> vector<192x240xf32>
    %28 = arith.addf %22, %27 : vector<192x240xf32>
    %c0_29 = arith.constant 0 : index
    %c0_30 = arith.constant 0 : index
    %29 = vector.load %arg4[%c0_29, %c0_30] : memref<1x240xf32, #tpu.memory_space<vmem>>, vector<1x240xf32>
    %30 = vector.broadcast %29 : vector<1x240xf32> to vector<192x240xf32>
    %31 = arith.addf %28, %30 : vector<192x240xf32>
    %32 = vector.extract_strided_slice %31 {offsets = [0, 0], sizes = [191, 240], strides = [1, 1]} : vector<192x240xf32> to vector<191x240xf32>
    %33 = vector.extract_strided_slice %31 {offsets = [1, 0], sizes = [191, 240], strides = [1, 1]} : vector<192x240xf32> to vector<191x240xf32>
    %34 = arith.maximumf %32, %33 : vector<191x240xf32>
    %c0_31 = arith.constant 0 : index
    %c0_32 = arith.constant 0 : index
    %35 = vector.load %arg2[%c0_31, %c0_32] : memref<128x191xf32, #tpu.memory_space<vmem>>, vector<128x191xf32>
    %cst_33 = arith.constant dense<0.000000e+00> : vector<128x240xf32>
    %36 = tpu.matmul %35, %34, %cst_33 {dimension_numbers = #tpu.dot_dimension_numbers<[1], [0], [0], [1], [0, 0, 1, 1], [], []>} : vector<128x191xf32>, vector<191x240xf32>, vector<128x240xf32> -> vector<128x240xf32>
    %37 = vector.extract_strided_slice %36 {offsets = [0, 0], sizes = [128, 230], strides = [1, 1]} : vector<128x240xf32> to vector<128x230xf32>
    %38 = vector.extract_strided_slice %36 {offsets = [0, 10], sizes = [128, 230], strides = [1, 1]} : vector<128x240xf32> to vector<128x230xf32>
    %39 = arith.maximumf %37, %38 : vector<128x230xf32>
    %cst_34 = arith.constant 0.000000e+00 : f32
    %40 = vector.broadcast %cst_34 : f32 to vector<128x230xf32>
    %41 = arith.maximumf %39, %40 : vector<128x230xf32>
    %42 = vector.shape_cast %41 : vector<128x230xf32> to vector<8x16x230xf32>
    %43 = vector.extract_strided_slice %42 {offsets = [0, 0, 0], sizes = [8, 8, 230], strides = [1, 1, 1]} : vector<8x16x230xf32> to vector<8x8x230xf32>
    %44 = vector.shape_cast %43 : vector<8x8x230xf32> to vector<64x230xf32>
    %45 = arith.truncf %44 : vector<64x230xf32> to vector<64x230xbf16>
    %c0_35 = arith.constant 0 : index
    %c0_36 = arith.constant 0 : index
    %c0_37 = arith.constant 0 : index
    %46 = vector.load %arg5[%c0_35, %c0_36, %c0_37] : memref<5x230x160xbf16, #tpu.memory_space<vmem>>, vector<1x230x160xbf16>
    %47 = vector.shape_cast %46 : vector<1x230x160xbf16> to vector<230x160xbf16>
    %cst_38 = arith.constant dense<0.000000e+00> : vector<64x160xf32>
    %48 = tpu.matmul %45, %47, %cst_38 {dimension_numbers = #tpu.dot_dimension_numbers<[1], [0], [0], [1], [0, 0, 1, 1], [], []>} : vector<64x230xbf16>, vector<230x160xbf16>, vector<64x160xf32> -> vector<64x160xf32>
    %49 = vector.extract_strided_slice %42 {offsets = [0, 1, 0], sizes = [8, 8, 230], strides = [1, 1, 1]} : vector<8x16x230xf32> to vector<8x8x230xf32>
    %50 = vector.shape_cast %49 : vector<8x8x230xf32> to vector<64x230xf32>
    %51 = arith.truncf %50 : vector<64x230xf32> to vector<64x230xbf16>
    %c1_39 = arith.constant 1 : index
    %c0_40 = arith.constant 0 : index
    %c0_41 = arith.constant 0 : index
    %52 = vector.load %arg5[%c1_39, %c0_40, %c0_41] : memref<5x230x160xbf16, #tpu.memory_space<vmem>>, vector<1x230x160xbf16>
    %53 = vector.shape_cast %52 : vector<1x230x160xbf16> to vector<230x160xbf16>
    %cst_42 = arith.constant dense<0.000000e+00> : vector<64x160xf32>
    %54 = tpu.matmul %51, %53, %cst_42 {dimension_numbers = #tpu.dot_dimension_numbers<[1], [0], [0], [1], [0, 0, 1, 1], [], []>} : vector<64x230xbf16>, vector<230x160xbf16>, vector<64x160xf32> -> vector<64x160xf32>
    %55 = arith.addf %48, %54 : vector<64x160xf32>
    %56 = vector.extract_strided_slice %42 {offsets = [0, 2, 0], sizes = [8, 8, 230], strides = [1, 1, 1]} : vector<8x16x230xf32> to vector<8x8x230xf32>
    %57 = vector.shape_cast %56 : vector<8x8x230xf32> to vector<64x230xf32>
    %58 = arith.truncf %57 : vector<64x230xf32> to vector<64x230xbf16>
    %c2_43 = arith.constant 2 : index
    %c0_44 = arith.constant 0 : index
    %c0_45 = arith.constant 0 : index
    %59 = vector.load %arg5[%c2_43, %c0_44, %c0_45] : memref<5x230x160xbf16, #tpu.memory_space<vmem>>, vector<1x230x160xbf16>
    %60 = vector.shape_cast %59 : vector<1x230x160xbf16> to vector<230x160xbf16>
    %cst_46 = arith.constant dense<0.000000e+00> : vector<64x160xf32>
    %61 = tpu.matmul %58, %60, %cst_46 {dimension_numbers = #tpu.dot_dimension_numbers<[1], [0], [0], [1], [0, 0, 1, 1], [], []>} : vector<64x230xbf16>, vector<230x160xbf16>, vector<64x160xf32> -> vector<64x160xf32>
    %62 = arith.addf %55, %61 : vector<64x160xf32>
    %63 = vector.extract_strided_slice %42 {offsets = [0, 3, 0], sizes = [8, 8, 230], strides = [1, 1, 1]} : vector<8x16x230xf32> to vector<8x8x230xf32>
    %64 = vector.shape_cast %63 : vector<8x8x230xf32> to vector<64x230xf32>
    %65 = arith.truncf %64 : vector<64x230xf32> to vector<64x230xbf16>
    %c3_47 = arith.constant 3 : index
    %c0_48 = arith.constant 0 : index
    %c0_49 = arith.constant 0 : index
    %66 = vector.load %arg5[%c3_47, %c0_48, %c0_49] : memref<5x230x160xbf16, #tpu.memory_space<vmem>>, vector<1x230x160xbf16>
    %67 = vector.shape_cast %66 : vector<1x230x160xbf16> to vector<230x160xbf16>
    %cst_50 = arith.constant dense<0.000000e+00> : vector<64x160xf32>
    %68 = tpu.matmul %65, %67, %cst_50 {dimension_numbers = #tpu.dot_dimension_numbers<[1], [0], [0], [1], [0, 0, 1, 1], [], []>} : vector<64x230xbf16>, vector<230x160xbf16>, vector<64x160xf32> -> vector<64x160xf32>
    %69 = arith.addf %62, %68 : vector<64x160xf32>
    %70 = vector.extract_strided_slice %42 {offsets = [0, 4, 0], sizes = [8, 8, 230], strides = [1, 1, 1]} : vector<8x16x230xf32> to vector<8x8x230xf32>
    %71 = vector.shape_cast %70 : vector<8x8x230xf32> to vector<64x230xf32>
    %72 = arith.truncf %71 : vector<64x230xf32> to vector<64x230xbf16>
    %c4_51 = arith.constant 4 : index
    %c0_52 = arith.constant 0 : index
    %c0_53 = arith.constant 0 : index
    %73 = vector.load %arg5[%c4_51, %c0_52, %c0_53] : memref<5x230x160xbf16, #tpu.memory_space<vmem>>, vector<1x230x160xbf16>
    %74 = vector.shape_cast %73 : vector<1x230x160xbf16> to vector<230x160xbf16>
    %cst_54 = arith.constant dense<0.000000e+00> : vector<64x160xf32>
    %75 = tpu.matmul %72, %74, %cst_54 {dimension_numbers = #tpu.dot_dimension_numbers<[1], [0], [0], [1], [0, 0, 1, 1], [], []>} : vector<64x230xbf16>, vector<230x160xbf16>, vector<64x160xf32> -> vector<64x160xf32>
    %76 = arith.addf %69, %75 : vector<64x160xf32>
    %c0_55 = arith.constant 0 : index
    %c0_56 = arith.constant 0 : index
    %77 = vector.load %arg6[%c0_55, %c0_56] : memref<1x160xf32, #tpu.memory_space<vmem>>, vector<1x160xf32>
    %78 = vector.broadcast %77 : vector<1x160xf32> to vector<64x160xf32>
    %79 = arith.addf %76, %78 : vector<64x160xf32>
    %cst_57 = arith.constant 0.000000e+00 : f32
    %80 = vector.broadcast %cst_57 : f32 to vector<64x160xf32>
    %81 = arith.maximumf %79, %80 : vector<64x160xf32>
    %82 = vector.shape_cast %81 : vector<64x160xf32> to vector<8x8x160xf32>
    %c0_58 = arith.constant 0 : index
    %c0_59 = arith.constant 0 : index
    %c0_60 = arith.constant 0 : index
    %83 = vector.load %arg7[%c0_58, %c0_59, %c0_60] : memref<8x8x160xf32, #tpu.memory_space<vmem>>, vector<8x8x160xf32>
    tpu.vector_store %arg7[%c0_58, %c0_59, %c0_60], %82 {strides = array<i32>} : memref<8x8x160xf32, #tpu.memory_space<vmem>>, vector<8x8x160xf32>,
    return
  }
  func.func @transform_0(%arg0: i32) -> (i32, i32, i32) {
    %c0_i32 = arith.constant 0 : i32
    %c0_i32_0 = arith.constant 0 : i32
    %c0_i32_1 = arith.constant 0 : i32
    return %arg0, %c0_i32, %c0_i32_0 : i32, i32, i32
  }
  func.func @transform_1(%arg0: i32) -> (i32, i32) {
    %c0_i32 = arith.constant 0 : i32
    %c0_i32_0 = arith.constant 0 : i32
    %c0_i32_1 = arith.constant 0 : i32
    return %c0_i32, %c0_i32_0 : i32, i32
  }
  func.func @transform_2(%arg0: i32) -> (i32, i32, i32) {
    %c0_i32 = arith.constant 0 : i32
    %c0_i32_0 = arith.constant 0 : i32
    %c0_i32_1 = arith.constant 0 : i32
    %c0_i32_2 = arith.constant 0 : i32
    return %c0_i32, %c0_i32_0, %c0_i32_1 : i32, i32, i32
  }
  func.func @transform_3(%arg0: i32) -> (i32, i32) {
    %c0_i32 = arith.constant 0 : i32
    %c0_i32_0 = arith.constant 0 : i32
    %c0_i32_1 = arith.constant 0 : i32
    return %c0_i32, %c0_i32_0 : i32, i32
  }
  func.func @transform_4(%arg0: i32) -> (i32, i32, i32) {
    %c0_i32 = arith.constant 0 : i32
    %c0_i32_0 = arith.constant 0 : i32
    %c0_i32_1 = arith.constant 0 : i32
    %c0_i32_2 = arith.constant 0 : i32
    return %c0_i32, %c0_i32_0, %c0_i32_1 : i32, i32, i32
  }
  func.func @transform_5(%arg0: i32) -> (i32, i32) {
    %c0_i32 = arith.constant 0 : i32
    %c0_i32_0 = arith.constant 0 : i32
    %c0_i32_1 = arith.constant 0 : i32
    return %c0_i32, %c0_i32_0 : i32, i32
  }
  func.func @transform_6(%arg0: i32) -> (i32, i32, i32) {
    %c0_i32 = arith.constant 0 : i32
    %c0_i32_0 = arith.constant 0 : i32
    %c0_i32_1 = arith.constant 0 : i32
    return %arg0, %c0_i32, %c0_i32_0 : i32, i32, i32
  }
}

module attributes {stable_mosaic.version = 11 : i64} {
  func.func @_head_kernel(%arg0: i32, %arg1: memref<8x1280xf32, #tpu.memory_space<vmem>>, %arg2: memref<1280x256xbf16, #tpu.memory_space<vmem>>, %arg3: memref<1x256xf32, #tpu.memory_space<vmem>>, %arg4: memref<256x128xbf16, #tpu.memory_space<vmem>>, %arg5: memref<1x128xf32, #tpu.memory_space<vmem>>, %arg6: memref<8x128xf32, #tpu.memory_space<vmem>>) attributes {dimension_semantics = [#tpu.dimension_semantics<parallel>], iteration_bounds = array<i64: 2>, scalar_prefetch = 0 : i64, scratch_operands = 0 : i64, tpu.core_type = #tpu.core_type<tc>, window_params = [{transform_indices = @transform_0, window_bounds = array<i64: 8, 1280>}, {pipeline_mode = #tpu.pipeline_mode<synchronous>, transform_indices = @transform_1, window_bounds = array<i64: 1280, 256>}, {pipeline_mode = #tpu.pipeline_mode<synchronous>, transform_indices = @transform_2, window_bounds = array<i64: 1, 256>}, {pipeline_mode = #tpu.pipeline_mode<synchronous>, transform_indices = @transform_3, window_bounds = array<i64: 256, 128>}, {pipeline_mode = #tpu.pipeline_mode<synchronous>, transform_indices = @transform_4, window_bounds = array<i64: 1, 128>}, {transform_indices = @transform_5, window_bounds = array<i64: 8, 128>}]} {
    %c0 = arith.constant 0 : index
    %c0_0 = arith.constant 0 : index
    %0 = vector.load %arg1[%c0, %c0_0] : memref<8x1280xf32, #tpu.memory_space<vmem>>, vector<8x1280xf32>
    %1 = arith.truncf %0 : vector<8x1280xf32> to vector<8x1280xbf16>
    %c0_1 = arith.constant 0 : index
    %c0_2 = arith.constant 0 : index
    %2 = vector.load %arg2[%c0_1, %c0_2] : memref<1280x256xbf16, #tpu.memory_space<vmem>>, vector<1280x256xbf16>
    %cst = arith.constant dense<0.000000e+00> : vector<8x256xf32>
    %3 = tpu.matmul %1, %2, %cst {dimension_numbers = #tpu.dot_dimension_numbers<[1], [0], [0], [1], [0, 0, 1, 1], [], []>} : vector<8x1280xbf16>, vector<1280x256xbf16>, vector<8x256xf32> -> vector<8x256xf32>
    %c0_3 = arith.constant 0 : index
    %c0_4 = arith.constant 0 : index
    %4 = vector.load %arg3[%c0_3, %c0_4] : memref<1x256xf32, #tpu.memory_space<vmem>>, vector<1x256xf32>
    %5 = vector.broadcast %4 : vector<1x256xf32> to vector<8x256xf32>
    %6 = arith.addf %3, %5 : vector<8x256xf32>
    %cst_5 = arith.constant 0.000000e+00 : f32
    %7 = vector.broadcast %cst_5 : f32 to vector<8x256xf32>
    %8 = arith.maximumf %6, %7 : vector<8x256xf32>
    %9 = arith.truncf %8 : vector<8x256xf32> to vector<8x256xbf16>
    %c0_6 = arith.constant 0 : index
    %c0_7 = arith.constant 0 : index
    %10 = vector.load %arg4[%c0_6, %c0_7] : memref<256x128xbf16, #tpu.memory_space<vmem>>, vector<256x128xbf16>
    %cst_8 = arith.constant dense<0.000000e+00> : vector<8x128xf32>
    %11 = tpu.matmul %9, %10, %cst_8 {dimension_numbers = #tpu.dot_dimension_numbers<[1], [0], [0], [1], [0, 0, 1, 1], [], []>} : vector<8x256xbf16>, vector<256x128xbf16>, vector<8x128xf32> -> vector<8x128xf32>
    %c0_9 = arith.constant 0 : index
    %c0_10 = arith.constant 0 : index
    %12 = vector.load %arg5[%c0_9, %c0_10] : memref<1x128xf32, #tpu.memory_space<vmem>>, vector<1x128xf32>
    %13 = vector.broadcast %12 : vector<1x128xf32> to vector<8x128xf32>
    %14 = arith.addf %11, %13 : vector<8x128xf32>
    %cst_11 = arith.constant dense<0xFF800000> : vector<8xf32>
    %15 = vector.multi_reduction <maximumf>, %14, %cst_11 [1] : vector<8x128xf32> to vector<8xf32>
    %16 = vector.shape_cast %15 : vector<8xf32> to vector<8x1xf32>
    %17 = vector.broadcast %16 : vector<8x1xf32> to vector<8x128xf32>
    %18 = arith.subf %14, %17 : vector<8x128xf32>
    %19 = math.exp %18 : vector<8x128xf32>
    %cst_12 = arith.constant dense<0.000000e+00> : vector<8xf32>
    %20 = vector.multi_reduction <add>, %19, %cst_12 [1] : vector<8x128xf32> to vector<8xf32>
    %21 = vector.shape_cast %20 : vector<8xf32> to vector<8x1xf32>
    %22 = math.log %21 : vector<8x1xf32>
    %23 = vector.broadcast %22 : vector<8x1xf32> to vector<8x128xf32>
    %24 = arith.subf %18, %23 : vector<8x128xf32>
    %c0_13 = arith.constant 0 : index
    %c0_14 = arith.constant 0 : index
    %25 = vector.load %arg6[%c0_13, %c0_14] : memref<8x128xf32, #tpu.memory_space<vmem>>, vector<8x128xf32>
    tpu.vector_store %arg6[%c0_13, %c0_14], %24 {strides = array<i32>} : memref<8x128xf32, #tpu.memory_space<vmem>>, vector<8x128xf32>,
    return
  }
  func.func @transform_0(%arg0: i32) -> (i32, i32) {
    %c0_i32 = arith.constant 0 : i32
    %c0_i32_0 = arith.constant 0 : i32
    return %arg0, %c0_i32 : i32, i32
  }
  func.func @transform_1(%arg0: i32) -> (i32, i32) {
    %c0_i32 = arith.constant 0 : i32
    %c0_i32_0 = arith.constant 0 : i32
    %c0_i32_1 = arith.constant 0 : i32
    return %c0_i32, %c0_i32_0 : i32, i32
  }
  func.func @transform_2(%arg0: i32) -> (i32, i32) {
    %c0_i32 = arith.constant 0 : i32
    %c0_i32_0 = arith.constant 0 : i32
    %c0_i32_1 = arith.constant 0 : i32
    return %c0_i32, %c0_i32_0 : i32, i32
  }
  func.func @transform_3(%arg0: i32) -> (i32, i32) {
    %c0_i32 = arith.constant 0 : i32
    %c0_i32_0 = arith.constant 0 : i32
    %c0_i32_1 = arith.constant 0 : i32
    return %c0_i32, %c0_i32_0 : i32, i32
  }
  func.func @transform_4(%arg0: i32) -> (i32, i32) {
    %c0_i32 = arith.constant 0 : i32
    %c0_i32_0 = arith.constant 0 : i32
    %c0_i32_1 = arith.constant 0 : i32
    return %c0_i32, %c0_i32_0 : i32, i32
  }
  func.func @transform_5(%arg0: i32) -> (i32, i32) {
    %c0_i32 = arith.constant 0 : i32
    %c0_i32_0 = arith.constant 0 : i32
    return %arg0, %c0_i32 : i32, i32
  }
}

</mosaic_0001>

<llo_original>
// kernel: emnist_forward.3
$region0: #{emnist_forward.3}
  #allocation0 [shape = 'u32[]', space=smem, size = 0x4, offset = 0x4, fixed_abs, tag = 'smem constant byte address 0x4 - core index']
  #allocation1 [shape = 'u32[72,128]{1,0:T(1,128)}', space=vmem, size = 0x9000, scoped, tag = 'internal scratch']
  %s0 = inlined_call_operand.vmem [shape: f32[16,1280], index: 0, kind: input, shape index: {}]
  %s1 = inlined_call_operand.vmem [shape: bf16[1280,256], index: 1, kind: input, shape index: {}]
  %s2 = inlined_call_operand.vmem [shape: f32[1,256], index: 2, kind: input, shape index: {}]
  %s3 = inlined_call_operand.vmem [shape: bf16[256,128], index: 3, kind: input, shape index: {}]
  %s4 = inlined_call_operand.vmem [shape: f32[1,128], index: 4, kind: input, shape index: {}]
  %s5 = inlined_call_operand.vmem [shape: f32[16,128], index: 5, kind: output, shape index: {}]
  %s6 = sld [smem:[#allocation0]]
  $region53: #{emnist_forward.3} parent=0
    _
  %s8 = ssub.s32 1, %s6
  %s9 = scalar_select 0, %s8, %s6
  loop: start=0, step=1, limit=4
  $region2: #{emnist_forward.3} parent=0 // loop_pre_header
    _
  $region3: #{emnist_forward.3} parent=0 // loop_header
    %s11 = sphi 0, %s15
    %p12 = scmp.ge.s32.totalorder %s11, 4
    %s21 = sphi 0, %s23
    %s24 = sphi 0, %s21
    %s25 = sphi 0, %s24
    %s41 = sphi 0, %s25
    %s45 = sphi 0, %s45
    %s47 = sphi 0, %s45
    %s48 = sphi 0, %s47
    %s62 = sphi 0, %s48
    %s66 = sphi 0, %s66
    %s68 = sphi 0, %s66
    %s69 = sphi 0, %s68
    %s83 = sphi 0, %s69
    %s87 = sphi 0, %s87
    %s89 = sphi 0, %s87
    %s90 = sphi 0, %s89
    %s104 = sphi 0, %s90
    %s108 = sphi 0, %s108
    %s110 = sphi 0, %s108
    %s111 = sphi 0, %s110
    %s125 = sphi 0, %s111
    %s131 = sphi 0, %s133
    %s134 = sphi 0, %s131
    %s135 = sphi 0, %s134
    %s151 = sphi 0, %s135
  $region4: #{emnist_forward.3} parent=0 // loop_header_branch
    %14 = sbr.rel (%p12) target = $region8
  $region5: #{emnist_forward.3} parent=0 // loop_body
    %s16 = ssub.s32 %s11, 1
    %s17 = ssub.s32 %s11, 2
    %s18 = sadd.s32 %s11, 1
    %s19 = ssub.s32 %s11, %s18
    %p20 = scmp.eq.s32.totalorder %s19, 0
    %s22 = sadd.s32 %s21, 1
    %s23 = scalar_select %p20, %s21, %s22
    %p26 = pneg %p20
    %p27 = scmp.eq.s32.totalorder %s11, 1
    %p28 = por %p26, %p27
    %p29 = scmp.ne.s32.totalorder %s21, %s24
    %p30 = scmp.eq.s32.totalorder %s11, 0
    %p31 = por %p29, %p30
    %p32 = scmp.ne.s32.totalorder %s21, %s24
    %p33 = scmp.eq.s32.totalorder %s16, 1
    %p34 = por %p32, %p33
    %p35 = scmp.ne.s32.totalorder %s24, %s25
    %p36 = scmp.eq.s32.totalorder %s16, 0
    %p37 = por %p35, %p36
    %p38 = scmp.ne.s32.totalorder %s24, %s25
    %p39 = scmp.eq.s32.totalorder %s17, 1
    %p40 = por %p38, %p39
    %p42 = scmp.ne.s32.totalorder %s25, %s41
    %p43 = scmp.eq.s32.totalorder %s17, 0
    %p44 = por %p42, %p43
    %s46 = sadd.s32 %s45, 1
    %p49 = scmp.eq.s32.totalorder %s11, 1
    %p50 = scmp.ne.s32.totalorder %s45, %s47
    %p51 = scmp.eq.s32.totalorder %s11, 0
    %p52 = por %p50, %p51
    %p53 = scmp.ne.s32.totalorder %s45, %s47
    %p54 = scmp.eq.s32.totalorder %s16, 1
    %p55 = por %p53, %p54
    %p56 = scmp.ne.s32.totalorder %s47, %s48
    %p57 = scmp.eq.s32.totalorder %s16, 0
    %p58 = por %p56, %p57
    %p59 = scmp.ne.s32.totalorder %s47, %s48
    %p60 = scmp.eq.s32.totalorder %s17, 1
    %p61 = por %p59, %p60
    %p63 = scmp.ne.s32.totalorder %s48, %s62
    %p64 = scmp.eq.s32.totalorder %s17, 0
    %p65 = por %p63, %p64
    %s67 = sadd.s32 %s66, 1
    %p70 = scmp.eq.s32.totalorder %s11, 1
    %p71 = scmp.ne.s32.totalorder %s66, %s68
    %p72 = scmp.eq.s32.totalorder %s11, 0
    %p73 = por %p71, %p72
    %p74 = scmp.ne.s32.totalorder %s66, %s68
    %p75 = scmp.eq.s32.totalorder %s16, 1
    %p76 = por %p74, %p75
    %p77 = scmp.ne.s32.totalorder %s68, %s69
    %p78 = scmp.eq.s32.totalorder %s16, 0
    %p79 = por %p77, %p78
    %p80 = scmp.ne.s32.totalorder %s68, %s69
    %p81 = scmp.eq.s32.totalorder %s17, 1
    %p82 = por %p80, %p81
    %p84 = scmp.ne.s32.totalorder %s69, %s83
    %p85 = scmp.eq.s32.totalorder %s17, 0
    %p86 = por %p84, %p85
    %s88 = sadd.s32 %s87, 1
    %p91 = scmp.eq.s32.totalorder %s11, 1
    %p92 = scmp.ne.s32.totalorder %s87, %s89
    %p93 = scmp.eq.s32.totalorder %s11, 0
    %p94 = por %p92, %p93
    %p95 = scmp.ne.s32.totalorder %s87, %s89
    %p96 = scmp.eq.s32.totalorder %s16, 1
    %p97 = por %p95, %p96
    %p98 = scmp.ne.s32.totalorder %s89, %s90
    %p99 = scmp.eq.s32.totalorder %s16, 0
    %p100 = por %p98, %p99
    %p101 = scmp.ne.s32.totalorder %s89, %s90
    %p102 = scmp.eq.s32.totalorder %s17, 1
    %p103 = por %p101, %p102
    %p105 = scmp.ne.s32.totalorder %s90, %s104
    %p106 = scmp.eq.s32.totalorder %s17, 0
    %p107 = por %p105, %p106
    %s109 = sadd.s32 %s108, 1
    %p112 = scmp.eq.s32.totalorder %s11, 1
    %p113 = scmp.ne.s32.totalorder %s108, %s110
    %p114 = scmp.eq.s32.totalorder %s11, 0
    %p115 = por %p113, %p114
    %p116 = scmp.ne.s32.totalorder %s108, %s110
    %p117 = scmp.eq.s32.totalorder %s16, 1
    %p118 = por %p116, %p117
    %p119 = scmp.ne.s32.totalorder %s110, %s111
    %p120 = scmp.eq.s32.totalorder %s16, 0
    %p121 = por %p119, %p120
    %p122 = scmp.ne.s32.totalorder %s110, %s111
    %p123 = scmp.eq.s32.totalorder %s17, 1
    %p124 = por %p122, %p123
    %p126 = scmp.ne.s32.totalorder %s111, %s125
    %p127 = scmp.eq.s32.totalorder %s17, 0
    %p128 = por %p126, %p127
    %s129 = ssub.s32 %s11, %s18
    %p130 = scmp.eq.s32.totalorder %s129, 0
    %s132 = sadd.s32 %s131, 1
    %s133 = scalar_select %p130, %s131, %s132
    %p136 = pneg %p130
    %p137 = scmp.eq.s32.totalorder %s11, 1
    %p138 = por %p136, %p137
    %p139 = scmp.ne.s32.totalorder %s131, %s134
    %p140 = scmp.eq.s32.totalorder %s11, 0
    %p141 = por %p139, %p140
    %p142 = scmp.ne.s32.totalorder %s131, %s134
    %p143 = scmp.eq.s32.totalorder %s16, 1
    %p144 = por %p142, %p143
    %p145 = scmp.ne.s32.totalorder %s134, %s135
    %p146 = scmp.eq.s32.totalorder %s16, 0
    %p147 = por %p145, %p146
    %p148 = scmp.ne.s32.totalorder %s134, %s135
    %p149 = scmp.eq.s32.totalorder %s17, 1
    %p150 = por %p148, %p149
    %p152 = scmp.ne.s32.totalorder %s135, %s151
    %p153 = scmp.eq.s32.totalorder %s17, 0
    %p154 = por %p152, %p153
    %p155 = scmp.le.s32.totalorder 1, %s11
    %p156 = scmp.lt.s32.totalorder %s11, 3
    %p157 = pnand %p155, %p156
    %p158 = pneg %p157
    // Predicated region
    $region9: #{emnist_forward.3} parent=5 // pred_check
      _
    $region10: #{emnist_forward.3} parent=5 // pred_check_branch
      %160 = sbr.rel (%p157) target = $region12
    $region11: #{emnist_forward.3} parent=5 // pred_region
      %s161 = ssub.s32 %s11, 1
      // Predicated region
      $region13: #{emnist_forward.3} parent=11 // pred_check
        %p162 = pneg %p58
      $region14: #{emnist_forward.3} parent=11 // pred_check_branch
        %164 = sbr.rel (%p162) target = $region16
      $region15: #{emnist_forward.3} parent=11 // pred_region
        _
      $region16: #{emnist_forward.3} parent=11 // pred_fallthru
        _
      // Predicated region
      $region17: #{emnist_forward.3} parent=11 // pred_check
        %p165 = pneg %p79
      $region18: #{emnist_forward.3} parent=11 // pred_check_branch
        %167 = sbr.rel (%p165) target = $region20
      $region19: #{emnist_forward.3} parent=11 // pred_region
        _
      $region20: #{emnist_forward.3} parent=11 // pred_fallthru
        _
      // Predicated region
      $region21: #{emnist_forward.3} parent=11 // pred_check
        %p168 = pneg %p100
      $region22: #{emnist_forward.3} parent=11 // pred_check_branch
        %170 = sbr.rel (%p168) target = $region24
      $region23: #{emnist_forward.3} parent=11 // pred_region
        _
      $region24: #{emnist_forward.3} parent=11 // pred_fallthru
        _
      // Predicated region
      $region25: #{emnist_forward.3} parent=11 // pred_check
        %p171 = pneg %p121
      $region26: #{emnist_forward.3} parent=11 // pred_check_branch
        %173 = sbr.rel (%p171) target = $region28
      $region27: #{emnist_forward.3} parent=11 // pred_region
        _
      $region28: #{emnist_forward.3} parent=11 // pred_fallthru
        _
    $region12: #{emnist_forward.3} parent=5 // pred_fallthru
      _
    %p174 = scmp.lt.s32.totalorder %s11, 2
    // Predicated region
    $region29: #{emnist_forward.3} parent=5 // pred_check
      %p175 = pneg %p174
    $region30: #{emnist_forward.3} parent=5 // pred_check_branch
      %177 = sbr.rel (%p175) target = $region32
    $region31: #{emnist_forward.3} parent=5 // pred_region
      // Predicated region
      $region33: #{emnist_forward.3} parent=31 // pred_check
        %p178 = pneg %p31
      $region34: #{emnist_forward.3} parent=31 // pred_check_branch
        %180 = sbr.rel (%p178) target = $region36
      $region35: #{emnist_forward.3} parent=31 // pred_region
        %p181 = scmp.lt.s32.totalorder %s11, 1
        %s182 = scalar_select %p181, %s11, 1
        %s183 = smul.addr %s182, 10
        %s184 = smul.addr %s183, 8
        %s185 = scalar_lea.vmem %s0, %s184
      $region36: #{emnist_forward.3} parent=31 // pred_fallthru
        _
    $region32: #{emnist_forward.3} parent=5 // pred_fallthru
      _
    %p186 = scmp.le.s32.totalorder 1, %s11
    %p187 = scmp.lt.s32.totalorder %s11, 3
    %p188 = pnand %p186, %p187
    %p189 = pneg %p188
    // Predicated region
    $region37: #{emnist_forward.3} parent=5 // pred_check
      _
    $region38: #{emnist_forward.3} parent=5 // pred_check_branch
      %191 = sbr.rel (%p188) target = $region40
    $region39: #{emnist_forward.3} parent=5 // pred_region
      %s192 = ssub.s32 %s11, 1
      %p193 = scmp.lt.s32.totalorder %s16, 1
      %s194 = scalar_select %p193, %s16, 1
      %s195 = smul.addr %s194, 10
      %s196 = smul.addr %s195, 8
      %s197 = scalar_lea.vmem %s0, %s196
      %p198 = pneg %p37
      %p199 = pneg %p34
      %p200 = pneg %p58
      %p201 = pneg %p55
      %p202 = pneg %p79
      %p203 = pneg %p76
      %p204 = pneg %p100
      %p205 = pneg %p97
      %p206 = pneg %p121
      %p207 = pneg %p118
      %p208 = pneg %p147
      %p209 = pneg %p144
      %p210 = scmp.lt.s32.totalorder %s16, 1
      %s211 = scalar_select %p210, %s16, 1
      %s212 = smul.addr %s211, 8
      %s213 = scalar_lea.vmem %s5, %s212
      %p214 = scmp.lt.s32.totalorder %s16, 1
      %s215 = scalar_select %p214, %s16, 1
      %s216 = smul.addr %s215, 10
      %s217 = smul.addr %s216, 8
      %s218 = scalar_lea.vmem %s0, %s217
      %p219 = scmp.lt.s32.totalorder %s16, 1
      %s220 = scalar_select %p219, %s16, 1
      %s221 = smul.addr %s220, 8
      %s222 = scalar_lea.vmem %s5, %s221
      %v223 = vld [vmem:[%s218] sm:$0xff]
      %v224 = vld [vmem:[%s218 + $0x8] sm:$0xff]
      %v225 = vld [vmem:[%s218 + $0x10] sm:$0xff]
      %v226 = vld [vmem:[%s218 + $0x18] sm:$0xff]
      %v227 = vld [vmem:[%s218 + $0x20] sm:$0xff]
      %v228 = vld [vmem:[%s218 + $0x28] sm:$0xff]
      %v229 = vld [vmem:[%s218 + $0x30] sm:$0xff]
      %v230 = vld [vmem:[%s218 + $0x38] sm:$0xff]
      %v231 = vld [vmem:[%s218 + $0x40] sm:$0xff]
      %v232 = vld [vmem:[%s218 + $0x48] sm:$0xff]
      %v233 = vpack.c.bf16 %v223, %v223
      %v234 = vpack.c.bf16 %v224, %v224
      %v235 = vpack.c.bf16 %v225, %v225
      %v236 = vpack.c.bf16 %v226, %v226
      %v237 = vpack.c.bf16 %v227, %v227
      %v238 = vpack.c.bf16 %v228, %v228
      %v239 = vpack.c.bf16 %v229, %v229
      %v240 = vpack.c.bf16 %v230, %v230
      %v241 = vpack.c.bf16 %v231, %v231
      %v242 = vpack.c.bf16 %v232, %v232
      %v243 = vld [vmem:[%s1] sm:$0xff]
      %v244 = vld [vmem:[%s1 + $0x8] sm:$0xff]
      %v245 = vld [vmem:[%s1 + $0x10] sm:$0xff]
      %v246 = vld [vmem:[%s1 + $0x18] sm:$0xff]
      %v247 = vld [vmem:[%s1 + $0x20] sm:$0xff]
      %v248 = vld [vmem:[%s1 + $0x28] sm:$0xff]
      %v249 = vld [vmem:[%s1 + $0x30] sm:$0xff]
      %v250 = vld [vmem:[%s1 + $0x38] sm:$0xff]
      %v251 = vld [vmem:[%s1 + $0x40] sm:$0xff]
      %v252 = vld [vmem:[%s1 + $0x48] sm:$0xff]
      %v253 = vld [vmem:[%s1 + $0x50] sm:$0xff]
      %v254 = vld [vmem:[%s1 + $0x58] sm:$0xff]
      %v255 = vld [vmem:[%s1 + $0x60] sm:$0xff]
      %v256 = vld [vmem:[%s1 + $0x68] sm:$0xff]
      %v257 = vld [vmem:[%s1 + $0x70] sm:$0xff]
      %v258 = vld [vmem:[%s1 + $0x78] sm:$0xff]
      %v259 = vld [vmem:[%s1 + $0x80] sm:$0xff]
      %v260 = vld [vmem:[%s1 + $0x88] sm:$0xff]
      %v261 = vld [vmem:[%s1 + $0x90] sm:$0xff]
      %v262 = vld [vmem:[%s1 + $0x98] sm:$0xff]
      %v263 = vld [vmem:[%s1 + $0xa0] sm:$0xff]
      %v264 = vld [vmem:[%s1 + $0xa8] sm:$0xff]
      %v265 = vld [vmem:[%s1 + $0xb0] sm:$0xff]
      %v266 = vld [vmem:[%s1 + $0xb8] sm:$0xff]
      %v267 = vld [vmem:[%s1 + $0xc0] sm:$0xff]
      %v268 = vld [vmem:[%s1 + $0xc8] sm:$0xff]
      %v269 = vld [vmem:[%s1 + $0xd0] sm:$0xff]
      %v270 = vld [vmem:[%s1 + $0xd8] sm:$0xff]
      %v271 = vld [vmem:[%s1 + $0xe0] sm:$0xff]
      %v272 = vld [vmem:[%s1 + $0xe8] sm:$0xff]
      %v273 = vld [vmem:[%s1 + $0xf0] sm:$0xff]
      %v274 = vld [vmem:[%s1 + $0xf8] sm:$0xff]
      %v275 = vld [vmem:[%s1 + $0x100] sm:$0xff]
      %v276 = vld [vmem:[%s1 + $0x108] sm:$0xff]
      %v277 = vld [vmem:[%s1 + $0x110] sm:$0xff]
      %v278 = vld [vmem:[%s1 + $0x118] sm:$0xff]
      %v279 = vld [vmem:[%s1 + $0x120] sm:$0xff]
      %v280 = vld [vmem:[%s1 + $0x128] sm:$0xff]
      %v281 = vld [vmem:[%s1 + $0x130] sm:$0xff]
      %v282 = vld [vmem:[%s1 + $0x138] sm:$0xff]
      %v283 = vld [vmem:[%s1 + $0x140] sm:$0xff]
      %v284 = vld [vmem:[%s1 + $0x148] sm:$0xff]
      %v285 = vld [vmem:[%s1 + $0x150] sm:$0xff]
      %v286 = vld [vmem:[%s1 + $0x158] sm:$0xff]
      %v287 = vld [vmem:[%s1 + $0x160] sm:$0xff]
      %v288 = vld [vmem:[%s1 + $0x168] sm:$0xff]
      %v289 = vld [vmem:[%s1 + $0x170] sm:$0xff]
      %v290 = vld [vmem:[%s1 + $0x178] sm:$0xff]
      %v291 = vld [vmem:[%s1 + $0x180] sm:$0xff]
      %v292 = vld [vmem:[%s1 + $0x188] sm:$0xff]
      %v293 = vld [vmem:[%s1 + $0x190] sm:$0xff]
      %v294 = vld [vmem:[%s1 + $0x198] sm:$0xff]
      %v295 = vld [vmem:[%s1 + $0x1a0] sm:$0xff]
      %v296 = vld [vmem:[%s1 + $0x1a8] sm:$0xff]
      %v297 = vld [vmem:[%s1 + $0x1b0] sm:$0xff]
      %v298 = vld [vmem:[%s1 + $0x1b8] sm:$0xff]
      %v299 = vld [vmem:[%s1 + $0x1c0] sm:$0xff]
      %v300 = vld [vmem:[%s1 + $0x1c8] sm:$0xff]
      %v301 = vld [vmem:[%s1 + $0x1d0] sm:$0xff]
      %v302 = vld [vmem:[%s1 + $0x1d8] sm:$0xff]
      %v303 = vld [vmem:[%s1 + $0x1e0] sm:$0xff]
      %v304 = vld [vmem:[%s1 + $0x1e8] sm:$0xff]
      %v305 = vld [vmem:[%s1 + $0x1f0] sm:$0xff]
      %v306 = vld [vmem:[%s1 + $0x1f8] sm:$0xff]
      %v307 = vld [vmem:[%s1 + $0x200] sm:$0xff]
      %v308 = vld [vmem:[%s1 + $0x208] sm:$0xff]
      %v309 = vld [vmem:[%s1 + $0x210] sm:$0xff]
      %v310 = vld [vmem:[%s1 + $0x218] sm:$0xff]
      %v311 = vld [vmem:[%s1 + $0x220] sm:$0xff]
      %v312 = vld [vmem:[%s1 + $0x228] sm:$0xff]
      %v313 = vld [vmem:[%s1 + $0x230] sm:$0xff]
      %v314 = vld [vmem:[%s1 + $0x238] sm:$0xff]
      %v315 = vld [vmem:[%s1 + $0x240] sm:$0xff]
      %v316 = vld [vmem:[%s1 + $0x248] sm:$0xff]
      %v317 = vld [vmem:[%s1 + $0x250] sm:$0xff]
      %v318 = vld [vmem:[%s1 + $0x258] sm:$0xff]
      %v319 = vld [vmem:[%s1 + $0x260] sm:$0xff]
      %v320 = vld [vmem:[%s1 + $0x268] sm:$0xff]
      %v321 = vld [vmem:[%s1 + $0x270] sm:$0xff]
      %v322 = vld [vmem:[%s1 + $0x278] sm:$0xff]
      %v323 = vld [vmem:[%s1 + $0x280] sm:$0xff]
      %v324 = vld [vmem:[%s1 + $0x288] sm:$0xff]
      %v325 = vld [vmem:[%s1 + $0x290] sm:$0xff]
      %v326 = vld [vmem:[%s1 + $0x298] sm:$0xff]
      %v327 = vld [vmem:[%s1 + $0x2a0] sm:$0xff]
      %v328 = vld [vmem:[%s1 + $0x2a8] sm:$0xff]
      %v329 = vld [vmem:[%s1 + $0x2b0] sm:$0xff]
      %v330 = vld [vmem:[%s1 + $0x2b8] sm:$0xff]
      %v331 = vld [vmem:[%s1 + $0x2c0] sm:$0xff]
      %v332 = vld [vmem:[%s1 + $0x2c8] sm:$0xff]
      %v333 = vld [vmem:[%s1 + $0x2d0] sm:$0xff]
      %v334 = vld [vmem:[%s1 + $0x2d8] sm:$0xff]
      %v335 = vld [vmem:[%s1 + $0x2e0] sm:$0xff]
      %v336 = vld [vmem:[%s1 + $0x2e8] sm:$0xff]
      %v337 = vld [vmem:[%s1 + $0x2f0] sm:$0xff]
      %v338 = vld [vmem:[%s1 + $0x2f8] sm:$0xff]
      %v339 = vld [vmem:[%s1 + $0x300] sm:$0xff]
      %v340 = vld [vmem:[%s1 + $0x308] sm:$0xff]
      %v341 = vld [vmem:[%s1 + $0x310] sm:$0xff]
      %v342 = vld [vmem:[%s1 + $0x318] sm:$0xff]
      %v343 = vld [vmem:[%s1 + $0x320] sm:$0xff]
      %v344 = vld [vmem:[%s1 + $0x328] sm:$0xff]
      %v345 = vld [vmem:[%s1 + $0x330] sm:$0xff]
      %v346 = vld [vmem:[%s1 + $0x338] sm:$0xff]
      %v347 = vld [vmem:[%s1 + $0x340] sm:$0xff]
      %v348 = vld [vmem:[%s1 + $0x348] sm:$0xff]
      %v349 = vld [vmem:[%s1 + $0x350] sm:$0xff]
      %v350 = vld [vmem:[%s1 + $0x358] sm:$0xff]
      %v351 = vld [vmem:[%s1 + $0x360] sm:$0xff]
      %v352 = vld [vmem:[%s1 + $0x368] sm:$0xff]
      %v353 = vld [vmem:[%s1 + $0x370] sm:$0xff]
      %v354 = vld [vmem:[%s1 + $0x378] sm:$0xff]
      %v355 = vld [vmem:[%s1 + $0x380] sm:$0xff]
      %v356 = vld [vmem:[%s1 + $0x388] sm:$0xff]
      %v357 = vld [vmem:[%s1 + $0x390] sm:$0xff]
      %v358 = vld [vmem:[%s1 + $0x398] sm:$0xff]
      %v359 = vld [vmem:[%s1 + $0x3a0] sm:$0xff]
      %v360 = vld [vmem:[%s1 + $0x3a8] sm:$0xff]
      %v361 = vld [vmem:[%s1 + $0x3b0] sm:$0xff]
      %v362 = vld [vmem:[%s1 + $0x3b8] sm:$0xff]
      %v363 = vld [vmem:[%s1 + $0x3c0] sm:$0xff]
      %v364 = vld [vmem:[%s1 + $0x3c8] sm:$0xff]
      %v365 = vld [vmem:[%s1 + $0x3d0] sm:$0xff]
      %v366 = vld [vmem:[%s1 + $0x3d8] sm:$0xff]
      %v367 = vld [vmem:[%s1 + $0x3e0] sm:$0xff]
      %v368 = vld [vmem:[%s1 + $0x3e8] sm:$0xff]
      %v369 = vld [vmem:[%s1 + $0x3f0] sm:$0xff]
      %v370 = vld [vmem:[%s1 + $0x3f8] sm:$0xff]
      %v371 = vld [vmem:[%s1 + $0x400] sm:$0xff]
      %v372 = vld [vmem:[%s1 + $0x408] sm:$0xff]
      %v373 = vld [vmem:[%s1 + $0x410] sm:$0xff]
      %v374 = vld [vmem:[%s1 + $0x418] sm:$0xff]
      %v375 = vld [vmem:[%s1 + $0x420] sm:$0xff]
      %v376 = vld [vmem:[%s1 + $0x428] sm:$0xff]
      %v377 = vld [vmem:[%s1 + $0x430] sm:$0xff]
      %v378 = vld [vmem:[%s1 + $0x438] sm:$0xff]
      %v379 = vld [vmem:[%s1 + $0x440] sm:$0xff]
      %v380 = vld [vmem:[%s1 + $0x448] sm:$0xff]
      %v381 = vld [vmem:[%s1 + $0x450] sm:$0xff]
      %v382 = vld [vmem:[%s1 + $0x458] sm:$0xff]
      %v383 = vld [vmem:[%s1 + $0x460] sm:$0xff]
      %v384 = vld [vmem:[%s1 + $0x468] sm:$0xff]
      %v385 = vld [vmem:[%s1 + $0x470] sm:$0xff]
      %v386 = vld [vmem:[%s1 + $0x478] sm:$0xff]
      %v387 = vld [vmem:[%s1 + $0x480] sm:$0xff]
      %v388 = vld [vmem:[%s1 + $0x488] sm:$0xff]
      %v389 = vld [vmem:[%s1 + $0x490] sm:$0xff]
      %v390 = vld [vmem:[%s1 + $0x498] sm:$0xff]
      %v391 = vld [vmem:[%s1 + $0x4a0] sm:$0xff]
      %v392 = vld [vmem:[%s1 + $0x4a8] sm:$0xff]
      %v393 = vld [vmem:[%s1 + $0x4b0] sm:$0xff]
      %v394 = vld [vmem:[%s1 + $0x4b8] sm:$0xff]
      %v395 = vld [vmem:[%s1 + $0x4c0] sm:$0xff]
      %v396 = vld [vmem:[%s1 + $0x4c8] sm:$0xff]
      %v397 = vld [vmem:[%s1 + $0x4d0] sm:$0xff]
      %v398 = vld [vmem:[%s1 + $0x4d8] sm:$0xff]
      %v399 = vld [vmem:[%s1 + $0x4e0] sm:$0xff]
      %v400 = vld [vmem:[%s1 + $0x4e8] sm:$0xff]
      %v401 = vld [vmem:[%s1 + $0x4f0] sm:$0xff]
      %v402 = vld [vmem:[%s1 + $0x4f8] sm:$0xff]
      %v403 = vld [vmem:[%s2] sm:$0x3]
      %v405 = vperm.slane %v403, 0
      %v406 = vperm.slane %v403, 1
      %v569 = vunpack.c.l.b16 %v243
      %v570 = vunpack.c.h.b16 %v243
      %v571 = vunpack.c.l.b16 %v244
      %v572 = vunpack.c.h.b16 %v244
      %v573 = vunpack.c.l.b16 %v245
      %v574 = vunpack.c.h.b16 %v245
      %v575 = vunpack.c.l.b16 %v246
      %v576 = vunpack.c.h.b16 %v246
      %v577 = vunpack.c.l.b16 %v247
      %v578 = vunpack.c.h.b16 %v247
      %v579 = vunpack.c.l.b16 %v248
      %v580 = vunpack.c.h.b16 %v248
      %v581 = vunpack.c.l.b16 %v249
      %v582 = vunpack.c.h.b16 %v249
      %v583 = vunpack.c.l.b16 %v250
      %v584 = vunpack.c.h.b16 %v250
      %v585 = vunpack.c.l.b16 %v251
      %v586 = vunpack.c.h.b16 %v251
      %v587 = vunpack.c.l.b16 %v252
      %v588 = vunpack.c.h.b16 %v252
      %v589 = vunpack.c.l.b16 %v253
      %v590 = vunpack.c.h.b16 %v253
      %v591 = vunpack.c.l.b16 %v254
      %v592 = vunpack.c.h.b16 %v254
      %v593 = vunpack.c.l.b16 %v255
      %v594 = vunpack.c.h.b16 %v255
      %v595 = vunpack.c.l.b16 %v256
      %v596 = vunpack.c.h.b16 %v256
      %v597 = vunpack.c.l.b16 %v257
      %v598 = vunpack.c.h.b16 %v257
      %v599 = vunpack.c.l.b16 %v258
      %v600 = vunpack.c.h.b16 %v258
      %v601 = vunpack.c.l.b16 %v259
      %v602 = vunpack.c.h.b16 %v259
      %v603 = vunpack.c.l.b16 %v260
      %v604 = vunpack.c.h.b16 %v260
      %v605 = vunpack.c.l.b16 %v261
      %v606 = vunpack.c.h.b16 %v261
      %v607 = vunpack.c.l.b16 %v262
      %v608 = vunpack.c.h.b16 %v262
      %v609 = vunpack.c.l.b16 %v263
      %v610 = vunpack.c.h.b16 %v263
      %v611 = vunpack.c.l.b16 %v264
      %v612 = vunpack.c.h.b16 %v264
      %v613 = vunpack.c.l.b16 %v265
      %v614 = vunpack.c.h.b16 %v265
      %v615 = vunpack.c.l.b16 %v266
      %v616 = vunpack.c.h.b16 %v266
      %v617 = vunpack.c.l.b16 %v267
      %v618 = vunpack.c.h.b16 %v267
      %v619 = vunpack.c.l.b16 %v268
      %v620 = vunpack.c.h.b16 %v268
      %v621 = vunpack.c.l.b16 %v269
      %v622 = vunpack.c.h.b16 %v269
      %v623 = vunpack.c.l.b16 %v270
      %v624 = vunpack.c.h.b16 %v270
      %v625 = vunpack.c.l.b16 %v271
      %v626 = vunpack.c.h.b16 %v271
      %v627 = vunpack.c.l.b16 %v272
      %v628 = vunpack.c.h.b16 %v272
      %v629 = vunpack.c.l.b16 %v273
      %v630 = vunpack.c.h.b16 %v273
      %v631 = vunpack.c.l.b16 %v274
      %v632 = vunpack.c.h.b16 %v274
      %v633 = vunpack.c.l.b16 %v275
      %v634 = vunpack.c.h.b16 %v275
      %v635 = vunpack.c.l.b16 %v276
      %v636 = vunpack.c.h.b16 %v276
      %v637 = vunpack.c.l.b16 %v277
      %v638 = vunpack.c.h.b16 %v277
      %v639 = vunpack.c.l.b16 %v278
      %v640 = vunpack.c.h.b16 %v278
      %v641 = vunpack.c.l.b16 %v279
      %v642 = vunpack.c.h.b16 %v279
      %v643 = vunpack.c.l.b16 %v280
      %v644 = vunpack.c.h.b16 %v280
      %v645 = vunpack.c.l.b16 %v281
      %v646 = vunpack.c.h.b16 %v281
      %v647 = vunpack.c.l.b16 %v282
      %v648 = vunpack.c.h.b16 %v282
      %v649 = vunpack.c.l.b16 %v283
      %v650 = vunpack.c.h.b16 %v283
      %v651 = vunpack.c.l.b16 %v284
      %v652 = vunpack.c.h.b16 %v284
      %v653 = vunpack.c.l.b16 %v285
      %v654 = vunpack.c.h.b16 %v285
      %v655 = vunpack.c.l.b16 %v286
      %v656 = vunpack.c.h.b16 %v286
      %v657 = vunpack.c.l.b16 %v287
      %v658 = vunpack.c.h.b16 %v287
      %v659 = vunpack.c.l.b16 %v288
      %v660 = vunpack.c.h.b16 %v288
      %v661 = vunpack.c.l.b16 %v289
      %v662 = vunpack.c.h.b16 %v289
      %v663 = vunpack.c.l.b16 %v290
      %v664 = vunpack.c.h.b16 %v290
      %v665 = vunpack.c.l.b16 %v291
      %v666 = vunpack.c.h.b16 %v291
      %v667 = vunpack.c.l.b16 %v292
      %v668 = vunpack.c.h.b16 %v292
      %v669 = vunpack.c.l.b16 %v293
      %v670 = vunpack.c.h.b16 %v293
      %v671 = vunpack.c.l.b16 %v294
      %v672 = vunpack.c.h.b16 %v294
      %v673 = vunpack.c.l.b16 %v295
      %v674 = vunpack.c.h.b16 %v295
      %v675 = vunpack.c.l.b16 %v296
      %v676 = vunpack.c.h.b16 %v296
      %v677 = vunpack.c.l.b16 %v297
      %v678 = vunpack.c.h.b16 %v297
      %v679 = vunpack.c.l.b16 %v298
      %v680 = vunpack.c.h.b16 %v298
      %v681 = vunpack.c.l.b16 %v299
      %v682 = vunpack.c.h.b16 %v299
      %v683 = vunpack.c.l.b16 %v300
      %v684 = vunpack.c.h.b16 %v300
      %v685 = vunpack.c.l.b16 %v301
      %v686 = vunpack.c.h.b16 %v301
      %v687 = vunpack.c.l.b16 %v302
      %v688 = vunpack.c.h.b16 %v302
      %v689 = vunpack.c.l.b16 %v303
      %v690 = vunpack.c.h.b16 %v303
      %v691 = vunpack.c.l.b16 %v304
      %v692 = vunpack.c.h.b16 %v304
      %v693 = vunpack.c.l.b16 %v305
      %v694 = vunpack.c.h.b16 %v305
      %v695 = vunpack.c.l.b16 %v306
      %v696 = vunpack.c.h.b16 %v306
      %v697 = vunpack.c.l.b16 %v307
      %v698 = vunpack.c.h.b16 %v307
      %v699 = vunpack.c.l.b16 %v308
      %v700 = vunpack.c.h.b16 %v308
      %v701 = vunpack.c.l.b16 %v309
      %v702 = vunpack.c.h.b16 %v309
      %v703 = vunpack.c.l.b16 %v310
      %v704 = vunpack.c.h.b16 %v310
      %v705 = vunpack.c.l.b16 %v311
      %v706 = vunpack.c.h.b16 %v311
      %v707 = vunpack.c.l.b16 %v312
      %v708 = vunpack.c.h.b16 %v312
      %v709 = vunpack.c.l.b16 %v313
      %v710 = vunpack.c.h.b16 %v313
      %v711 = vunpack.c.l.b16 %v314
      %v712 = vunpack.c.h.b16 %v314
      %v713 = vunpack.c.l.b16 %v315
      %v714 = vunpack.c.h.b16 %v315
      %v715 = vunpack.c.l.b16 %v316
      %v716 = vunpack.c.h.b16 %v316
      %v717 = vunpack.c.l.b16 %v317
      %v718 = vunpack.c.h.b16 %v317
      %v719 = vunpack.c.l.b16 %v318
      %v720 = vunpack.c.h.b16 %v318
      %v721 = vunpack.c.l.b16 %v319
      %v722 = vunpack.c.h.b16 %v319
      %v723 = vunpack.c.l.b16 %v320
      %v724 = vunpack.c.h.b16 %v320
      %v725 = vunpack.c.l.b16 %v321
      %v726 = vunpack.c.h.b16 %v321
      %v727 = vunpack.c.l.b16 %v322
      %v728 = vunpack.c.h.b16 %v322
      %v729 = vunpack.c.l.b16 %v323
      %v730 = vunpack.c.h.b16 %v323
      %v731 = vunpack.c.l.b16 %v324
      %v732 = vunpack.c.h.b16 %v324
      %v733 = vunpack.c.l.b16 %v325
      %v734 = vunpack.c.h.b16 %v325
      %v735 = vunpack.c.l.b16 %v326
      %v736 = vunpack.c.h.b16 %v326
      %v737 = vunpack.c.l.b16 %v327
      %v738 = vunpack.c.h.b16 %v327
      %v739 = vunpack.c.l.b16 %v328
      %v740 = vunpack.c.h.b16 %v328
      %v741 = vunpack.c.l.b16 %v329
      %v742 = vunpack.c.h.b16 %v329
      %v743 = vunpack.c.l.b16 %v330
      %v744 = vunpack.c.h.b16 %v330
      %v745 = vunpack.c.l.b16 %v331
      %v746 = vunpack.c.h.b16 %v331
      %v747 = vunpack.c.l.b16 %v332
      %v748 = vunpack.c.h.b16 %v332
      %v749 = vunpack.c.l.b16 %v333
      %v750 = vunpack.c.h.b16 %v333
      %v751 = vunpack.c.l.b16 %v334
      %v752 = vunpack.c.h.b16 %v334
      %v753 = vunpack.c.l.b16 %v335
      %v754 = vunpack.c.h.b16 %v335
      %v755 = vunpack.c.l.b16 %v336
      %v756 = vunpack.c.h.b16 %v336
      %v757 = vunpack.c.l.b16 %v337
      %v758 = vunpack.c.h.b16 %v337
      %v759 = vunpack.c.l.b16 %v338
      %v760 = vunpack.c.h.b16 %v338
      %v761 = vunpack.c.l.b16 %v339
      %v762 = vunpack.c.h.b16 %v339
      %v763 = vunpack.c.l.b16 %v340
      %v764 = vunpack.c.h.b16 %v340
      %v765 = vunpack.c.l.b16 %v341
      %v766 = vunpack.c.h.b16 %v341
      %v767 = vunpack.c.l.b16 %v342
      %v768 = vunpack.c.h.b16 %v342
      %v769 = vunpack.c.l.b16 %v343
      %v770 = vunpack.c.h.b16 %v343
      %v771 = vunpack.c.l.b16 %v344
      %v772 = vunpack.c.h.b16 %v344
      %v773 = vunpack.c.l.b16 %v345
      %v774 = vunpack.c.h.b16 %v345
      %v775 = vunpack.c.l.b16 %v346
      %v776 = vunpack.c.h.b16 %v346
      %v777 = vunpack.c.l.b16 %v347
      %v778 = vunpack.c.h.b16 %v347
      %v779 = vunpack.c.l.b16 %v348
      %v780 = vunpack.c.h.b16 %v348
      %v781 = vunpack.c.l.b16 %v349
      %v782 = vunpack.c.h.b16 %v349
      %v783 = vunpack.c.l.b16 %v350
      %v784 = vunpack.c.h.b16 %v350
      %v785 = vunpack.c.l.b16 %v351
      %v786 = vunpack.c.h.b16 %v351
      %v787 = vunpack.c.l.b16 %v352
      %v788 = vunpack.c.h.b16 %v352
      %v789 = vunpack.c.l.b16 %v353
      %v790 = vunpack.c.h.b16 %v353
      %v791 = vunpack.c.l.b16 %v354
      %v792 = vunpack.c.h.b16 %v354
      %v793 = vunpack.c.l.b16 %v355
      %v794 = vunpack.c.h.b16 %v355
      %v795 = vunpack.c.l.b16 %v356
      %v796 = vunpack.c.h.b16 %v356
      %v797 = vunpack.c.l.b16 %v357
      %v798 = vunpack.c.h.b16 %v357
      %v799 = vunpack.c.l.b16 %v358
      %v800 = vunpack.c.h.b16 %v358
      %v801 = vunpack.c.l.b16 %v359
      %v802 = vunpack.c.h.b16 %v359
      %v803 = vunpack.c.l.b16 %v360
      %v804 = vunpack.c.h.b16 %v360
      %v805 = vunpack.c.l.b16 %v361
      %v806 = vunpack.c.h.b16 %v361
      %v807 = vunpack.c.l.b16 %v362
      %v808 = vunpack.c.h.b16 %v362
      %v809 = vunpack.c.l.b16 %v363
      %v810 = vunpack.c.h.b16 %v363
      %v811 = vunpack.c.l.b16 %v364
      %v812 = vunpack.c.h.b16 %v364
      %v813 = vunpack.c.l.b16 %v365
      %v814 = vunpack.c.h.b16 %v365
      %v815 = vunpack.c.l.b16 %v366
      %v816 = vunpack.c.h.b16 %v366
      %v817 = vunpack.c.l.b16 %v367
      %v818 = vunpack.c.h.b16 %v367
      %v819 = vunpack.c.l.b16 %v368
      %v820 = vunpack.c.h.b16 %v368
      %v821 = vunpack.c.l.b16 %v369
      %v822 = vunpack.c.h.b16 %v369
      %v823 = vunpack.c.l.b16 %v370
      %v824 = vunpack.c.h.b16 %v370
      %v825 = vunpack.c.l.b16 %v371
      %v826 = vunpack.c.h.b16 %v371
      %v827 = vunpack.c.l.b16 %v372
      %v828 = vunpack.c.h.b16 %v372
      %v829 = vunpack.c.l.b16 %v373
      %v830 = vunpack.c.h.b16 %v373
      %v831 = vunpack.c.l.b16 %v374
      %v832 = vunpack.c.h.b16 %v374
      %v833 = vunpack.c.l.b16 %v375
      %v834 = vunpack.c.h.b16 %v375
      %v835 = vunpack.c.l.b16 %v376
      %v836 = vunpack.c.h.b16 %v376
      %v837 = vunpack.c.l.b16 %v377
      %v838 = vunpack.c.h.b16 %v377
      %v839 = vunpack.c.l.b16 %v378
      %v840 = vunpack.c.h.b16 %v378
      %v841 = vunpack.c.l.b16 %v379
      %v842 = vunpack.c.h.b16 %v379
      %v843 = vunpack.c.l.b16 %v380
      %v844 = vunpack.c.h.b16 %v380
      %v845 = vunpack.c.l.b16 %v381
      %v846 = vunpack.c.h.b16 %v381
      %v847 = vunpack.c.l.b16 %v382
      %v848 = vunpack.c.h.b16 %v382
      %v849 = vunpack.c.l.b16 %v383
      %v850 = vunpack.c.h.b16 %v383
      %v851 = vunpack.c.l.b16 %v384
      %v852 = vunpack.c.h.b16 %v384
      %v853 = vunpack.c.l.b16 %v385
      %v854 = vunpack.c.h.b16 %v385
      %v855 = vunpack.c.l.b16 %v386
      %v856 = vunpack.c.h.b16 %v386
      %v857 = vunpack.c.l.b16 %v387
      %v858 = vunpack.c.h.b16 %v387
      %v859 = vunpack.c.l.b16 %v388
      %v860 = vunpack.c.h.b16 %v388
      %v861 = vunpack.c.l.b16 %v389
      %v862 = vunpack.c.h.b16 %v389
      %v863 = vunpack.c.l.b16 %v390
      %v864 = vunpack.c.h.b16 %v390
      %v865 = vunpack.c.l.b16 %v391
      %v866 = vunpack.c.h.b16 %v391
      %v867 = vunpack.c.l.b16 %v392
      %v868 = vunpack.c.h.b16 %v392
      %v869 = vunpack.c.l.b16 %v393
      %v870 = vunpack.c.h.b16 %v393
      %v871 = vunpack.c.l.b16 %v394
      %v872 = vunpack.c.h.b16 %v394
      %v873 = vunpack.c.l.b16 %v395
      %v874 = vunpack.c.h.b16 %v395
      %v875 = vunpack.c.l.b16 %v396
      %v876 = vunpack.c.h.b16 %v396
      %v877 = vunpack.c.l.b16 %v397
      %v878 = vunpack.c.h.b16 %v397
      %v879 = vunpack.c.l.b16 %v398
      %v880 = vunpack.c.h.b16 %v398
      %v881 = vunpack.c.l.b16 %v399
      %v882 = vunpack.c.h.b16 %v399
      %v883 = vunpack.c.l.b16 %v400
      %v884 = vunpack.c.h.b16 %v400
      %v885 = vunpack.c.l.b16 %v401
      %v886 = vunpack.c.h.b16 %v401
      %v887 = vunpack.c.l.b16 %v402
      %v888 = vunpack.c.h.b16 %v402
      %v889 = vpack.c.b16 %v571, %v569
      %v890 = vpack.c.b16 %v572, %v570
      %v891 = vpack.c.b16 %v575, %v573
      %v892 = vpack.c.b16 %v576, %v574
      %v893 = vpack.c.b16 %v579, %v577
      %v894 = vpack.c.b16 %v580, %v578
      %v895 = vpack.c.b16 %v583, %v581
      %v896 = vpack.c.b16 %v584, %v582
      %v897 = vpack.c.b16 %v587, %v585
      %v898 = vpack.c.b16 %v588, %v586
      %v899 = vpack.c.b16 %v591, %v589
      %v900 = vpack.c.b16 %v592, %v590
      %v901 = vpack.c.b16 %v595, %v593
      %v902 = vpack.c.b16 %v596, %v594
      %v903 = vpack.c.b16 %v599, %v597
      %v904 = vpack.c.b16 %v600, %v598
      %v905 = vpack.c.b16 %v603, %v601
      %v906 = vpack.c.b16 %v604, %v602
      %v907 = vpack.c.b16 %v607, %v605
      %v908 = vpack.c.b16 %v608, %v606
      %v909 = vpack.c.b16 %v611, %v609
      %v910 = vpack.c.b16 %v612, %v610
      %v911 = vpack.c.b16 %v615, %v613
      %v912 = vpack.c.b16 %v616, %v614
      %v913 = vpack.c.b16 %v619, %v617
      %v914 = vpack.c.b16 %v620, %v618
      %v915 = vpack.c.b16 %v623, %v621
      %v916 = vpack.c.b16 %v624, %v622
      %v917 = vpack.c.b16 %v627, %v625
      %v918 = vpack.c.b16 %v628, %v626
      %v919 = vpack.c.b16 %v631, %v629
      %v920 = vpack.c.b16 %v632, %v630
      %v921 = vpack.c.b16 %v635, %v633
      %v922 = vpack.c.b16 %v636, %v634
      %v923 = vpack.c.b16 %v639, %v637
      %v924 = vpack.c.b16 %v640, %v638
      %v925 = vpack.c.b16 %v643, %v641
      %v926 = vpack.c.b16 %v644, %v642
      %v927 = vpack.c.b16 %v647, %v645
      %v928 = vpack.c.b16 %v648, %v646
      %v929 = vpack.c.b16 %v651, %v649
      %v930 = vpack.c.b16 %v652, %v650
      %v931 = vpack.c.b16 %v655, %v653
      %v932 = vpack.c.b16 %v656, %v654
      %v933 = vpack.c.b16 %v659, %v657
      %v934 = vpack.c.b16 %v660, %v658
      %v935 = vpack.c.b16 %v663, %v661
      %v936 = vpack.c.b16 %v664, %v662
      %v937 = vpack.c.b16 %v667, %v665
      %v938 = vpack.c.b16 %v668, %v666
      %v939 = vpack.c.b16 %v671, %v669
      %v940 = vpack.c.b16 %v672, %v670
      %v941 = vpack.c.b16 %v675, %v673
      %v942 = vpack.c.b16 %v676, %v674
      %v943 = vpack.c.b16 %v679, %v677
      %v944 = vpack.c.b16 %v680, %v678
      %v945 = vpack.c.b16 %v683, %v681
      %v946 = vpack.c.b16 %v684, %v682
      %v947 = vpack.c.b16 %v687, %v685
      %v948 = vpack.c.b16 %v688, %v686
      %v949 = vpack.c.b16 %v691, %v689
      %v950 = vpack.c.b16 %v692, %v690
      %v951 = vpack.c.b16 %v695, %v693
      %v952 = vpack.c.b16 %v696, %v694
      %v953 = vpack.c.b16 %v699, %v697
      %v954 = vpack.c.b16 %v700, %v698
      %v955 = vpack.c.b16 %v703, %v701
      %v956 = vpack.c.b16 %v704, %v702
      %v957 = vpack.c.b16 %v707, %v705
      %v958 = vpack.c.b16 %v708, %v706
      %v959 = vpack.c.b16 %v711, %v709
      %v960 = vpack.c.b16 %v712, %v710
      %v961 = vpack.c.b16 %v715, %v713
      %v962 = vpack.c.b16 %v716, %v714
      %v963 = vpack.c.b16 %v719, %v717
      %v964 = vpack.c.b16 %v720, %v718
      %v965 = vpack.c.b16 %v723, %v721
      %v966 = vpack.c.b16 %v724, %v722
      %v967 = vpack.c.b16 %v727, %v725
      %v968 = vpack.c.b16 %v728, %v726
      %v969 = vpack.c.b16 %v731, %v729
      %v970 = vpack.c.b16 %v732, %v730
      %v971 = vpack.c.b16 %v735, %v733
      %v972 = vpack.c.b16 %v736, %v734
      %v973 = vpack.c.b16 %v739, %v737
      %v974 = vpack.c.b16 %v740, %v738
      %v975 = vpack.c.b16 %v743, %v741
      %v976 = vpack.c.b16 %v744, %v742
      %v977 = vpack.c.b16 %v747, %v745
      %v978 = vpack.c.b16 %v748, %v746
      %v979 = vpack.c.b16 %v751, %v749
      %v980 = vpack.c.b16 %v752, %v750
      %v981 = vpack.c.b16 %v755, %v753
      %v982 = vpack.c.b16 %v756, %v754
      %v983 = vpack.c.b16 %v759, %v757
      %v984 = vpack.c.b16 %v760, %v758
      %v985 = vpack.c.b16 %v763, %v761
      %v986 = vpack.c.b16 %v764, %v762
      %v987 = vpack.c.b16 %v767, %v765
      %v988 = vpack.c.b16 %v768, %v766
      %v989 = vpack.c.b16 %v771, %v769
      %v990 = vpack.c.b16 %v772, %v770
      %v991 = vpack.c.b16 %v775, %v773
      %v992 = vpack.c.b16 %v776, %v774
      %v993 = vpack.c.b16 %v779, %v777
      %v994 = vpack.c.b16 %v780, %v778
      %v995 = vpack.c.b16 %v783, %v781
      %v996 = vpack.c.b16 %v784, %v782
      %v997 = vpack.c.b16 %v787, %v785
      %v998 = vpack.c.b16 %v788, %v786
      %v999 = vpack.c.b16 %v791, %v789
      %v1000 = vpack.c.b16 %v792, %v790
      %v1001 = vpack.c.b16 %v795, %v793
      %v1002 = vpack.c.b16 %v796, %v794
      %v1003 = vpack.c.b16 %v799, %v797
      %v1004 = vpack.c.b16 %v800, %v798
      %v1005 = vpack.c.b16 %v803, %v801
      %v1006 = vpack.c.b16 %v804, %v802
      %v1007 = vpack.c.b16 %v807, %v805
      %v1008 = vpack.c.b16 %v808, %v806
      %v1009 = vpack.c.b16 %v811, %v809
      %v1010 = vpack.c.b16 %v812, %v810
      %v1011 = vpack.c.b16 %v815, %v813
      %v1012 = vpack.c.b16 %v816, %v814
      %v1013 = vpack.c.b16 %v819, %v817
      %v1014 = vpack.c.b16 %v820, %v818
      %v1015 = vpack.c.b16 %v823, %v821
      %v1016 = vpack.c.b16 %v824, %v822
      %v1017 = vpack.c.b16 %v827, %v825
      %v1018 = vpack.c.b16 %v828, %v826
      %v1019 = vpack.c.b16 %v831, %v829
      %v1020 = vpack.c.b16 %v832, %v830
      %v1021 = vpack.c.b16 %v835, %v833
      %v1022 = vpack.c.b16 %v836, %v834
      %v1023 = vpack.c.b16 %v839, %v837
      %v1024 = vpack.c.b16 %v840, %v838
      %v1025 = vpack.c.b16 %v843, %v841
      %v1026 = vpack.c.b16 %v844, %v842
      %v1027 = vpack.c.b16 %v847, %v845
      %v1028 = vpack.c.b16 %v848, %v846
      %v1029 = vpack.c.b16 %v851, %v849
      %v1030 = vpack.c.b16 %v852, %v850
      %v1031 = vpack.c.b16 %v855, %v853
      %v1032 = vpack.c.b16 %v856, %v854
      %v1033 = vpack.c.b16 %v859, %v857
      %v1034 = vpack.c.b16 %v860, %v858
      %v1035 = vpack.c.b16 %v863, %v861
      %v1036 = vpack.c.b16 %v864, %v862
      %v1037 = vpack.c.b16 %v867, %v865
      %v1038 = vpack.c.b16 %v868, %v866
      %v1039 = vpack.c.b16 %v871, %v869
      %v1040 = vpack.c.b16 %v872, %v870
      %v1041 = vpack.c.b16 %v875, %v873
      %v1042 = vpack.c.b16 %v876, %v874
      %v1043 = vpack.c.b16 %v879, %v877
      %v1044 = vpack.c.b16 %v880, %v878
      %v1045 = vpack.c.b16 %v883, %v881
      %v1046 = vpack.c.b16 %v884, %v882
      %v1047 = vpack.c.b16 %v887, %v885
      %v1048 = vpack.c.b16 %v888, %v886
      %1209 = vmatpush.bf16.msra.mxu0 %v903
      %1210 = vmatpush.bf16.msra.mxu0 %v901
      %1211 = vmatpush.bf16.msra.mxu0 %v899
      %1212 = vmatpush.bf16.msra.mxu0 %v897
      %1213 = vmatpush.bf16.msra.mxu0 %v895
      %1214 = vmatpush.bf16.msra.mxu0 %v893
      %1215 = vmatpush.bf16.msra.mxu0 %v891
      %1216 = vmatpush.bf16.msra.mxu0 %v889
      %1217 = vmatmul.bf16.gmra.mxu0 %v233
      %v1218 = vpop.f32.mrf.mxu0
      %v1219 = vadd.f32 %v405, %v1218
      %v1220 = vpop.f32.mrf.mxu0
      %1221 = vdwg.mxu0
      %1222 = vmatpush.bf16.msra.mxu0 %v919
      %1223 = vmatpush.bf16.msra.mxu0 %v917
      %1224 = vmatpush.bf16.msra.mxu0 %v915
      %1225 = vmatpush.bf16.msra.mxu0 %v913
      %1226 = vmatpush.bf16.msra.mxu0 %v911
      %1227 = vmatpush.bf16.msra.mxu0 %v909
      %1228 = vmatpush.bf16.msra.mxu0 %v907
      %1229 = vmatpush.bf16.msra.mxu0 %v905
      %1230 = vmatmul.bf16.gmra.mxu0 %v234
      %v1231 = vpop.f32.mrf.mxu0
      %v1232 = vadd.f32 %v1219, %v1231
      %v1233 = vpop.f32.mrf.mxu0
      %1234 = vdwg.mxu0
      %1235 = vmatpush.bf16.msra.mxu0 %v935
      %1236 = vmatpush.bf16.msra.mxu0 %v933
      %1237 = vmatpush.bf16.msra.mxu0 %v931
      %1238 = vmatpush.bf16.msra.mxu0 %v929
      %1239 = vmatpush.bf16.msra.mxu0 %v927
      %1240 = vmatpush.bf16.msra.mxu0 %v925
      %1241 = vmatpush.bf16.msra.mxu0 %v923
      %1242 = vmatpush.bf16.msra.mxu0 %v921
      %1243 = vmatmul.bf16.gmra.mxu0 %v235
      %v1244 = vpop.f32.mrf.mxu0
      %v1245 = vadd.f32 %v1232, %v1244
      %v1246 = vpop.f32.mrf.mxu0
      %1247 = vdwg.mxu0
      %1248 = vmatpush.bf16.msra.mxu0 %v951
      %1249 = vmatpush.bf16.msra.mxu0 %v949
      %1250 = vmatpush.bf16.msra.mxu0 %v947
      %1251 = vmatpush.bf16.msra.mxu0 %v945
      %1252 = vmatpush.bf16.msra.mxu0 %v943
      %1253 = vmatpush.bf16.msra.mxu0 %v941
      %1254 = vmatpush.bf16.msra.mxu0 %v939
      %1255 = vmatpush.bf16.msra.mxu0 %v937
      %1256 = vmatmul.bf16.gmra.mxu0 %v236
      %v1257 = vpop.f32.mrf.mxu0
      %v1258 = vadd.f32 %v1245, %v1257
      %v1259 = vpop.f32.mrf.mxu0
      %1260 = vdwg.mxu0
      %1261 = vmatpush.bf16.msra.mxu0 %v967
      %1262 = vmatpush.bf16.msra.mxu0 %v965
      %1263 = vmatpush.bf16.msra.mxu0 %v963
      %1264 = vmatpush.bf16.msra.mxu0 %v961
      %1265 = vmatpush.bf16.msra.mxu0 %v959
      %1266 = vmatpush.bf16.msra.mxu0 %v957
      %1267 = vmatpush.bf16.msra.mxu0 %v955
      %1268 = vmatpush.bf16.msra.mxu0 %v953
      %1269 = vmatmul.bf16.gmra.mxu0 %v237
      %v1270 = vpop.f32.mrf.mxu0
      %v1271 = vadd.f32 %v1258, %v1270
      %v1272 = vpop.f32.mrf.mxu0
      %1273 = vdwg.mxu0
      %1274 = vmatpush.bf16.msra.mxu0 %v983
      %1275 = vmatpush.bf16.msra.mxu0 %v981
      %1276 = vmatpush.bf16.msra.mxu0 %v979
      %1277 = vmatpush.bf16.msra.mxu0 %v977
      %1278 = vmatpush.bf16.msra.mxu0 %v975
      %1279 = vmatpush.bf16.msra.mxu0 %v973
      %1280 = vmatpush.bf16.msra.mxu0 %v971
      %1281 = vmatpush.bf16.msra.mxu0 %v969
      %1282 = vmatmul.bf16.gmra.mxu0 %v238
      %v1283 = vpop.f32.mrf.mxu0
      %v1284 = vadd.f32 %v1271, %v1283
      %v1285 = vpop.f32.mrf.mxu0
      %1286 = vdwg.mxu0
      %1287 = vmatpush.bf16.msra.mxu0 %v999
      %1288 = vmatpush.bf16.msra.mxu0 %v997
      %1289 = vmatpush.bf16.msra.mxu0 %v995
      %1290 = vmatpush.bf16.msra.mxu0 %v993
      %1291 = vmatpush.bf16.msra.mxu0 %v991
      %1292 = vmatpush.bf16.msra.mxu0 %v989
      %1293 = vmatpush.bf16.msra.mxu0 %v987
      %1294 = vmatpush.bf16.msra.mxu0 %v985
      %1295 = vmatmul.bf16.gmra.mxu0 %v239
      %v1296 = vpop.f32.mrf.mxu0
      %v1297 = vadd.f32 %v1284, %v1296
      %v1298 = vpop.f32.mrf.mxu0
      %1299 = vdwg.mxu0
      %1300 = vmatpush.bf16.msra.mxu0 %v1015
      %1301 = vmatpush.bf16.msra.mxu0 %v1013
      %1302 = vmatpush.bf16.msra.mxu0 %v1011
      %1303 = vmatpush.bf16.msra.mxu0 %v1009
      %1304 = vmatpush.bf16.msra.mxu0 %v1007
      %1305 = vmatpush.bf16.msra.mxu0 %v1005
      %1306 = vmatpush.bf16.msra.mxu0 %v1003
      %1307 = vmatpush.bf16.msra.mxu0 %v1001
      %1308 = vmatmul.bf16.gmra.mxu0 %v240
      %v1309 = vpop.f32.mrf.mxu0
      %v1310 = vadd.f32 %v1297, %v1309
      %v1311 = vpop.f32.mrf.mxu0
      %1312 = vdwg.mxu0
      %1313 = vmatpush.bf16.msra.mxu0 %v1031
      %1314 = vmatpush.bf16.msra.mxu0 %v1029
      %1315 = vmatpush.bf16.msra.mxu0 %v1027
      %1316 = vmatpush.bf16.msra.mxu0 %v1025
      %1317 = vmatpush.bf16.msra.mxu0 %v1023
      %1318 = vmatpush.bf16.msra.mxu0 %v1021
      %1319 = vmatpush.bf16.msra.mxu0 %v1019
      %1320 = vmatpush.bf16.msra.mxu0 %v1017
      %1321 = vmatmul.bf16.gmra.mxu0 %v241
      %v1322 = vpop.f32.mrf.mxu0
      %v1323 = vadd.f32 %v1310, %v1322
      %v1324 = vpop.f32.mrf.mxu0
      %1325 = vdwg.mxu0
      %1326 = vmatpush.bf16.msra.mxu0 %v1047
      %1327 = vmatpush.bf16.msra.mxu0 %v1045
      %1328 = vmatpush.bf16.msra.mxu0 %v1043
      %1329 = vmatpush.bf16.msra.mxu0 %v1041
      %1330 = vmatpush.bf16.msra.mxu0 %v1039
      %1331 = vmatpush.bf16.msra.mxu0 %v1037
      %1332 = vmatpush.bf16.msra.mxu0 %v1035
      %1333 = vmatpush.bf16.msra.mxu0 %v1033
      %1334 = vmatmul.bf16.gmra.mxu0 %v242
      %v1335 = vpop.f32.mrf.mxu0
      %v1336 = vadd.f32 %v1323, %v1335
      %v1337 = vpop.f32.mrf.mxu0
      %1338 = vdwg.mxu0
      %1339 = vmatpush.bf16.msra.mxu0 %v904
      %1340 = vmatpush.bf16.msra.mxu0 %v902
      %1341 = vmatpush.bf16.msra.mxu0 %v900
      %1342 = vmatpush.bf16.msra.mxu0 %v898
      %1343 = vmatpush.bf16.msra.mxu0 %v896
      %1344 = vmatpush.bf16.msra.mxu0 %v894
      %1345 = vmatpush.bf16.msra.mxu0 %v892
      %1346 = vmatpush.bf16.msra.mxu0 %v890
      %1347 = vmatmul.bf16.gmra.mxu0 %v233
      %v1348 = vpop.f32.mrf.mxu0
      %v1349 = vadd.f32 %v406, %v1348
      %v1350 = vpop.f32.mrf.mxu0
      %1351 = vdwg.mxu0
      %1352 = vmatpush.bf16.msra.mxu0 %v920
      %1353 = vmatpush.bf16.msra.mxu0 %v918
      %1354 = vmatpush.bf16.msra.mxu0 %v916
      %1355 = vmatpush.bf16.msra.mxu0 %v914
      %1356 = vmatpush.bf16.msra.mxu0 %v912
      %1357 = vmatpush.bf16.msra.mxu0 %v910
      %1358 = vmatpush.bf16.msra.mxu0 %v908
      %1359 = vmatpush.bf16.msra.mxu0 %v906
      %1360 = vmatmul.bf16.gmra.mxu0 %v234
      %v1361 = vpop.f32.mrf.mxu0
      %v1362 = vadd.f32 %v1349, %v1361
      %v1363 = vpop.f32.mrf.mxu0
      %1364 = vdwg.mxu0
      %1365 = vmatpush.bf16.msra.mxu0 %v936
      %1366 = vmatpush.bf16.msra.mxu0 %v934
      %1367 = vmatpush.bf16.msra.mxu0 %v932
      %1368 = vmatpush.bf16.msra.mxu0 %v930
      %1369 = vmatpush.bf16.msra.mxu0 %v928
      %1370 = vmatpush.bf16.msra.mxu0 %v926
      %1371 = vmatpush.bf16.msra.mxu0 %v924
      %1372 = vmatpush.bf16.msra.mxu0 %v922
      %1373 = vmatmul.bf16.gmra.mxu0 %v235
      %v1374 = vpop.f32.mrf.mxu0
      %v1375 = vadd.f32 %v1362, %v1374
      %v1376 = vpop.f32.mrf.mxu0
      %1377 = vdwg.mxu0
      %1378 = vmatpush.bf16.msra.mxu0 %v952
      %1379 = vmatpush.bf16.msra.mxu0 %v950
      %1380 = vmatpush.bf16.msra.mxu0 %v948
      %1381 = vmatpush.bf16.msra.mxu0 %v946
      %1382 = vmatpush.bf16.msra.mxu0 %v944
      %1383 = vmatpush.bf16.msra.mxu0 %v942
      %1384 = vmatpush.bf16.msra.mxu0 %v940
      %1385 = vmatpush.bf16.msra.mxu0 %v938
      %1386 = vmatmul.bf16.gmra.mxu0 %v236
      %v1387 = vpop.f32.mrf.mxu0
      %v1388 = vadd.f32 %v1375, %v1387
      %v1389 = vpop.f32.mrf.mxu0
      %1390 = vdwg.mxu0
      %1391 = vmatpush.bf16.msra.mxu0 %v968
      %1392 = vmatpush.bf16.msra.mxu0 %v966
      %1393 = vmatpush.bf16.msra.mxu0 %v964
      %1394 = vmatpush.bf16.msra.mxu0 %v962
      %1395 = vmatpush.bf16.msra.mxu0 %v960
      %1396 = vmatpush.bf16.msra.mxu0 %v958
      %1397 = vmatpush.bf16.msra.mxu0 %v956
      %1398 = vmatpush.bf16.msra.mxu0 %v954
      %1399 = vmatmul.bf16.gmra.mxu0 %v237
      %v1400 = vpop.f32.mrf.mxu0
      %v1401 = vadd.f32 %v1388, %v1400
      %v1402 = vpop.f32.mrf.mxu0
      %1403 = vdwg.mxu0
      %1404 = vmatpush.bf16.msra.mxu0 %v984
      %1405 = vmatpush.bf16.msra.mxu0 %v982
      %1406 = vmatpush.bf16.msra.mxu0 %v980
      %1407 = vmatpush.bf16.msra.mxu0 %v978
      %1408 = vmatpush.bf16.msra.mxu0 %v976
      %1409 = vmatpush.bf16.msra.mxu0 %v974
      %1410 = vmatpush.bf16.msra.mxu0 %v972
      %1411 = vmatpush.bf16.msra.mxu0 %v970
      %1412 = vmatmul.bf16.gmra.mxu0 %v238
      %v1413 = vpop.f32.mrf.mxu0
      %v1414 = vadd.f32 %v1401, %v1413
      %v1415 = vpop.f32.mrf.mxu0
      %1416 = vdwg.mxu0
      %1417 = vmatpush.bf16.msra.mxu0 %v1000
      %1418 = vmatpush.bf16.msra.mxu0 %v998
      %1419 = vmatpush.bf16.msra.mxu0 %v996
      %1420 = vmatpush.bf16.msra.mxu0 %v994
      %1421 = vmatpush.bf16.msra.mxu0 %v992
      %1422 = vmatpush.bf16.msra.mxu0 %v990
      %1423 = vmatpush.bf16.msra.mxu0 %v988
      %1424 = vmatpush.bf16.msra.mxu0 %v986
      %1425 = vmatmul.bf16.gmra.mxu0 %v239
      %v1426 = vpop.f32.mrf.mxu0
      %v1427 = vadd.f32 %v1414, %v1426
      %v1428 = vpop.f32.mrf.mxu0
      %1429 = vdwg.mxu0
      %1430 = vmatpush.bf16.msra.mxu0 %v1016
      %1431 = vmatpush.bf16.msra.mxu0 %v1014
      %1432 = vmatpush.bf16.msra.mxu0 %v1012
      %1433 = vmatpush.bf16.msra.mxu0 %v1010
      %1434 = vmatpush.bf16.msra.mxu0 %v1008
      %1435 = vmatpush.bf16.msra.mxu0 %v1006
      %1436 = vmatpush.bf16.msra.mxu0 %v1004
      %1437 = vmatpush.bf16.msra.mxu0 %v1002
      %1438 = vmatmul.bf16.gmra.mxu0 %v240
      %v1439 = vpop.f32.mrf.mxu0
      %v1440 = vadd.f32 %v1427, %v1439
      %v1441 = vpop.f32.mrf.mxu0
      %1442 = vdwg.mxu0
      %1443 = vmatpush.bf16.msra.mxu0 %v1032
      %1444 = vmatpush.bf16.msra.mxu0 %v1030
      %1445 = vmatpush.bf16.msra.mxu0 %v1028
      %1446 = vmatpush.bf16.msra.mxu0 %v1026
      %1447 = vmatpush.bf16.msra.mxu0 %v1024
      %1448 = vmatpush.bf16.msra.mxu0 %v1022
      %1449 = vmatpush.bf16.msra.mxu0 %v1020
      %1450 = vmatpush.bf16.msra.mxu0 %v1018
      %1451 = vmatmul.bf16.gmra.mxu0 %v241
      %v1452 = vpop.f32.mrf.mxu0
      %v1453 = vadd.f32 %v1440, %v1452
      %v1454 = vpop.f32.mrf.mxu0
      %1455 = vdwg.mxu0
      %1456 = vmatpush.bf16.msra.mxu0 %v1048
      %1457 = vmatpush.bf16.msra.mxu0 %v1046
      %1458 = vmatpush.bf16.msra.mxu0 %v1044
      %1459 = vmatpush.bf16.msra.mxu0 %v1042
      %1460 = vmatpush.bf16.msra.mxu0 %v1040
      %1461 = vmatpush.bf16.msra.mxu0 %v1038
      %1462 = vmatpush.bf16.msra.mxu0 %v1036
      %1463 = vmatpush.bf16.msra.mxu0 %v1034
      %1464 = vmatmul.bf16.gmra.mxu0 %v242
      %v1465 = vpop.f32.mrf.mxu0
      %v1466 = vadd.f32 %v1453, %v1465
      %v1467 = vpop.f32.mrf.mxu0
      %1468 = vdwg.mxu0
      %v1469 = vmax.f32 %v1336, 0.0
      %v1470 = vmax.f32 %v1466, 0.0
      %v1471 = vpack.c.bf16 %v1469, %v1469
      %v1472 = vpack.c.bf16 %v1470, %v1470
      %v1473 = vld [vmem:[%s3] sm:$0xf]
      %v1474 = vld [vmem:[%s3 + $0x4] sm:$0xf]
      %v1475 = vld [vmem:[%s3 + $0x8] sm:$0xf]
      %v1476 = vld [vmem:[%s3 + $0xc] sm:$0xf]
      %v1477 = vld [vmem:[%s3 + $0x10] sm:$0xf]
      %v1478 = vld [vmem:[%s3 + $0x14] sm:$0xf]
      %v1479 = vld [vmem:[%s3 + $0x18] sm:$0xf]
      %v1480 = vld [vmem:[%s3 + $0x1c] sm:$0xf]
      %v1481 = vld [vmem:[%s3 + $0x20] sm:$0xf]
      %v1482 = vld [vmem:[%s3 + $0x24] sm:$0xf]
      %v1483 = vld [vmem:[%s3 + $0x28] sm:$0xf]
      %v1484 = vld [vmem:[%s3 + $0x2c] sm:$0xf]
      %v1485 = vld [vmem:[%s3 + $0x30] sm:$0xf]
      %v1486 = vld [vmem:[%s3 + $0x34] sm:$0xf]
      %v1487 = vld [vmem:[%s3 + $0x38] sm:$0xf]
      %v1488 = vld [vmem:[%s3 + $0x3c] sm:$0xf]
      %v1489 = vld [vmem:[%s3 + $0x40] sm:$0xf]
      %v1490 = vld [vmem:[%s3 + $0x44] sm:$0xf]
      %v1491 = vld [vmem:[%s3 + $0x48] sm:$0xf]
      %v1492 = vld [vmem:[%s3 + $0x4c] sm:$0xf]
      %v1493 = vld [vmem:[%s3 + $0x50] sm:$0xf]
      %v1494 = vld [vmem:[%s3 + $0x54] sm:$0xf]
      %v1495 = vld [vmem:[%s3 + $0x58] sm:$0xf]
      %v1496 = vld [vmem:[%s3 + $0x5c] sm:$0xf]
      %v1497 = vld [vmem:[%s3 + $0x60] sm:$0xf]
      %v1498 = vld [vmem:[%s3 + $0x64] sm:$0xf]
      %v1499 = vld [vmem:[%s3 + $0x68] sm:$0xf]
      %v1500 = vld [vmem:[%s3 + $0x6c] sm:$0xf]
      %v1501 = vld [vmem:[%s3 + $0x70] sm:$0xf]
      %v1502 = vld [vmem:[%s3 + $0x74] sm:$0xf]
      %v1503 = vld [vmem:[%s3 + $0x78] sm:$0xf]
      %v1504 = vld [vmem:[%s3 + $0x7c] sm:$0xf]
      %v1505 = vld [vmem:[%s4] sm:$0x1]
      %v1507 = vperm.slane %v1505, 0
      %v1541 = vunpack.c.l.b16 %v1473
      %v1542 = vunpack.c.l.b16 %v1474
      %v1543 = vunpack.c.l.b16 %v1475
      %v1544 = vunpack.c.l.b16 %v1476
      %v1545 = vunpack.c.l.b16 %v1477
      %v1546 = vunpack.c.l.b16 %v1478
      %v1547 = vunpack.c.l.b16 %v1479
      %v1548 = vunpack.c.l.b16 %v1480
      %v1549 = vunpack.c.l.b16 %v1481
      %v1550 = vunpack.c.l.b16 %v1482
      %v1551 = vunpack.c.l.b16 %v1483
      %v1552 = vunpack.c.l.b16 %v1484
      %v1553 = vunpack.c.l.b16 %v1485
      %v1554 = vunpack.c.l.b16 %v1486
      %v1555 = vunpack.c.l.b16 %v1487
      %v1556 = vunpack.c.l.b16 %v1488
      %v1557 = vunpack.c.l.b16 %v1489
      %v1558 = vunpack.c.l.b16 %v1490
      %v1559 = vunpack.c.l.b16 %v1491
      %v1560 = vunpack.c.l.b16 %v1492
      %v1561 = vunpack.c.l.b16 %v1493
      %v1562 = vunpack.c.l.b16 %v1494
      %v1563 = vunpack.c.l.b16 %v1495
      %v1564 = vunpack.c.l.b16 %v1496
      %v1565 = vunpack.c.l.b16 %v1497
      %v1566 = vunpack.c.l.b16 %v1498
      %v1567 = vunpack.c.l.b16 %v1499
      %v1568 = vunpack.c.l.b16 %v1500
      %v1569 = vunpack.c.l.b16 %v1501
      %v1570 = vunpack.c.l.b16 %v1502
      %v1571 = vunpack.c.l.b16 %v1503
      %v1572 = vunpack.c.l.b16 %v1504
      %v1573 = vpack.c.b16 %v1542, %v1541
      %v1574 = vpack.c.b16 %v1544, %v1543
      %v1575 = vpack.c.b16 %v1546, %v1545
      %v1576 = vpack.c.b16 %v1548, %v1547
      %v1577 = vpack.c.b16 %v1550, %v1549
      %v1578 = vpack.c.b16 %v1552, %v1551
      %v1579 = vpack.c.b16 %v1554, %v1553
      %v1580 = vpack.c.b16 %v1556, %v1555
      %v1581 = vpack.c.b16 %v1558, %v1557
      %v1582 = vpack.c.b16 %v1560, %v1559
      %v1583 = vpack.c.b16 %v1562, %v1561
      %v1584 = vpack.c.b16 %v1564, %v1563
      %v1585 = vpack.c.b16 %v1566, %v1565
      %v1586 = vpack.c.b16 %v1568, %v1567
      %v1587 = vpack.c.b16 %v1570, %v1569
      %v1588 = vpack.c.b16 %v1572, %v1571
      %1605 = vmatpush.bf16.msra.mxu0 %v1580
      %1606 = vmatpush.bf16.msra.mxu0 %v1579
      %1607 = vmatpush.bf16.msra.mxu0 %v1578
      %1608 = vmatpush.bf16.msra.mxu0 %v1577
      %1609 = vmatpush.bf16.msra.mxu0 %v1576
      %1610 = vmatpush.bf16.msra.mxu0 %v1575
      %1611 = vmatpush.bf16.msra.mxu0 %v1574
      %1612 = vmatpush.bf16.msra.mxu0 %v1573
      %1613 = vmatmul.bf16.gmra.mxu0 %v1471
      %v1614 = vpop.f32.mrf.mxu0
      %v1615 = vadd.f32 %v1507, %v1614
      %v1616 = vpop.f32.mrf.mxu0
      %1617 = vdwg.mxu0
      %1618 = vmatpush.bf16.msra.mxu0 %v1588
      %1619 = vmatpush.bf16.msra.mxu0 %v1587
      %1620 = vmatpush.bf16.msra.mxu0 %v1586
      %1621 = vmatpush.bf16.msra.mxu0 %v1585
      %1622 = vmatpush.bf16.msra.mxu0 %v1584
      %1623 = vmatpush.bf16.msra.mxu0 %v1583
      %1624 = vmatpush.bf16.msra.mxu0 %v1582
      %1625 = vmatpush.bf16.msra.mxu0 %v1581
      %1626 = vmatmul.bf16.gmra.mxu0 %v1472
      %v1627 = vpop.f32.mrf.mxu0
      %v1628 = vadd.f32 %v1615, %v1627
      %v1629 = vpop.f32.mrf.mxu0
      %1630 = vdwg.mxu0
      %1631 = vmax.xlane.f32.xlu0 %v1628
      %v1632 = vpop.xlane.xlu0 %1631
      %v1633 = vsub.f32 %v1628, %v1632
      %v1634 = vmul.f32 %v1633, 1.442695
      %v1635 = vpow.pop %v1634
      %1636 = vadd.xlane.f32.xlu0 %v1635
      %v1637 = vpop.xlane.xlu0 %1636
      %v1638 = vlog2.pop %v1637
      %v1639 = vmul.f32 %v1638, 0.6931472
      %v1640 = vsub.f32 %v1633, %v1639
      %1641 = vst [vmem:[%s222] sm:$0xff] %v1640
      %p1642 = scmp.lt.s32.totalorder %s16, 1
      %s1643 = scalar_select %p1642, %s16, 1
      %s1644 = smul.addr %s1643, 8
      %s1645 = scalar_lea.vmem %s5, %s1644
      // Predicated region
      $region41: #{emnist_forward.3} parent=39 // pred_check
        %p1646 = pneg %p144
      $region42: #{emnist_forward.3} parent=39 // pred_check_branch
        %1648 = sbr.rel (%p1646) target = $region44
      $region43: #{emnist_forward.3} parent=39 // pred_region
        _
      $region44: #{emnist_forward.3} parent=39 // pred_fallthru
        _
    $region40: #{emnist_forward.3} parent=5 // pred_fallthru
      _
    %p1649 = scmp.le.s32.totalorder 2, %s11
    // Predicated region
    $region45: #{emnist_forward.3} parent=5 // pred_check
      %p1650 = pneg %p1649
    $region46: #{emnist_forward.3} parent=5 // pred_check_branch
      %1652 = sbr.rel (%p1650) target = $region48
    $region47: #{emnist_forward.3} parent=5 // pred_region
      %s1653 = ssub.s32 %s11, 2
      // Predicated region
      $region49: #{emnist_forward.3} parent=47 // pred_check
        %p1654 = pneg %p150
      $region50: #{emnist_forward.3} parent=47 // pred_check_branch
        %1656 = sbr.rel (%p1654) target = $region52
      $region51: #{emnist_forward.3} parent=47 // pred_region
        %p1657 = scmp.lt.s32.totalorder %s17, 1
        %s1658 = scalar_select %p1657, %s17, 1
        %s1659 = smul.addr %s1658, 8
        %s1660 = scalar_lea.vmem %s5, %s1659
      $region52: #{emnist_forward.3} parent=47 // pred_fallthru
        _
    $region48: #{emnist_forward.3} parent=5 // pred_fallthru
      _
  $region6: #{emnist_forward.3} parent=0 // loop_footer
    %s15 = sadd.s32 1, %s11
  $region7: #{emnist_forward.3} parent=0 // loop_footer_branch
    %10 = sbr.rel target = $region3
  $region8: #{emnist_forward.3} parent=0 // loop_exit
    _

// kernel: emnist_forward.2
$region0: #{emnist_forward.2}
  #allocation0 [shape = 'u32[]', space=smem, size = 0x4, offset = 0x4, fixed_abs, tag = 'smem constant byte address 0x4 - core index']
  #allocation1 [shape = 'u32[72,128]{1,0:T(1,128)}', space=vmem, size = 0x9000, scoped, tag = 'internal scratch']
  %s0 = inlined_call_operand.vmem [shape: f32[16,28,28], index: 0, kind: input, shape index: {}]
  %s1 = inlined_call_operand.vmem [shape: f32[128,191], index: 1, kind: input, shape index: {}]
  %s2 = inlined_call_operand.vmem [shape: f32[5,28,240], index: 2, kind: input, shape index: {}]
  %s3 = inlined_call_operand.vmem [shape: f32[1,240], index: 3, kind: input, shape index: {}]
  %s4 = inlined_call_operand.vmem [shape: bf16[5,230,160], index: 4, kind: input, shape index: {}]
  %s5 = inlined_call_operand.vmem [shape: f32[1,160], index: 5, kind: input, shape index: {}]
  %s6 = inlined_call_operand.vmem [shape: f32[16,8,160], index: 6, kind: output, shape index: {}]
  %s7 = sld [smem:[#allocation0]]
  $region57: #{emnist_forward.2} parent=0
    _
  %s9 = ssub.s32 1, %s7
  %s10 = scalar_select 0, %s9, %s7
  loop: start=0, step=1, limit=4
  $region2: #{emnist_forward.2} parent=0 // loop_pre_header
    _
  $region3: #{emnist_forward.2} parent=0 // loop_header
    %s12 = sphi 0, %s16
    %p13 = scmp.ge.s32.totalorder %s12, 4
    %s22 = sphi 0, %s24
    %s25 = sphi 0, %s22
    %s26 = sphi 0, %s25
    %s42 = sphi 0, %s26
    %s46 = sphi 0, %s46
    %s48 = sphi 0, %s46
    %s49 = sphi 0, %s48
    %s63 = sphi 0, %s49
    %s67 = sphi 0, %s67
    %s69 = sphi 0, %s67
    %s70 = sphi 0, %s69
    %s84 = sphi 0, %s70
    %s88 = sphi 0, %s88
    %s90 = sphi 0, %s88
    %s91 = sphi 0, %s90
    %s105 = sphi 0, %s91
    %s109 = sphi 0, %s109
    %s111 = sphi 0, %s109
    %s112 = sphi 0, %s111
    %s126 = sphi 0, %s112
    %s130 = sphi 0, %s130
    %s132 = sphi 0, %s130
    %s133 = sphi 0, %s132
    %s147 = sphi 0, %s133
    %s153 = sphi 0, %s155
    %s156 = sphi 0, %s153
    %s157 = sphi 0, %s156
    %s173 = sphi 0, %s157
  $region4: #{emnist_forward.2} parent=0 // loop_header_branch
    %15 = sbr.rel (%p13) target = $region8
  $region5: #{emnist_forward.2} parent=0 // loop_body
    %s17 = ssub.s32 %s12, 1
    %s18 = ssub.s32 %s12, 2
    %s19 = sadd.s32 %s12, 1
    %s20 = ssub.s32 %s12, %s19
    %p21 = scmp.eq.s32.totalorder %s20, 0
    %s23 = sadd.s32 %s22, 1
    %s24 = scalar_select %p21, %s22, %s23
    %p27 = pneg %p21
    %p28 = scmp.eq.s32.totalorder %s12, 1
    %p29 = por %p27, %p28
    %p30 = scmp.ne.s32.totalorder %s22, %s25
    %p31 = scmp.eq.s32.totalorder %s12, 0
    %p32 = por %p30, %p31
    %p33 = scmp.ne.s32.totalorder %s22, %s25
    %p34 = scmp.eq.s32.totalorder %s17, 1
    %p35 = por %p33, %p34
    %p36 = scmp.ne.s32.totalorder %s25, %s26
    %p37 = scmp.eq.s32.totalorder %s17, 0
    %p38 = por %p36, %p37
    %p39 = scmp.ne.s32.totalorder %s25, %s26
    %p40 = scmp.eq.s32.totalorder %s18, 1
    %p41 = por %p39, %p40
    %p43 = scmp.ne.s32.totalorder %s26, %s42
    %p44 = scmp.eq.s32.totalorder %s18, 0
    %p45 = por %p43, %p44
    %s47 = sadd.s32 %s46, 1
    %p50 = scmp.eq.s32.totalorder %s12, 1
    %p51 = scmp.ne.s32.totalorder %s46, %s48
    %p52 = scmp.eq.s32.totalorder %s12, 0
    %p53 = por %p51, %p52
    %p54 = scmp.ne.s32.totalorder %s46, %s48
    %p55 = scmp.eq.s32.totalorder %s17, 1
    %p56 = por %p54, %p55
    %p57 = scmp.ne.s32.totalorder %s48, %s49
    %p58 = scmp.eq.s32.totalorder %s17, 0
    %p59 = por %p57, %p58
    %p60 = scmp.ne.s32.totalorder %s48, %s49
    %p61 = scmp.eq.s32.totalorder %s18, 1
    %p62 = por %p60, %p61
    %p64 = scmp.ne.s32.totalorder %s49, %s63
    %p65 = scmp.eq.s32.totalorder %s18, 0
    %p66 = por %p64, %p65
    %s68 = sadd.s32 %s67, 1
    %p71 = scmp.eq.s32.totalorder %s12, 1
    %p72 = scmp.ne.s32.totalorder %s67, %s69
    %p73 = scmp.eq.s32.totalorder %s12, 0
    %p74 = por %p72, %p73
    %p75 = scmp.ne.s32.totalorder %s67, %s69
    %p76 = scmp.eq.s32.totalorder %s17, 1
    %p77 = por %p75, %p76
    %p78 = scmp.ne.s32.totalorder %s69, %s70
    %p79 = scmp.eq.s32.totalorder %s17, 0
    %p80 = por %p78, %p79
    %p81 = scmp.ne.s32.totalorder %s69, %s70
    %p82 = scmp.eq.s32.totalorder %s18, 1
    %p83 = por %p81, %p82
    %p85 = scmp.ne.s32.totalorder %s70, %s84
    %p86 = scmp.eq.s32.totalorder %s18, 0
    %p87 = por %p85, %p86
    %s89 = sadd.s32 %s88, 1
    %p92 = scmp.eq.s32.totalorder %s12, 1
    %p93 = scmp.ne.s32.totalorder %s88, %s90
    %p94 = scmp.eq.s32.totalorder %s12, 0
    %p95 = por %p93, %p94
    %p96 = scmp.ne.s32.totalorder %s88, %s90
    %p97 = scmp.eq.s32.totalorder %s17, 1
    %p98 = por %p96, %p97
    %p99 = scmp.ne.s32.totalorder %s90, %s91
    %p100 = scmp.eq.s32.totalorder %s17, 0
    %p101 = por %p99, %p100
    %p102 = scmp.ne.s32.totalorder %s90, %s91
    %p103 = scmp.eq.s32.totalorder %s18, 1
    %p104 = por %p102, %p103
    %p106 = scmp.ne.s32.totalorder %s91, %s105
    %p107 = scmp.eq.s32.totalorder %s18, 0
    %p108 = por %p106, %p107
    %s110 = sadd.s32 %s109, 1
    %p113 = scmp.eq.s32.totalorder %s12, 1
    %p114 = scmp.ne.s32.totalorder %s109, %s111
    %p115 = scmp.eq.s32.totalorder %s12, 0
    %p116 = por %p114, %p115
    %p117 = scmp.ne.s32.totalorder %s109, %s111
    %p118 = scmp.eq.s32.totalorder %s17, 1
    %p119 = por %p117, %p118
    %p120 = scmp.ne.s32.totalorder %s111, %s112
    %p121 = scmp.eq.s32.totalorder %s17, 0
    %p122 = por %p120, %p121
    %p123 = scmp.ne.s32.totalorder %s111, %s112
    %p124 = scmp.eq.s32.totalorder %s18, 1
    %p125 = por %p123, %p124
    %p127 = scmp.ne.s32.totalorder %s112, %s126
    %p128 = scmp.eq.s32.totalorder %s18, 0
    %p129 = por %p127, %p128
    %s131 = sadd.s32 %s130, 1
    %p134 = scmp.eq.s32.totalorder %s12, 1
    %p135 = scmp.ne.s32.totalorder %s130, %s132
    %p136 = scmp.eq.s32.totalorder %s12, 0
    %p137 = por %p135, %p136
    %p138 = scmp.ne.s32.totalorder %s130, %s132
    %p139 = scmp.eq.s32.totalorder %s17, 1
    %p140 = por %p138, %p139
    %p141 = scmp.ne.s32.totalorder %s132, %s133
    %p142 = scmp.eq.s32.totalorder %s17, 0
    %p143 = por %p141, %p142
    %p144 = scmp.ne.s32.totalorder %s132, %s133
    %p145 = scmp.eq.s32.totalorder %s18, 1
    %p146 = por %p144, %p145
    %p148 = scmp.ne.s32.totalorder %s133, %s147
    %p149 = scmp.eq.s32.totalorder %s18, 0
    %p150 = por %p148, %p149
    %s151 = ssub.s32 %s12, %s19
    %p152 = scmp.eq.s32.totalorder %s151, 0
    %s154 = sadd.s32 %s153, 1
    %s155 = scalar_select %p152, %s153, %s154
    %p158 = pneg %p152
    %p159 = scmp.eq.s32.totalorder %s12, 1
    %p160 = por %p158, %p159
    %p161 = scmp.ne.s32.totalorder %s153, %s156
    %p162 = scmp.eq.s32.totalorder %s12, 0
    %p163 = por %p161, %p162
    %p164 = scmp.ne.s32.totalorder %s153, %s156
    %p165 = scmp.eq.s32.totalorder %s17, 1
    %p166 = por %p164, %p165
    %p167 = scmp.ne.s32.totalorder %s156, %s157
    %p168 = scmp.eq.s32.totalorder %s17, 0
    %p169 = por %p167, %p168
    %p170 = scmp.ne.s32.totalorder %s156, %s157
    %p171 = scmp.eq.s32.totalorder %s18, 1
    %p172 = por %p170, %p171
    %p174 = scmp.ne.s32.totalorder %s157, %s173
    %p175 = scmp.eq.s32.totalorder %s18, 0
    %p176 = por %p174, %p175
    %p177 = scmp.le.s32.totalorder 1, %s12
    %p178 = scmp.lt.s32.totalorder %s12, 3
    %p179 = pnand %p177, %p178
    %p180 = pneg %p179
    // Predicated region
    $region9: #{emnist_forward.2} parent=5 // pred_check
      _
    $region10: #{emnist_forward.2} parent=5 // pred_check_branch
      %182 = sbr.rel (%p179) target = $region12
    $region11: #{emnist_forward.2} parent=5 // pred_region
      %s183 = ssub.s32 %s12, 1
      // Predicated region
      $region13: #{emnist_forward.2} parent=11 // pred_check
        %p184 = pneg %p59
      $region14: #{emnist_forward.2} parent=11 // pred_check_branch
        %186 = sbr.rel (%p184) target = $region16
      $region15: #{emnist_forward.2} parent=11 // pred_region
        _
      $region16: #{emnist_forward.2} parent=11 // pred_fallthru
        _
      // Predicated region
      $region17: #{emnist_forward.2} parent=11 // pred_check
        %p187 = pneg %p80
      $region18: #{emnist_forward.2} parent=11 // pred_check_branch
        %189 = sbr.rel (%p187) target = $region20
      $region19: #{emnist_forward.2} parent=11 // pred_region
        _
      $region20: #{emnist_forward.2} parent=11 // pred_fallthru
        _
      // Predicated region
      $region21: #{emnist_forward.2} parent=11 // pred_check
        %p190 = pneg %p101
      $region22: #{emnist_forward.2} parent=11 // pred_check_branch
        %192 = sbr.rel (%p190) target = $region24
      $region23: #{emnist_forward.2} parent=11 // pred_region
        _
      $region24: #{emnist_forward.2} parent=11 // pred_fallthru
        _
      // Predicated region
      $region25: #{emnist_forward.2} parent=11 // pred_check
        %p193 = pneg %p122
      $region26: #{emnist_forward.2} parent=11 // pred_check_branch
        %195 = sbr.rel (%p193) target = $region28
      $region27: #{emnist_forward.2} parent=11 // pred_region
        _
      $region28: #{emnist_forward.2} parent=11 // pred_fallthru
        _
      // Predicated region
      $region29: #{emnist_forward.2} parent=11 // pred_check
        %p196 = pneg %p143
      $region30: #{emnist_forward.2} parent=11 // pred_check_branch
        %198 = sbr.rel (%p196) target = $region32
      $region31: #{emnist_forward.2} parent=11 // pred_region
        _
      $region32: #{emnist_forward.2} parent=11 // pred_fallthru
        _
    $region12: #{emnist_forward.2} parent=5 // pred_fallthru
      _
    %p199 = scmp.lt.s32.totalorder %s12, 2
    // Predicated region
    $region33: #{emnist_forward.2} parent=5 // pred_check
      %p200 = pneg %p199
    $region34: #{emnist_forward.2} parent=5 // pred_check_branch
      %202 = sbr.rel (%p200) target = $region36
    $region35: #{emnist_forward.2} parent=5 // pred_region
      // Predicated region
      $region37: #{emnist_forward.2} parent=35 // pred_check
        %p203 = pneg %p32
      $region38: #{emnist_forward.2} parent=35 // pred_check_branch
        %205 = sbr.rel (%p203) target = $region40
      $region39: #{emnist_forward.2} parent=35 // pred_region
        %s206 = smul.u32 8, %s12
        %p207 = scmp.lt.s32.totalorder %s206, 15
        %s208 = scalar_select %p207, %s206, 15
        %s209 = smul.addr %s208, 4
        %s210 = smul.addr %s209, 8
        %s211 = scalar_lea.vmem %s0, %s210
        %s212 = smul.u32 8, %s12
      $region40: #{emnist_forward.2} parent=35 // pred_fallthru
        _
    $region36: #{emnist_forward.2} parent=5 // pred_fallthru
      _
    %p213 = scmp.le.s32.totalorder 1, %s12
    %p214 = scmp.lt.s32.totalorder %s12, 3
    %p215 = pnand %p213, %p214
    %p216 = pneg %p215
    // Predicated region
    $region41: #{emnist_forward.2} parent=5 // pred_check
      _
    $region42: #{emnist_forward.2} parent=5 // pred_check_branch
      %218 = sbr.rel (%p215) target = $region44
    $region43: #{emnist_forward.2} parent=5 // pred_region
      %s219 = ssub.s32 %s12, 1
      %s220 = smul.u32 8, %s17
      %p221 = scmp.lt.s32.totalorder %s220, 15
      %s222 = scalar_select %p221, %s220, 15
      %s223 = smul.addr %s222, 4
      %s224 = smul.addr %s223, 8
      %s225 = scalar_lea.vmem %s0, %s224
      %p226 = pneg %p38
      %p227 = pneg %p35
      %p228 = pneg %p59
      %p229 = pneg %p56
      %p230 = pneg %p80
      %p231 = pneg %p77
      %p232 = pneg %p101
      %p233 = pneg %p98
      %p234 = pneg %p122
      %p235 = pneg %p119
      %p236 = pneg %p143
      %p237 = pneg %p140
      %p238 = pneg %p169
      %p239 = pneg %p166
      %s240 = smul.u32 8, %s17
      %p241 = scmp.lt.s32.totalorder %s240, 15
      %s242 = scalar_select %p241, %s240, 15
      %s243 = smul.addr %s242, 2
      %s244 = smul.addr %s243, 8
      %s245 = scalar_lea.vmem %s6, %s244
      %s246 = smul.u32 8, %s17
      %p247 = scmp.lt.s32.totalorder %s246, 15
      %s248 = scalar_select %p247, %s246, 15
      %s249 = smul.addr %s248, 4
      %s250 = smul.addr %s249, 8
      %s251 = scalar_lea.vmem %s0, %s250
      %s252 = smul.u32 8, %s17
      %s253 = smul.u32 8, %s17
      %p254 = scmp.lt.s32.totalorder %s253, 15
      %s255 = scalar_select %p254, %s253, 15
      %s256 = smul.addr %s255, 2
      %s257 = smul.addr %s256, 8
      %s258 = scalar_lea.vmem %s6, %s257
      %s259 = smul.u32 8, %s17
      %v261 = vld [vmem:[%s251] sm:$0xff]
      %v262 = vld [vmem:[%s251 + $0x8] sm:$0xff]
      %v263 = vld [vmem:[%s251 + $0x10] sm:$0xff]
      %v264 = vld [vmem:[%s251 + $0x20] sm:$0xff]
      %v265 = vld [vmem:[%s251 + $0x28] sm:$0xff]
      %v266 = vld [vmem:[%s251 + $0x30] sm:$0xff]
      %v267 = vld [vmem:[%s251 + $0x40] sm:$0xff]
      %v268 = vld [vmem:[%s251 + $0x48] sm:$0xff]
      %v269 = vld [vmem:[%s251 + $0x50] sm:$0xff]
      %v270 = vld [vmem:[%s251 + $0x60] sm:$0xff]
      %v271 = vld [vmem:[%s251 + $0x68] sm:$0xff]
      %v272 = vld [vmem:[%s251 + $0x70] sm:$0xff]
      %v273 = vld [vmem:[%s251 + $0x80] sm:$0xff]
      %v274 = vld [vmem:[%s251 + $0x88] sm:$0xff]
      %v275 = vld [vmem:[%s251 + $0x90] sm:$0xff]
      %v276 = vld [vmem:[%s251 + $0xa0] sm:$0xff]
      %v277 = vld [vmem:[%s251 + $0xa8] sm:$0xff]
      %v278 = vld [vmem:[%s251 + $0xb0] sm:$0xff]
      %v279 = vld [vmem:[%s251 + $0xc0] sm:$0xff]
      %v280 = vld [vmem:[%s251 + $0xc8] sm:$0xff]
      %v281 = vld [vmem:[%s251 + $0xd0] sm:$0xff]
      %v282 = vld [vmem:[%s251 + $0xe0] sm:$0xff]
      %v283 = vld [vmem:[%s251 + $0xe8] sm:$0xff]
      %v284 = vld [vmem:[%s251 + $0xf0] sm:$0xff]
      %v285 = vld [vmem:[%s2] sm:$0xff]
      %v286 = vld [vmem:[%s2 + $0x8] sm:$0xff]
      %v287 = vld [vmem:[%s2 + $0x10] sm:$0xff]
      %v288 = vld [vmem:[%s2 + $0x18] sm:$0xff]
      %v289 = vld [vmem:[%s2 + $0x20] sm:$0xff]
      %v290 = vld [vmem:[%s2 + $0x28] sm:$0xff]
      %v291 = vld [vmem:[%s2 + $0x30] sm:$0xf]
      %v292 = vld [vmem:[%s2 + $0x38] sm:$0xf]
      %v293 = vld [vmem:[%s251 + $0x1] sm:$0xff]
      %v294 = vld [vmem:[%s251 + $0x9] sm:$0xff]
      %v295 = vld [vmem:[%s251 + $0x11] sm:$0xff]
      %v296 = vld [vmem:[%s251 + $0x21] sm:$0xff]
      %v297 = vld [vmem:[%s251 + $0x29] sm:$0xff]
      %v298 = vld [vmem:[%s251 + $0x31] sm:$0xff]
      %v299 = vld [vmem:[%s251 + $0x41] sm:$0xff]
      %v300 = vld [vmem:[%s251 + $0x49] sm:$0xff]
      %v301 = vld [vmem:[%s251 + $0x51] sm:$0xff]
      %v302 = vld [vmem:[%s251 + $0x61] sm:$0xff]
      %v303 = vld [vmem:[%s251 + $0x69] sm:$0xff]
      %v304 = vld [vmem:[%s251 + $0x71] sm:$0xff]
      %v305 = vld [vmem:[%s251 + $0x81] sm:$0xff]
      %v306 = vld [vmem:[%s251 + $0x89] sm:$0xff]
      %v307 = vld [vmem:[%s251 + $0x91] sm:$0xff]
      %v308 = vld [vmem:[%s251 + $0xa1] sm:$0xff]
      %v309 = vld [vmem:[%s251 + $0xa9] sm:$0xff]
      %v310 = vld [vmem:[%s251 + $0xb1] sm:$0xff]
      %v311 = vld [vmem:[%s251 + $0xc1] sm:$0xff]
      %v312 = vld [vmem:[%s251 + $0xc9] sm:$0xff]
      %v313 = vld [vmem:[%s251 + $0xd1] sm:$0xff]
      %v314 = vld [vmem:[%s251 + $0xe1] sm:$0xff]
      %v315 = vld [vmem:[%s251 + $0xe9] sm:$0xff]
      %v316 = vld [vmem:[%s251 + $0xf1] sm:$0xff]
      %s317 = scalar_lea.vmem %s2, 64
      %v318 = vld [vmem:[%s317] sm:$0xff]
      %v319 = vld [vmem:[%s317 + $0x8] sm:$0xff]
      %v320 = vld [vmem:[%s317 + $0x10] sm:$0xff]
      %v321 = vld [vmem:[%s317 + $0x18] sm:$0xff]
      %v322 = vld [vmem:[%s317 + $0x20] sm:$0xff]
      %v323 = vld [vmem:[%s317 + $0x28] sm:$0xff]
      %v324 = vld [vmem:[%s317 + $0x30] sm:$0xf]
      %v325 = vld [vmem:[%s317 + $0x38] sm:$0xf]
      %vm326 = vcmask 228352
      %v328 = vsel %vm326, %v293, 0
      %v331 = vsel %vm326, %v294, 0
      %v334 = vsel %vm326, %v295, 0
      %v337 = vsel %vm326, %v296, 0
      %v340 = vsel %vm326, %v297, 0
      %v343 = vsel %vm326, %v298, 0
      %v346 = vsel %vm326, %v299, 0
      %v349 = vsel %vm326, %v300, 0
      %v352 = vsel %vm326, %v301, 0
      %v355 = vsel %vm326, %v302, 0
      %v358 = vsel %vm326, %v303, 0
      %v361 = vsel %vm326, %v304, 0
      %v364 = vsel %vm326, %v305, 0
      %v367 = vsel %vm326, %v306, 0
      %v370 = vsel %vm326, %v307, 0
      %v373 = vsel %vm326, %v308, 0
      %v376 = vsel %vm326, %v309, 0
      %v379 = vsel %vm326, %v310, 0
      %v382 = vsel %vm326, %v311, 0
      %v385 = vsel %vm326, %v312, 0
      %v388 = vsel %vm326, %v313, 0
      %v391 = vsel %vm326, %v314, 0
      %v394 = vsel %vm326, %v315, 0
      %v397 = vsel %vm326, %v316, 0
      %vm399 = vcmask 1043456
      %v401 = vsel %vm399, %v324, 0
      %v404 = vsel %vm399, %v325, 0
      %406 = vmatpush.msra.mxu0 0.0
      %407 = vmatpush.msra.mxu0 0.0
      %408 = vmatpush.msra.mxu0 0.0
      %409 = vmatpush.msra.mxu0 0.0
      %410 = vmatpush.msra.mxu0 0.0
      %411 = vmatpush.msra.mxu0 0.0
      %412 = vmatpush.msra.mxu0 0.0
      %413 = vmatpush.msra.mxu0 0.0
      %414 = vmatpush.msra.mxu0 0.0
      %415 = vmatpush.msra.mxu0 0.0
      %416 = vmatpush.msra.mxu0 0.0
      %417 = vmatpush.msra.mxu0 0.0
      %418 = vmatpush.msra.mxu0 %v401
      %419 = vmatpush.msra.mxu0 %v322
      %420 = vmatpush.msra.mxu0 %v320
      %421 = vmatpush.msra.mxu0 %v318
      %422 = vmatmul.f32.gmra.mxu0 %v328
      %v423 = vpop.f32.mrf.mxu0
      %v424 = vadd.f32 0.0, %v423
      %425 = vmatmul.f32.gmra.mxu0 %v331
      %v426 = vpop.f32.mrf.mxu0
      %v427 = vadd.f32 0.0, %v426
      %428 = vmatmul.f32.gmra.mxu0 %v334
      %v429 = vpop.f32.mrf.mxu0
      %v430 = vadd.f32 0.0, %v429
      %431 = vmatmul.f32.gmra.mxu0 %v337
      %v432 = vpop.f32.mrf.mxu0
      %v433 = vadd.f32 0.0, %v432
      %434 = vmatmul.f32.gmra.mxu0 %v340
      %v435 = vpop.f32.mrf.mxu0
      %v436 = vadd.f32 0.0, %v435
      %437 = vmatmul.f32.gmra.mxu0 %v343
      %v438 = vpop.f32.mrf.mxu0
      %v439 = vadd.f32 0.0, %v438
      %440 = vmatmul.f32.gmra.mxu0 %v346
      %v441 = vpop.f32.mrf.mxu0
      %v442 = vadd.f32 0.0, %v441
      %443 = vmatmul.f32.gmra.mxu0 %v349
      %v444 = vpop.f32.mrf.mxu0
      %v445 = vadd.f32 0.0, %v444
      %446 = vmatmul.f32.gmra.mxu0 %v352
      %v447 = vpop.f32.mrf.mxu0
      %v448 = vadd.f32 0.0, %v447
      %449 = vmatmul.f32.gmra.mxu0 %v355
      %v450 = vpop.f32.mrf.mxu0
      %v451 = vadd.f32 0.0, %v450
      %452 = vmatmul.f32.gmra.mxu0 %v358
      %v453 = vpop.f32.mrf.mxu0
      %v454 = vadd.f32 0.0, %v453
      %455 = vmatmul.f32.gmra.mxu0 %v361
      %v456 = vpop.f32.mrf.mxu0
      %v457 = vadd.f32 0.0, %v456
      %458 = vmatmul.f32.gmra.mxu0 %v364
      %v459 = vpop.f32.mrf.mxu0
      %v460 = vadd.f32 0.0, %v459
      %461 = vmatmul.f32.gmra.mxu0 %v367
      %v462 = vpop.f32.mrf.mxu0
      %v463 = vadd.f32 0.0, %v462
      %464 = vmatmul.f32.gmra.mxu0 %v370
      %v465 = vpop.f32.mrf.mxu0
      %v466 = vadd.f32 0.0, %v465
      %467 = vmatmul.f32.gmra.mxu0 %v373
      %v468 = vpop.f32.mrf.mxu0
      %v469 = vadd.f32 0.0, %v468
      %470 = vmatmul.f32.gmra.mxu0 %v376
      %v471 = vpop.f32.mrf.mxu0
      %v472 = vadd.f32 0.0, %v471
      %473 = vmatmul.f32.gmra.mxu0 %v379
      %v474 = vpop.f32.mrf.mxu0
      %v475 = vadd.f32 0.0, %v474
      %476 = vmatmul.f32.gmra.mxu0 %v382
      %v477 = vpop.f32.mrf.mxu0
      %v478 = vadd.f32 0.0, %v477
      %479 = vmatmul.f32.gmra.mxu0 %v385
      %v480 = vpop.f32.mrf.mxu0
      %v481 = vadd.f32 0.0, %v480
      %482 = vmatmul.f32.gmra.mxu0 %v388
      %v483 = vpop.f32.mrf.mxu0
      %v484 = vadd.f32 0.0, %v483
      %485 = vmatmul.f32.gmra.mxu0 %v391
      %v486 = vpop.f32.mrf.mxu0
      %v487 = vadd.f32 0.0, %v486
      %488 = vmatmul.f32.gmra.mxu0 %v394
      %v489 = vpop.f32.mrf.mxu0
      %v490 = vadd.f32 0.0, %v489
      %491 = vmatmul.f32.gmra.mxu0 %v397
      %v492 = vpop.f32.mrf.mxu0
      %v493 = vadd.f32 0.0, %v492
      %494 = vdwg.mxu0
      %495 = vmatpush.msra.mxu0 0.0
      %496 = vmatpush.msra.mxu0 0.0
      %497 = vmatpush.msra.mxu0 0.0
      %498 = vmatpush.msra.mxu0 0.0
      %499 = vmatpush.msra.mxu0 0.0
      %500 = vmatpush.msra.mxu0 0.0
      %501 = vmatpush.msra.mxu0 0.0
      %502 = vmatpush.msra.mxu0 0.0
      %503 = vmatpush.msra.mxu0 0.0
      %504 = vmatpush.msra.mxu0 0.0
      %505 = vmatpush.msra.mxu0 0.0
      %506 = vmatpush.msra.mxu0 0.0
      %507 = vmatpush.msra.mxu0 %v404
      %508 = vmatpush.msra.mxu0 %v323
      %509 = vmatpush.msra.mxu0 %v321
      %510 = vmatpush.msra.mxu0 %v319
      %511 = vmatmul.f32.gmra.mxu0 %v328
      %v512 = vpop.f32.mrf.mxu0
      %v513 = vadd.f32 0.0, %v512
      %514 = vmatmul.f32.gmra.mxu0 %v331
      %v515 = vpop.f32.mrf.mxu0
      %v516 = vadd.f32 0.0, %v515
      %517 = vmatmul.f32.gmra.mxu0 %v334
      %v518 = vpop.f32.mrf.mxu0
      %v519 = vadd.f32 0.0, %v518
      %520 = vmatmul.f32.gmra.mxu0 %v337
      %v521 = vpop.f32.mrf.mxu0
      %v522 = vadd.f32 0.0, %v521
      %523 = vmatmul.f32.gmra.mxu0 %v340
      %v524 = vpop.f32.mrf.mxu0
      %v525 = vadd.f32 0.0, %v524
      %526 = vmatmul.f32.gmra.mxu0 %v343
      %v527 = vpop.f32.mrf.mxu0
      %v528 = vadd.f32 0.0, %v527
      %529 = vmatmul.f32.gmra.mxu0 %v346
      %v530 = vpop.f32.mrf.mxu0
      %v531 = vadd.f32 0.0, %v530
      %532 = vmatmul.f32.gmra.mxu0 %v349
      %v533 = vpop.f32.mrf.mxu0
      %v534 = vadd.f32 0.0, %v533
      %535 = vmatmul.f32.gmra.mxu0 %v352
      %v536 = vpop.f32.mrf.mxu0
      %v537 = vadd.f32 0.0, %v536
      %538 = vmatmul.f32.gmra.mxu0 %v355
      %v539 = vpop.f32.mrf.mxu0
      %v540 = vadd.f32 0.0, %v539
      %541 = vmatmul.f32.gmra.mxu0 %v358
      %v542 = vpop.f32.mrf.mxu0
      %v543 = vadd.f32 0.0, %v542
      %544 = vmatmul.f32.gmra.mxu0 %v361
      %v545 = vpop.f32.mrf.mxu0
      %v546 = vadd.f32 0.0, %v545
      %547 = vmatmul.f32.gmra.mxu0 %v364
      %v548 = vpop.f32.mrf.mxu0
      %v549 = vadd.f32 0.0, %v548
      %550 = vmatmul.f32.gmra.mxu0 %v367
      %v551 = vpop.f32.mrf.mxu0
      %v552 = vadd.f32 0.0, %v551
      %553 = vmatmul.f32.gmra.mxu0 %v370
      %v554 = vpop.f32.mrf.mxu0
      %v555 = vadd.f32 0.0, %v554
      %556 = vmatmul.f32.gmra.mxu0 %v373
      %v557 = vpop.f32.mrf.mxu0
      %v558 = vadd.f32 0.0, %v557
      %559 = vmatmul.f32.gmra.mxu0 %v376
      %v560 = vpop.f32.mrf.mxu0
      %v561 = vadd.f32 0.0, %v560
      %562 = vmatmul.f32.gmra.mxu0 %v379
      %v563 = vpop.f32.mrf.mxu0
      %v564 = vadd.f32 0.0, %v563
      %565 = vmatmul.f32.gmra.mxu0 %v382
      %v566 = vpop.f32.mrf.mxu0
      %v567 = vadd.f32 0.0, %v566
      %568 = vmatmul.f32.gmra.mxu0 %v385
      %v569 = vpop.f32.mrf.mxu0
      %v570 = vadd.f32 0.0, %v569
      %571 = vmatmul.f32.gmra.mxu0 %v388
      %v572 = vpop.f32.mrf.mxu0
      %v573 = vadd.f32 0.0, %v572
      %574 = vmatmul.f32.gmra.mxu0 %v391
      %v575 = vpop.f32.mrf.mxu0
      %v576 = vadd.f32 0.0, %v575
      %577 = vmatmul.f32.gmra.mxu0 %v394
      %v578 = vpop.f32.mrf.mxu0
      %v579 = vadd.f32 0.0, %v578
      %580 = vmatmul.f32.gmra.mxu0 %v397
      %v581 = vpop.f32.mrf.mxu0
      %v582 = vadd.f32 0.0, %v581
      %583 = vdwg.mxu0
      %v585 = vsel %vm326, %v261, 0
      %v588 = vsel %vm326, %v262, 0
      %v591 = vsel %vm326, %v263, 0
      %v594 = vsel %vm326, %v264, 0
      %v597 = vsel %vm326, %v265, 0
      %v600 = vsel %vm326, %v266, 0
      %v603 = vsel %vm326, %v267, 0
      %v606 = vsel %vm326, %v268, 0
      %v609 = vsel %vm326, %v269, 0
      %v612 = vsel %vm326, %v270, 0
      %v615 = vsel %vm326, %v271, 0
      %v618 = vsel %vm326, %v272, 0
      %v621 = vsel %vm326, %v273, 0
      %v624 = vsel %vm326, %v274, 0
      %v627 = vsel %vm326, %v275, 0
      %v630 = vsel %vm326, %v276, 0
      %v633 = vsel %vm326, %v277, 0
      %v636 = vsel %vm326, %v278, 0
      %v639 = vsel %vm326, %v279, 0
      %v642 = vsel %vm326, %v280, 0
      %v645 = vsel %vm326, %v281, 0
      %v648 = vsel %vm326, %v282, 0
      %v651 = vsel %vm326, %v283, 0
      %v654 = vsel %vm326, %v284, 0
      %v657 = vsel %vm399, %v291, 0
      %v660 = vsel %vm399, %v292, 0
      %662 = vmatpush.msra.mxu0 0.0
      %663 = vmatpush.msra.mxu0 0.0
      %664 = vmatpush.msra.mxu0 0.0
      %665 = vmatpush.msra.mxu0 0.0
      %666 = vmatpush.msra.mxu0 0.0
      %667 = vmatpush.msra.mxu0 0.0
      %668 = vmatpush.msra.mxu0 0.0
      %669 = vmatpush.msra.mxu0 0.0
      %670 = vmatpush.msra.mxu0 0.0
      %671 = vmatpush.msra.mxu0 0.0
      %672 = vmatpush.msra.mxu0 0.0
      %673 = vmatpush.msra.mxu0 0.0
      %674 = vmatpush.msra.mxu0 %v657
      %675 = vmatpush.msra.mxu0 %v289
      %676 = vmatpush.msra.mxu0 %v287
      %677 = vmatpush.msra.mxu0 %v285
      %678 = vmatmul.f32.gmra.mxu0 %v585
      %v679 = vpop.f32.mrf.mxu0
      %v680 = vadd.f32 %v424, %v679
      %681 = vmatmul.f32.gmra.mxu0 %v588
      %v682 = vpop.f32.mrf.mxu0
      %v683 = vadd.f32 %v427, %v682
      %684 = vmatmul.f32.gmra.mxu0 %v591
      %v685 = vpop.f32.mrf.mxu0
      %v686 = vadd.f32 %v430, %v685
      %687 = vmatmul.f32.gmra.mxu0 %v594
      %v688 = vpop.f32.mrf.mxu0
      %v689 = vadd.f32 %v433, %v688
      %690 = vmatmul.f32.gmra.mxu0 %v597
      %v691 = vpop.f32.mrf.mxu0
      %v692 = vadd.f32 %v436, %v691
      %693 = vmatmul.f32.gmra.mxu0 %v600
      %v694 = vpop.f32.mrf.mxu0
      %v695 = vadd.f32 %v439, %v694
      %696 = vmatmul.f32.gmra.mxu0 %v603
      %v697 = vpop.f32.mrf.mxu0
      %v698 = vadd.f32 %v442, %v697
      %699 = vmatmul.f32.gmra.mxu0 %v606
      %v700 = vpop.f32.mrf.mxu0
      %v701 = vadd.f32 %v445, %v700
      %702 = vmatmul.f32.gmra.mxu0 %v609
      %v703 = vpop.f32.mrf.mxu0
      %v704 = vadd.f32 %v448, %v703
      %705 = vmatmul.f32.gmra.mxu0 %v612
      %v706 = vpop.f32.mrf.mxu0
      %v707 = vadd.f32 %v451, %v706
      %708 = vmatmul.f32.gmra.mxu0 %v615
      %v709 = vpop.f32.mrf.mxu0
      %v710 = vadd.f32 %v454, %v709
      %711 = vmatmul.f32.gmra.mxu0 %v618
      %v712 = vpop.f32.mrf.mxu0
      %v713 = vadd.f32 %v457, %v712
      %714 = vmatmul.f32.gmra.mxu0 %v621
      %v715 = vpop.f32.mrf.mxu0
      %v716 = vadd.f32 %v460, %v715
      %717 = vmatmul.f32.gmra.mxu0 %v624
      %v718 = vpop.f32.mrf.mxu0
      %v719 = vadd.f32 %v463, %v718
      %720 = vmatmul.f32.gmra.mxu0 %v627
      %v721 = vpop.f32.mrf.mxu0
      %v722 = vadd.f32 %v466, %v721
      %723 = vmatmul.f32.gmra.mxu0 %v630
      %v724 = vpop.f32.mrf.mxu0
      %v725 = vadd.f32 %v469, %v724
      %726 = vmatmul.f32.gmra.mxu0 %v633
      %v727 = vpop.f32.mrf.mxu0
      %v728 = vadd.f32 %v472, %v727
      %729 = vmatmul.f32.gmra.mxu0 %v636
      %v730 = vpop.f32.mrf.mxu0
      %v731 = vadd.f32 %v475, %v730
      %732 = vmatmul.f32.gmra.mxu0 %v639
      %v733 = vpop.f32.mrf.mxu0
      %v734 = vadd.f32 %v478, %v733
      %735 = vmatmul.f32.gmra.mxu0 %v642
      %v736 = vpop.f32.mrf.mxu0
      %v737 = vadd.f32 %v481, %v736
      %738 = vmatmul.f32.gmra.mxu0 %v645
      %v739 = vpop.f32.mrf.mxu0
      %v740 = vadd.f32 %v484, %v739
      %741 = vmatmul.f32.gmra.mxu0 %v648
      %v742 = vpop.f32.mrf.mxu0
      %v743 = vadd.f32 %v487, %v742
      %744 = vmatmul.f32.gmra.mxu0 %v651
      %v745 = vpop.f32.mrf.mxu0
      %v746 = vadd.f32 %v490, %v745
      %747 = vmatmul.f32.gmra.mxu0 %v654
      %v748 = vpop.f32.mrf.mxu0
      %v749 = vadd.f32 %v493, %v748
      %750 = vdwg.mxu0
      %751 = vmatpush.msra.mxu0 0.0
      %752 = vmatpush.msra.mxu0 0.0
      %753 = vmatpush.msra.mxu0 0.0
      %754 = vmatpush.msra.mxu0 0.0
      %755 = vmatpush.msra.mxu0 0.0
      %756 = vmatpush.msra.mxu0 0.0
      %757 = vmatpush.msra.mxu0 0.0
      %758 = vmatpush.msra.mxu0 0.0
      %759 = vmatpush.msra.mxu0 0.0
      %760 = vmatpush.msra.mxu0 0.0
      %761 = vmatpush.msra.mxu0 0.0
      %762 = vmatpush.msra.mxu0 0.0
      %763 = vmatpush.msra.mxu0 %v660
      %764 = vmatpush.msra.mxu0 %v290
      %765 = vmatpush.msra.mxu0 %v288
      %766 = vmatpush.msra.mxu0 %v286
      %767 = vmatmul.f32.gmra.mxu0 %v585
      %v768 = vpop.f32.mrf.mxu0
      %v769 = vadd.f32 %v513, %v768
      %770 = vmatmul.f32.gmra.mxu0 %v588
      %v771 = vpop.f32.mrf.mxu0
      %v772 = vadd.f32 %v516, %v771
      %773 = vmatmul.f32.gmra.mxu0 %v591
      %v774 = vpop.f32.mrf.mxu0
      %v775 = vadd.f32 %v519, %v774
      %776 = vmatmul.f32.gmra.mxu0 %v594
      %v777 = vpop.f32.mrf.mxu0
      %v778 = vadd.f32 %v522, %v777
      %779 = vmatmul.f32.gmra.mxu0 %v597
      %v780 = vpop.f32.mrf.mxu0
      %v781 = vadd.f32 %v525, %v780
      %782 = vmatmul.f32.gmra.mxu0 %v600
      %v783 = vpop.f32.mrf.mxu0
      %v784 = vadd.f32 %v528, %v783
      %785 = vmatmul.f32.gmra.mxu0 %v603
      %v786 = vpop.f32.mrf.mxu0
      %v787 = vadd.f32 %v531, %v786
      %788 = vmatmul.f32.gmra.mxu0 %v606
      %v789 = vpop.f32.mrf.mxu0
      %v790 = vadd.f32 %v534, %v789
      %791 = vmatmul.f32.gmra.mxu0 %v609
      %v792 = vpop.f32.mrf.mxu0
      %v793 = vadd.f32 %v537, %v792
      %794 = vmatmul.f32.gmra.mxu0 %v612
      %v795 = vpop.f32.mrf.mxu0
      %v796 = vadd.f32 %v540, %v795
      %797 = vmatmul.f32.gmra.mxu0 %v615
      %v798 = vpop.f32.mrf.mxu0
      %v799 = vadd.f32 %v543, %v798
      %800 = vmatmul.f32.gmra.mxu0 %v618
      %v801 = vpop.f32.mrf.mxu0
      %v802 = vadd.f32 %v546, %v801
      %803 = vmatmul.f32.gmra.mxu0 %v621
      %v804 = vpop.f32.mrf.mxu0
      %v805 = vadd.f32 %v549, %v804
      %806 = vmatmul.f32.gmra.mxu0 %v624
      %v807 = vpop.f32.mrf.mxu0
      %v808 = vadd.f32 %v552, %v807
      %809 = vmatmul.f32.gmra.mxu0 %v627
      %v810 = vpop.f32.mrf.mxu0
      %v811 = vadd.f32 %v555, %v810
      %812 = vmatmul.f32.gmra.mxu0 %v630
      %v813 = vpop.f32.mrf.mxu0
      %v814 = vadd.f32 %v558, %v813
      %815 = vmatmul.f32.gmra.mxu0 %v633
      %v816 = vpop.f32.mrf.mxu0
      %v817 = vadd.f32 %v561, %v816
      %818 = vmatmul.f32.gmra.mxu0 %v636
      %v819 = vpop.f32.mrf.mxu0
      %v820 = vadd.f32 %v564, %v819
      %821 = vmatmul.f32.gmra.mxu0 %v639
      %v822 = vpop.f32.mrf.mxu0
      %v823 = vadd.f32 %v567, %v822
      %824 = vmatmul.f32.gmra.mxu0 %v642
      %v825 = vpop.f32.mrf.mxu0
      %v826 = vadd.f32 %v570, %v825
      %827 = vmatmul.f32.gmra.mxu0 %v645
      %v828 = vpop.f32.mrf.mxu0
      %v829 = vadd.f32 %v573, %v828
      %830 = vmatmul.f32.gmra.mxu0 %v648
      %v831 = vpop.f32.mrf.mxu0
      %v832 = vadd.f32 %v576, %v831
      %833 = vmatmul.f32.gmra.mxu0 %v651
      %v834 = vpop.f32.mrf.mxu0
      %v835 = vadd.f32 %v579, %v834
      %836 = vmatmul.f32.gmra.mxu0 %v654
      %v837 = vpop.f32.mrf.mxu0
      %v838 = vadd.f32 %v582, %v837
      %839 = vdwg.mxu0
      %v840 = vld [vmem:[%s251 + $0x2] sm:$0xff]
      %v841 = vld [vmem:[%s251 + $0xa] sm:$0xff]
      %v842 = vld [vmem:[%s251 + $0x12] sm:$0xff]
      %v843 = vld [vmem:[%s251 + $0x22] sm:$0xff]
      %v844 = vld [vmem:[%s251 + $0x2a] sm:$0xff]
      %v845 = vld [vmem:[%s251 + $0x32] sm:$0xff]
      %v846 = vld [vmem:[%s251 + $0x42] sm:$0xff]
      %v847 = vld [vmem:[%s251 + $0x4a] sm:$0xff]
      %v848 = vld [vmem:[%s251 + $0x52] sm:$0xff]
      %v849 = vld [vmem:[%s251 + $0x62] sm:$0xff]
      %v850 = vld [vmem:[%s251 + $0x6a] sm:$0xff]
      %v851 = vld [vmem:[%s251 + $0x72] sm:$0xff]
      %v852 = vld [vmem:[%s251 + $0x82] sm:$0xff]
      %v853 = vld [vmem:[%s251 + $0x8a] sm:$0xff]
      %v854 = vld [vmem:[%s251 + $0x92] sm:$0xff]
      %v855 = vld [vmem:[%s251 + $0xa2] sm:$0xff]
      %v856 = vld [vmem:[%s251 + $0xaa] sm:$0xff]
      %v857 = vld [vmem:[%s251 + $0xb2] sm:$0xff]
      %v858 = vld [vmem:[%s251 + $0xc2] sm:$0xff]
      %v859 = vld [vmem:[%s251 + $0xca] sm:$0xff]
      %v860 = vld [vmem:[%s251 + $0xd2] sm:$0xff]
      %v861 = vld [vmem:[%s251 + $0xe2] sm:$0xff]
      %v862 = vld [vmem:[%s251 + $0xea] sm:$0xff]
      %v863 = vld [vmem:[%s251 + $0xf2] sm:$0xff]
      %s864 = scalar_lea.vmem %s2, 128
      %v865 = vld [vmem:[%s864] sm:$0xff]
      %v866 = vld [vmem:[%s864 + $0x8] sm:$0xff]
      %v867 = vld [vmem:[%s864 + $0x10] sm:$0xff]
      %v868 = vld [vmem:[%s864 + $0x18] sm:$0xff]
      %v869 = vld [vmem:[%s864 + $0x20] sm:$0xff]
      %v870 = vld [vmem:[%s864 + $0x28] sm:$0xff]
      %v871 = vld [vmem:[%s864 + $0x30] sm:$0xf]
      %v872 = vld [vmem:[%s864 + $0x38] sm:$0xf]
      %v874 = vsel %vm326, %v840, 0
      %v877 = vsel %vm326, %v841, 0
      %v880 = vsel %vm326, %v842, 0
      %v883 = vsel %vm326, %v843, 0
      %v886 = vsel %vm326, %v844, 0
      %v889 = vsel %vm326, %v845, 0
      %v892 = vsel %vm326, %v846, 0
      %v895 = vsel %vm326, %v847, 0
      %v898 = vsel %vm326, %v848, 0
      %v901 = vsel %vm326, %v849, 0
      %v904 = vsel %vm326, %v850, 0
      %v907 = vsel %vm326, %v851, 0
      %v910 = vsel %vm326, %v852, 0
      %v913 = vsel %vm326, %v853, 0
      %v916 = vsel %vm326, %v854, 0
      %v919 = vsel %vm326, %v855, 0
      %v922 = vsel %vm326, %v856, 0
      %v925 = vsel %vm326, %v857, 0
      %v928 = vsel %vm326, %v858, 0
      %v931 = vsel %vm326, %v859, 0
      %v934 = vsel %vm326, %v860, 0
      %v937 = vsel %vm326, %v861, 0
      %v940 = vsel %vm326, %v862, 0
      %v943 = vsel %vm326, %v863, 0
      %v946 = vsel %vm399, %v871, 0
      %v949 = vsel %vm399, %v872, 0
      %951 = vmatpush.msra.mxu0 0.0
      %952 = vmatpush.msra.mxu0 0.0
      %953 = vmatpush.msra.mxu0 0.0
      %954 = vmatpush.msra.mxu0 0.0
      %955 = vmatpush.msra.mxu0 0.0
      %956 = vmatpush.msra.mxu0 0.0
      %957 = vmatpush.msra.mxu0 0.0
      %958 = vmatpush.msra.mxu0 0.0
      %959 = vmatpush.msra.mxu0 0.0
      %960 = vmatpush.msra.mxu0 0.0
      %961 = vmatpush.msra.mxu0 0.0
      %962 = vmatpush.msra.mxu0 0.0
      %963 = vmatpush.msra.mxu0 %v946
      %964 = vmatpush.msra.mxu0 %v869
      %965 = vmatpush.msra.mxu0 %v867
      %966 = vmatpush.msra.mxu0 %v865
      %967 = vmatmul.f32.gmra.mxu0 %v874
      %v968 = vpop.f32.mrf.mxu0
      %v969 = vadd.f32 0.0, %v968
      %970 = vmatmul.f32.gmra.mxu0 %v877
      %v971 = vpop.f32.mrf.mxu0
      %v972 = vadd.f32 0.0, %v971
      %973 = vmatmul.f32.gmra.mxu0 %v880
      %v974 = vpop.f32.mrf.mxu0
      %v975 = vadd.f32 0.0, %v974
      %976 = vmatmul.f32.gmra.mxu0 %v883
      %v977 = vpop.f32.mrf.mxu0
      %v978 = vadd.f32 0.0, %v977
      %979 = vmatmul.f32.gmra.mxu0 %v886
      %v980 = vpop.f32.mrf.mxu0
      %v981 = vadd.f32 0.0, %v980
      %982 = vmatmul.f32.gmra.mxu0 %v889
      %v983 = vpop.f32.mrf.mxu0
      %v984 = vadd.f32 0.0, %v983
      %985 = vmatmul.f32.gmra.mxu0 %v892
      %v986 = vpop.f32.mrf.mxu0
      %v987 = vadd.f32 0.0, %v986
      %988 = vmatmul.f32.gmra.mxu0 %v895
      %v989 = vpop.f32.mrf.mxu0
      %v990 = vadd.f32 0.0, %v989
      %991 = vmatmul.f32.gmra.mxu0 %v898
      %v992 = vpop.f32.mrf.mxu0
      %v993 = vadd.f32 0.0, %v992
      %994 = vmatmul.f32.gmra.mxu0 %v901
      %v995 = vpop.f32.mrf.mxu0
      %v996 = vadd.f32 0.0, %v995
      %997 = vmatmul.f32.gmra.mxu0 %v904
      %v998 = vpop.f32.mrf.mxu0
      %v999 = vadd.f32 0.0, %v998
      %1000 = vmatmul.f32.gmra.mxu0 %v907
      %v1001 = vpop.f32.mrf.mxu0
      %v1002 = vadd.f32 0.0, %v1001
      %1003 = vmatmul.f32.gmra.mxu0 %v910
      %v1004 = vpop.f32.mrf.mxu0
      %v1005 = vadd.f32 0.0, %v1004
      %1006 = vmatmul.f32.gmra.mxu0 %v913
      %v1007 = vpop.f32.mrf.mxu0
      %v1008 = vadd.f32 0.0, %v1007
      %1009 = vmatmul.f32.gmra.mxu0 %v916
      %v1010 = vpop.f32.mrf.mxu0
      %v1011 = vadd.f32 0.0, %v1010
      %1012 = vmatmul.f32.gmra.mxu0 %v919
      %v1013 = vpop.f32.mrf.mxu0
      %v1014 = vadd.f32 0.0, %v1013
      %1015 = vmatmul.f32.gmra.mxu0 %v922
      %v1016 = vpop.f32.mrf.mxu0
      %v1017 = vadd.f32 0.0, %v1016
      %1018 = vmatmul.f32.gmra.mxu0 %v925
      %v1019 = vpop.f32.mrf.mxu0
      %v1020 = vadd.f32 0.0, %v1019
      %1021 = vmatmul.f32.gmra.mxu0 %v928
      %v1022 = vpop.f32.mrf.mxu0
      %v1023 = vadd.f32 0.0, %v1022
      %1024 = vmatmul.f32.gmra.mxu0 %v931
      %v1025 = vpop.f32.mrf.mxu0
      %v1026 = vadd.f32 0.0, %v1025
      %1027 = vmatmul.f32.gmra.mxu0 %v934
      %v1028 = vpop.f32.mrf.mxu0
      %v1029 = vadd.f32 0.0, %v1028
      %1030 = vmatmul.f32.gmra.mxu0 %v937
      %v1031 = vpop.f32.mrf.mxu0
      %v1032 = vadd.f32 0.0, %v1031
      %1033 = vmatmul.f32.gmra.mxu0 %v940
      %v1034 = vpop.f32.mrf.mxu0
      %v1035 = vadd.f32 0.0, %v1034
      %1036 = vmatmul.f32.gmra.mxu0 %v943
      %v1037 = vpop.f32.mrf.mxu0
      %v1038 = vadd.f32 0.0, %v1037
      %1039 = vdwg.mxu0
      %1040 = vmatpush.msra.mxu0 0.0
      %1041 = vmatpush.msra.mxu0 0.0
      %1042 = vmatpush.msra.mxu0 0.0
      %1043 = vmatpush.msra.mxu0 0.0
      %1044 = vmatpush.msra.mxu0 0.0
      %1045 = vmatpush.msra.mxu0 0.0
      %1046 = vmatpush.msra.mxu0 0.0
      %1047 = vmatpush.msra.mxu0 0.0
      %1048 = vmatpush.msra.mxu0 0.0
      %1049 = vmatpush.msra.mxu0 0.0
      %1050 = vmatpush.msra.mxu0 0.0
      %1051 = vmatpush.msra.mxu0 0.0
      %1052 = vmatpush.msra.mxu0 %v949
      %1053 = vmatpush.msra.mxu0 %v870
      %1054 = vmatpush.msra.mxu0 %v868
      %1055 = vmatpush.msra.mxu0 %v866
      %1056 = vmatmul.f32.gmra.mxu0 %v874
      %v1057 = vpop.f32.mrf.mxu0
      %v1058 = vadd.f32 0.0, %v1057
      %1059 = vmatmul.f32.gmra.mxu0 %v877
      %v1060 = vpop.f32.mrf.mxu0
      %v1061 = vadd.f32 0.0, %v1060
      %1062 = vmatmul.f32.gmra.mxu0 %v880
      %v1063 = vpop.f32.mrf.mxu0
      %v1064 = vadd.f32 0.0, %v1063
      %1065 = vmatmul.f32.gmra.mxu0 %v883
      %v1066 = vpop.f32.mrf.mxu0
      %v1067 = vadd.f32 0.0, %v1066
      %1068 = vmatmul.f32.gmra.mxu0 %v886
      %v1069 = vpop.f32.mrf.mxu0
      %v1070 = vadd.f32 0.0, %v1069
      %1071 = vmatmul.f32.gmra.mxu0 %v889
      %v1072 = vpop.f32.mrf.mxu0
      %v1073 = vadd.f32 0.0, %v1072
      %1074 = vmatmul.f32.gmra.mxu0 %v892
      %v1075 = vpop.f32.mrf.mxu0
      %v1076 = vadd.f32 0.0, %v1075
      %1077 = vmatmul.f32.gmra.mxu0 %v895
      %v1078 = vpop.f32.mrf.mxu0
      %v1079 = vadd.f32 0.0, %v1078
      %1080 = vmatmul.f32.gmra.mxu0 %v898
      %v1081 = vpop.f32.mrf.mxu0
      %v1082 = vadd.f32 0.0, %v1081
      %1083 = vmatmul.f32.gmra.mxu0 %v901
      %v1084 = vpop.f32.mrf.mxu0
      %v1085 = vadd.f32 0.0, %v1084
      %1086 = vmatmul.f32.gmra.mxu0 %v904
      %v1087 = vpop.f32.mrf.mxu0
      %v1088 = vadd.f32 0.0, %v1087
      %1089 = vmatmul.f32.gmra.mxu0 %v907
      %v1090 = vpop.f32.mrf.mxu0
      %v1091 = vadd.f32 0.0, %v1090
      %1092 = vmatmul.f32.gmra.mxu0 %v910
      %v1093 = vpop.f32.mrf.mxu0
      %v1094 = vadd.f32 0.0, %v1093
      %1095 = vmatmul.f32.gmra.mxu0 %v913
      %v1096 = vpop.f32.mrf.mxu0
      %v1097 = vadd.f32 0.0, %v1096
      %1098 = vmatmul.f32.gmra.mxu0 %v916
      %v1099 = vpop.f32.mrf.mxu0
      %v1100 = vadd.f32 0.0, %v1099
      %1101 = vmatmul.f32.gmra.mxu0 %v919
      %v1102 = vpop.f32.mrf.mxu0
      %v1103 = vadd.f32 0.0, %v1102
      %1104 = vmatmul.f32.gmra.mxu0 %v922
      %v1105 = vpop.f32.mrf.mxu0
      %v1106 = vadd.f32 0.0, %v1105
      %1107 = vmatmul.f32.gmra.mxu0 %v925
      %v1108 = vpop.f32.mrf.mxu0
      %v1109 = vadd.f32 0.0, %v1108
      %1110 = vmatmul.f32.gmra.mxu0 %v928
      %v1111 = vpop.f32.mrf.mxu0
      %v1112 = vadd.f32 0.0, %v1111
      %1113 = vmatmul.f32.gmra.mxu0 %v931
      %v1114 = vpop.f32.mrf.mxu0
      %v1115 = vadd.f32 0.0, %v1114
      %1116 = vmatmul.f32.gmra.mxu0 %v934
      %v1117 = vpop.f32.mrf.mxu0
      %v1118 = vadd.f32 0.0, %v1117
      %1119 = vmatmul.f32.gmra.mxu0 %v937
      %v1120 = vpop.f32.mrf.mxu0
      %v1121 = vadd.f32 0.0, %v1120
      %1122 = vmatmul.f32.gmra.mxu0 %v940
      %v1123 = vpop.f32.mrf.mxu0
      %v1124 = vadd.f32 0.0, %v1123
      %1125 = vmatmul.f32.gmra.mxu0 %v943
      %v1126 = vpop.f32.mrf.mxu0
      %v1127 = vadd.f32 0.0, %v1126
      %1128 = vdwg.mxu0
      %v1129 = vadd.f32 %v680, %v969
      %v1130 = vadd.f32 %v769, %v1058
      %v1131 = vadd.f32 %v683, %v972
      %v1132 = vadd.f32 %v772, %v1061
      %v1133 = vadd.f32 %v686, %v975
      %v1134 = vadd.f32 %v775, %v1064
      %v1135 = vadd.f32 %v689, %v978
      %v1136 = vadd.f32 %v778, %v1067
      %v1137 = vadd.f32 %v692, %v981
      %v1138 = vadd.f32 %v781, %v1070
      %v1139 = vadd.f32 %v695, %v984
      %v1140 = vadd.f32 %v784, %v1073
      %v1141 = vadd.f32 %v698, %v987
      %v1142 = vadd.f32 %v787, %v1076
      %v1143 = vadd.f32 %v701, %v990
      %v1144 = vadd.f32 %v790, %v1079
      %v1145 = vadd.f32 %v704, %v993
      %v1146 = vadd.f32 %v793, %v1082
      %v1147 = vadd.f32 %v707, %v996
      %v1148 = vadd.f32 %v796, %v1085
      %v1149 = vadd.f32 %v710, %v999
      %v1150 = vadd.f32 %v799, %v1088
      %v1151 = vadd.f32 %v713, %v1002
      %v1152 = vadd.f32 %v802, %v1091
      %v1153 = vadd.f32 %v716, %v1005
      %v1154 = vadd.f32 %v805, %v1094
      %v1155 = vadd.f32 %v719, %v1008
      %v1156 = vadd.f32 %v808, %v1097
      %v1157 = vadd.f32 %v722, %v1011
      %v1158 = vadd.f32 %v811, %v1100
      %v1159 = vadd.f32 %v725, %v1014
      %v1160 = vadd.f32 %v814, %v1103
      %v1161 = vadd.f32 %v728, %v1017
      %v1162 = vadd.f32 %v817, %v1106
      %v1163 = vadd.f32 %v731, %v1020
      %v1164 = vadd.f32 %v820, %v1109
      %v1165 = vadd.f32 %v734, %v1023
      %v1166 = vadd.f32 %v823, %v1112
      %v1167 = vadd.f32 %v737, %v1026
      %v1168 = vadd.f32 %v826, %v1115
      %v1169 = vadd.f32 %v740, %v1029
      %v1170 = vadd.f32 %v829, %v1118
      %v1171 = vadd.f32 %v743, %v1032
      %v1172 = vadd.f32 %v832, %v1121
      %v1173 = vadd.f32 %v746, %v1035
      %v1174 = vadd.f32 %v835, %v1124
      %v1175 = vadd.f32 %v749, %v1038
      %v1176 = vadd.f32 %v838, %v1127
      %v1177 = vld [vmem:[%s251 + $0x3] sm:$0xff]
      %v1178 = vld [vmem:[%s251 + $0xb] sm:$0xff]
      %v1179 = vld [vmem:[%s251 + $0x13] sm:$0xff]
      %v1180 = vld [vmem:[%s251 + $0x23] sm:$0xff]
      %v1181 = vld [vmem:[%s251 + $0x2b] sm:$0xff]
      %v1182 = vld [vmem:[%s251 + $0x33] sm:$0xff]
      %v1183 = vld [vmem:[%s251 + $0x43] sm:$0xff]
      %v1184 = vld [vmem:[%s251 + $0x4b] sm:$0xff]
      %v1185 = vld [vmem:[%s251 + $0x53] sm:$0xff]
      %v1186 = vld [vmem:[%s251 + $0x63] sm:$0xff]
      %v1187 = vld [vmem:[%s251 + $0x6b] sm:$0xff]
      %v1188 = vld [vmem:[%s251 + $0x73] sm:$0xff]
      %v1189 = vld [vmem:[%s251 + $0x83] sm:$0xff]
      %v1190 = vld [vmem:[%s251 + $0x8b] sm:$0xff]
      %v1191 = vld [vmem:[%s251 + $0x93] sm:$0xff]
      %v1192 = vld [vmem:[%s251 + $0xa3] sm:$0xff]
      %v1193 = vld [vmem:[%s251 + $0xab] sm:$0xff]
      %v1194 = vld [vmem:[%s251 + $0xb3] sm:$0xff]
      %v1195 = vld [vmem:[%s251 + $0xc3] sm:$0xff]
      %v1196 = vld [vmem:[%s251 + $0xcb] sm:$0xff]
      %v1197 = vld [vmem:[%s251 + $0xd3] sm:$0xff]
      %v1198 = vld [vmem:[%s251 + $0xe3] sm:$0xff]
      %v1199 = vld [vmem:[%s251 + $0xeb] sm:$0xff]
      %v1200 = vld [vmem:[%s251 + $0xf3] sm:$0xff]
      %s1201 = scalar_lea.vmem %s2, 192
      %v1202 = vld [vmem:[%s1201] sm:$0xff]
      %v1203 = vld [vmem:[%s1201 + $0x8] sm:$0xff]
      %v1204 = vld [vmem:[%s1201 + $0x10] sm:$0xff]
      %v1205 = vld [vmem:[%s1201 + $0x18] sm:$0xff]
      %v1206 = vld [vmem:[%s1201 + $0x20] sm:$0xff]
      %v1207 = vld [vmem:[%s1201 + $0x28] sm:$0xff]
      %v1208 = vld [vmem:[%s1201 + $0x30] sm:$0xf]
      %v1209 = vld [vmem:[%s1201 + $0x38] sm:$0xf]
      %v1211 = vsel %vm326, %v1177, 0
      %v1214 = vsel %vm326, %v1178, 0
      %v1217 = vsel %vm326, %v1179, 0
      %v1220 = vsel %vm326, %v1180, 0
      %v1223 = vsel %vm326, %v1181, 0
      %v1226 = vsel %vm326, %v1182, 0
      %v1229 = vsel %vm326, %v1183, 0
      %v1232 = vsel %vm326, %v1184, 0
      %v1235 = vsel %vm326, %v1185, 0
      %v1238 = vsel %vm326, %v1186, 0
      %v1241 = vsel %vm326, %v1187, 0
      %v1244 = vsel %vm326, %v1188, 0
      %v1247 = vsel %vm326, %v1189, 0
      %v1250 = vsel %vm326, %v1190, 0
      %v1253 = vsel %vm326, %v1191, 0
      %v1256 = vsel %vm326, %v1192, 0
      %v1259 = vsel %vm326, %v1193, 0
      %v1262 = vsel %vm326, %v1194, 0
      %v1265 = vsel %vm326, %v1195, 0
      %v1268 = vsel %vm326, %v1196, 0
      %v1271 = vsel %vm326, %v1197, 0
      %v1274 = vsel %vm326, %v1198, 0
      %v1277 = vsel %vm326, %v1199, 0
      %v1280 = vsel %vm326, %v1200, 0
      %v1283 = vsel %vm399, %v1208, 0
      %v1286 = vsel %vm399, %v1209, 0
      %1288 = vmatpush.msra.mxu0 0.0
      %1289 = vmatpush.msra.mxu0 0.0
      %1290 = vmatpush.msra.mxu0 0.0
      %1291 = vmatpush.msra.mxu0 0.0
      %1292 = vmatpush.msra.mxu0 0.0
      %1293 = vmatpush.msra.mxu0 0.0
      %1294 = vmatpush.msra.mxu0 0.0
      %1295 = vmatpush.msra.mxu0 0.0
      %1296 = vmatpush.msra.mxu0 0.0
      %1297 = vmatpush.msra.mxu0 0.0
      %1298 = vmatpush.msra.mxu0 0.0
      %1299 = vmatpush.msra.mxu0 0.0
      %1300 = vmatpush.msra.mxu0 %v1283
      %1301 = vmatpush.msra.mxu0 %v1206
      %1302 = vmatpush.msra.mxu0 %v1204
      %1303 = vmatpush.msra.mxu0 %v1202
      %1304 = vmatmul.f32.gmra.mxu0 %v1211
      %v1305 = vpop.f32.mrf.mxu0
      %v1306 = vadd.f32 0.0, %v1305
      %1307 = vmatmul.f32.gmra.mxu0 %v1214
      %v1308 = vpop.f32.mrf.mxu0
      %v1309 = vadd.f32 0.0, %v1308
      %1310 = vmatmul.f32.gmra.mxu0 %v1217
      %v1311 = vpop.f32.mrf.mxu0
      %v1312 = vadd.f32 0.0, %v1311
      %1313 = vmatmul.f32.gmra.mxu0 %v1220
      %v1314 = vpop.f32.mrf.mxu0
      %v1315 = vadd.f32 0.0, %v1314
      %1316 = vmatmul.f32.gmra.mxu0 %v1223
      %v1317 = vpop.f32.mrf.mxu0
      %v1318 = vadd.f32 0.0, %v1317
      %1319 = vmatmul.f32.gmra.mxu0 %v1226
      %v1320 = vpop.f32.mrf.mxu0
      %v1321 = vadd.f32 0.0, %v1320
      %1322 = vmatmul.f32.gmra.mxu0 %v1229
      %v1323 = vpop.f32.mrf.mxu0
      %v1324 = vadd.f32 0.0, %v1323
      %1325 = vmatmul.f32.gmra.mxu0 %v1232
      %v1326 = vpop.f32.mrf.mxu0
      %v1327 = vadd.f32 0.0, %v1326
      %1328 = vmatmul.f32.gmra.mxu0 %v1235
      %v1329 = vpop.f32.mrf.mxu0
      %v1330 = vadd.f32 0.0, %v1329
      %1331 = vmatmul.f32.gmra.mxu0 %v1238
      %v1332 = vpop.f32.mrf.mxu0
      %v1333 = vadd.f32 0.0, %v1332
      %1334 = vmatmul.f32.gmra.mxu0 %v1241
      %v1335 = vpop.f32.mrf.mxu0
      %v1336 = vadd.f32 0.0, %v1335
      %1337 = vmatmul.f32.gmra.mxu0 %v1244
      %v1338 = vpop.f32.mrf.mxu0
      %v1339 = vadd.f32 0.0, %v1338
      %1340 = vmatmul.f32.gmra.mxu0 %v1247
      %v1341 = vpop.f32.mrf.mxu0
      %v1342 = vadd.f32 0.0, %v1341
      %1343 = vmatmul.f32.gmra.mxu0 %v1250
      %v1344 = vpop.f32.mrf.mxu0
      %v1345 = vadd.f32 0.0, %v1344
      %1346 = vmatmul.f32.gmra.mxu0 %v1253
      %v1347 = vpop.f32.mrf.mxu0
      %v1348 = vadd.f32 0.0, %v1347
      %1349 = vmatmul.f32.gmra.mxu0 %v1256
      %v1350 = vpop.f32.mrf.mxu0
      %v1351 = vadd.f32 0.0, %v1350
      %1352 = vmatmul.f32.gmra.mxu0 %v1259
      %v1353 = vpop.f32.mrf.mxu0
      %v1354 = vadd.f32 0.0, %v1353
      %1355 = vmatmul.f32.gmra.mxu0 %v1262
      %v1356 = vpop.f32.mrf.mxu0
      %v1357 = vadd.f32 0.0, %v1356
      %1358 = vmatmul.f32.gmra.mxu0 %v1265
      %v1359 = vpop.f32.mrf.mxu0
      %v1360 = vadd.f32 0.0, %v1359
      %1361 = vmatmul.f32.gmra.mxu0 %v1268
      %v1362 = vpop.f32.mrf.mxu0
      %v1363 = vadd.f32 0.0, %v1362
      %1364 = vmatmul.f32.gmra.mxu0 %v1271
      %v1365 = vpop.f32.mrf.mxu0
      %v1366 = vadd.f32 0.0, %v1365
      %1367 = vmatmul.f32.gmra.mxu0 %v1274
      %v1368 = vpop.f32.mrf.mxu0
      %v1369 = vadd.f32 0.0, %v1368
      %1370 = vmatmul.f32.gmra.mxu0 %v1277
      %v1371 = vpop.f32.mrf.mxu0
      %v1372 = vadd.f32 0.0, %v1371
      %1373 = vmatmul.f32.gmra.mxu0 %v1280
      %v1374 = vpop.f32.mrf.mxu0
      %v1375 = vadd.f32 0.0, %v1374
      %1376 = vdwg.mxu0
      %1377 = vmatpush.msra.mxu0 0.0
      %1378 = vmatpush.msra.mxu0 0.0
      %1379 = vmatpush.msra.mxu0 0.0
      %1380 = vmatpush.msra.mxu0 0.0
      %1381 = vmatpush.msra.mxu0 0.0
      %1382 = vmatpush.msra.mxu0 0.0
      %1383 = vmatpush.msra.mxu0 0.0
      %1384 = vmatpush.msra.mxu0 0.0
      %1385 = vmatpush.msra.mxu0 0.0
      %1386 = vmatpush.msra.mxu0 0.0
      %1387 = vmatpush.msra.mxu0 0.0
      %1388 = vmatpush.msra.mxu0 0.0
      %1389 = vmatpush.msra.mxu0 %v1286
      %1390 = vmatpush.msra.mxu0 %v1207
      %1391 = vmatpush.msra.mxu0 %v1205
      %1392 = vmatpush.msra.mxu0 %v1203
      %1393 = vmatmul.f32.gmra.mxu0 %v1211
      %v1394 = vpop.f32.mrf.mxu0
      %v1395 = vadd.f32 0.0, %v1394
      %1396 = vmatmul.f32.gmra.mxu0 %v1214
      %v1397 = vpop.f32.mrf.mxu0
      %v1398 = vadd.f32 0.0, %v1397
      %1399 = vmatmul.f32.gmra.mxu0 %v1217
      %v1400 = vpop.f32.mrf.mxu0
      %v1401 = vadd.f32 0.0, %v1400
      %1402 = vmatmul.f32.gmra.mxu0 %v1220
      %v1403 = vpop.f32.mrf.mxu0
      %v1404 = vadd.f32 0.0, %v1403
      %1405 = vmatmul.f32.gmra.mxu0 %v1223
      %v1406 = vpop.f32.mrf.mxu0
      %v1407 = vadd.f32 0.0, %v1406
      %1408 = vmatmul.f32.gmra.mxu0 %v1226
      %v1409 = vpop.f32.mrf.mxu0
      %v1410 = vadd.f32 0.0, %v1409
      %1411 = vmatmul.f32.gmra.mxu0 %v1229
      %v1412 = vpop.f32.mrf.mxu0
      %v1413 = vadd.f32 0.0, %v1412
      %1414 = vmatmul.f32.gmra.mxu0 %v1232
      %v1415 = vpop.f32.mrf.mxu0
      %v1416 = vadd.f32 0.0, %v1415
      %1417 = vmatmul.f32.gmra.mxu0 %v1235
      %v1418 = vpop.f32.mrf.mxu0
      %v1419 = vadd.f32 0.0, %v1418
      %1420 = vmatmul.f32.gmra.mxu0 %v1238
      %v1421 = vpop.f32.mrf.mxu0
      %v1422 = vadd.f32 0.0, %v1421
      %1423 = vmatmul.f32.gmra.mxu0 %v1241
      %v1424 = vpop.f32.mrf.mxu0
      %v1425 = vadd.f32 0.0, %v1424
      %1426 = vmatmul.f32.gmra.mxu0 %v1244
      %v1427 = vpop.f32.mrf.mxu0
      %v1428 = vadd.f32 0.0, %v1427
      %1429 = vmatmul.f32.gmra.mxu0 %v1247
      %v1430 = vpop.f32.mrf.mxu0
      %v1431 = vadd.f32 0.0, %v1430
      %1432 = vmatmul.f32.gmra.mxu0 %v1250
      %v1433 = vpop.f32.mrf.mxu0
      %v1434 = vadd.f32 0.0, %v1433
      %1435 = vmatmul.f32.gmra.mxu0 %v1253
      %v1436 = vpop.f32.mrf.mxu0
      %v1437 = vadd.f32 0.0, %v1436
      %1438 = vmatmul.f32.gmra.mxu0 %v1256
      %v1439 = vpop.f32.mrf.mxu0
      %v1440 = vadd.f32 0.0, %v1439
      %1441 = vmatmul.f32.gmra.mxu0 %v1259
      %v1442 = vpop.f32.mrf.mxu0
      %v1443 = vadd.f32 0.0, %v1442
      %1444 = vmatmul.f32.gmra.mxu0 %v1262
      %v1445 = vpop.f32.mrf.mxu0
      %v1446 = vadd.f32 0.0, %v1445
      %1447 = vmatmul.f32.gmra.mxu0 %v1265
      %v1448 = vpop.f32.mrf.mxu0
      %v1449 = vadd.f32 0.0, %v1448
      %1450 = vmatmul.f32.gmra.mxu0 %v1268
      %v1451 = vpop.f32.mrf.mxu0
      %v1452 = vadd.f32 0.0, %v1451
      %1453 = vmatmul.f32.gmra.mxu0 %v1271
      %v1454 = vpop.f32.mrf.mxu0
      %v1455 = vadd.f32 0.0, %v1454
      %1456 = vmatmul.f32.gmra.mxu0 %v1274
      %v1457 = vpop.f32.mrf.mxu0
      %v1458 = vadd.f32 0.0, %v1457
      %1459 = vmatmul.f32.gmra.mxu0 %v1277
      %v1460 = vpop.f32.mrf.mxu0
      %v1461 = vadd.f32 0.0, %v1460
      %1462 = vmatmul.f32.gmra.mxu0 %v1280
      %v1463 = vpop.f32.mrf.mxu0
      %v1464 = vadd.f32 0.0, %v1463
      %1465 = vdwg.mxu0
      %v1466 = vadd.f32 %v1129, %v1306
      %v1467 = vadd.f32 %v1130, %v1395
      %v1468 = vadd.f32 %v1131, %v1309
      %v1469 = vadd.f32 %v1132, %v1398
      %v1470 = vadd.f32 %v1133, %v1312
      %v1471 = vadd.f32 %v1134, %v1401
      %v1472 = vadd.f32 %v1135, %v1315
      %v1473 = vadd.f32 %v1136, %v1404
      %v1474 = vadd.f32 %v1137, %v1318
      %v1475 = vadd.f32 %v1138, %v1407
      %v1476 = vadd.f32 %v1139, %v1321
      %v1477 = vadd.f32 %v1140, %v1410
      %v1478 = vadd.f32 %v1141, %v1324
      %v1479 = vadd.f32 %v1142, %v1413
      %v1480 = vadd.f32 %v1143, %v1327
      %v1481 = vadd.f32 %v1144, %v1416
      %v1482 = vadd.f32 %v1145, %v1330
      %v1483 = vadd.f32 %v1146, %v1419
      %v1484 = vadd.f32 %v1147, %v1333
      %v1485 = vadd.f32 %v1148, %v1422
      %v1486 = vadd.f32 %v1149, %v1336
      %v1487 = vadd.f32 %v1150, %v1425
      %v1488 = vadd.f32 %v1151, %v1339
      %v1489 = vadd.f32 %v1152, %v1428
      %v1490 = vadd.f32 %v1153, %v1342
      %v1491 = vadd.f32 %v1154, %v1431
      %v1492 = vadd.f32 %v1155, %v1345
      %v1493 = vadd.f32 %v1156, %v1434
      %v1494 = vadd.f32 %v1157, %v1348
      %v1495 = vadd.f32 %v1158, %v1437
      %v1496 = vadd.f32 %v1159, %v1351
      %v1497 = vadd.f32 %v1160, %v1440
      %v1498 = vadd.f32 %v1161, %v1354
      %v1499 = vadd.f32 %v1162, %v1443
      %v1500 = vadd.f32 %v1163, %v1357
      %v1501 = vadd.f32 %v1164, %v1446
      %v1502 = vadd.f32 %v1165, %v1360
      %v1503 = vadd.f32 %v1166, %v1449
      %v1504 = vadd.f32 %v1167, %v1363
      %v1505 = vadd.f32 %v1168, %v1452
      %v1506 = vadd.f32 %v1169, %v1366
      %v1507 = vadd.f32 %v1170, %v1455
      %v1508 = vadd.f32 %v1171, %v1369
      %v1509 = vadd.f32 %v1172, %v1458
      %v1510 = vadd.f32 %v1173, %v1372
      %v1511 = vadd.f32 %v1174, %v1461
      %v1512 = vadd.f32 %v1175, %v1375
      %v1513 = vadd.f32 %v1176, %v1464
      %v1514 = vld [vmem:[%s251 + $0x4] sm:$0xff]
      %v1515 = vld [vmem:[%s251 + $0xc] sm:$0xff]
      %v1516 = vld [vmem:[%s251 + $0x14] sm:$0xff]
      %v1517 = vld [vmem:[%s251 + $0x24] sm:$0xff]
      %v1518 = vld [vmem:[%s251 + $0x2c] sm:$0xff]
      %v1519 = vld [vmem:[%s251 + $0x34] sm:$0xff]
      %v1520 = vld [vmem:[%s251 + $0x44] sm:$0xff]
      %v1521 = vld [vmem:[%s251 + $0x4c] sm:$0xff]
      %v1522 = vld [vmem:[%s251 + $0x54] sm:$0xff]
      %v1523 = vld [vmem:[%s251 + $0x64] sm:$0xff]
      %v1524 = vld [vmem:[%s251 + $0x6c] sm:$0xff]
      %v1525 = vld [vmem:[%s251 + $0x74] sm:$0xff]
      %v1526 = vld [vmem:[%s251 + $0x84] sm:$0xff]
      %v1527 = vld [vmem:[%s251 + $0x8c] sm:$0xff]
      %v1528 = vld [vmem:[%s251 + $0x94] sm:$0xff]
      %v1529 = vld [vmem:[%s251 + $0xa4] sm:$0xff]
      %v1530 = vld [vmem:[%s251 + $0xac] sm:$0xff]
      %v1531 = vld [vmem:[%s251 + $0xb4] sm:$0xff]
      %v1532 = vld [vmem:[%s251 + $0xc4] sm:$0xff]
      %v1533 = vld [vmem:[%s251 + $0xcc] sm:$0xff]
      %v1534 = vld [vmem:[%s251 + $0xd4] sm:$0xff]
      %v1535 = vld [vmem:[%s251 + $0xe4] sm:$0xff]
      %v1536 = vld [vmem:[%s251 + $0xec] sm:$0xff]
      %v1537 = vld [vmem:[%s251 + $0xf4] sm:$0xff]
      %s1538 = scalar_lea.vmem %s2, 256
      %v1539 = vld [vmem:[%s1538] sm:$0xff]
      %v1540 = vld [vmem:[%s1538 + $0x8] sm:$0xff]
      %v1541 = vld [vmem:[%s1538 + $0x10] sm:$0xff]
      %v1542 = vld [vmem:[%s1538 + $0x18] sm:$0xff]
      %v1543 = vld [vmem:[%s1538 + $0x20] sm:$0xff]
      %v1544 = vld [vmem:[%s1538 + $0x28] sm:$0xff]
      %v1545 = vld [vmem:[%s1538 + $0x30] sm:$0xf]
      %v1546 = vld [vmem:[%s1538 + $0x38] sm:$0xf]
      %v1548 = vsel %vm326, %v1514, 0
      %v1551 = vsel %vm326, %v1515, 0
      %v1554 = vsel %vm326, %v1516, 0
      %v1557 = vsel %vm326, %v1517, 0
      %v1560 = vsel %vm326, %v1518, 0
      %v1563 = vsel %vm326, %v1519, 0
      %v1566 = vsel %vm326, %v1520, 0
      %v1569 = vsel %vm326, %v1521, 0
      %v1572 = vsel %vm326, %v1522, 0
      %v1575 = vsel %vm326, %v1523, 0
      %v1578 = vsel %vm326, %v1524, 0
      %v1581 = vsel %vm326, %v1525, 0
      %v1584 = vsel %vm326, %v1526, 0
      %v1587 = vsel %vm326, %v1527, 0
      %v1590 = vsel %vm326, %v1528, 0
      %v1593 = vsel %vm326, %v1529, 0
      %v1596 = vsel %vm326, %v1530, 0
      %v1599 = vsel %vm326, %v1531, 0
      %v1602 = vsel %vm326, %v1532, 0
      %v1605 = vsel %vm326, %v1533, 0
      %v1608 = vsel %vm326, %v1534, 0
      %v1611 = vsel %vm326, %v1535, 0
      %v1614 = vsel %vm326, %v1536, 0
      %v1617 = vsel %vm326, %v1537, 0
      %v1620 = vsel %vm399, %v1545, 0
      %v1623 = vsel %vm399, %v1546, 0
      %1625 = vmatpush.msra.mxu0 0.0
      %1626 = vmatpush.msra.mxu0 0.0
      %1627 = vmatpush.msra.mxu0 0.0
      %1628 = vmatpush.msra.mxu0 0.0
      %1629 = vmatpush.msra.mxu0 0.0
      %1630 = vmatpush.msra.mxu0 0.0
      %1631 = vmatpush.msra.mxu0 0.0
      %1632 = vmatpush.msra.mxu0 0.0
      %1633 = vmatpush.msra.mxu0 0.0
      %1634 = vmatpush.msra.mxu0 0.0
      %1635 = vmatpush.msra.mxu0 0.0
      %1636 = vmatpush.msra.mxu0 0.0
      %1637 = vmatpush.msra.mxu0 %v1620
      %1638 = vmatpush.msra.mxu0 %v1543
      %1639 = vmatpush.msra.mxu0 %v1541
      %1640 = vmatpush.msra.mxu0 %v1539
      %1641 = vmatmul.f32.gmra.mxu0 %v1548
      %v1642 = vpop.f32.mrf.mxu0
      %v1643 = vadd.f32 0.0, %v1642
      %1644 = vmatmul.f32.gmra.mxu0 %v1551
      %v1645 = vpop.f32.mrf.mxu0
      %v1646 = vadd.f32 0.0, %v1645
      %1647 = vmatmul.f32.gmra.mxu0 %v1554
      %v1648 = vpop.f32.mrf.mxu0
      %v1649 = vadd.f32 0.0, %v1648
      %1650 = vmatmul.f32.gmra.mxu0 %v1557
      %v1651 = vpop.f32.mrf.mxu0
      %v1652 = vadd.f32 0.0, %v1651
      %1653 = vmatmul.f32.gmra.mxu0 %v1560
      %v1654 = vpop.f32.mrf.mxu0
      %v1655 = vadd.f32 0.0, %v1654
      %1656 = vmatmul.f32.gmra.mxu0 %v1563
      %v1657 = vpop.f32.mrf.mxu0
      %v1658 = vadd.f32 0.0, %v1657
      %1659 = vmatmul.f32.gmra.mxu0 %v1566
      %v1660 = vpop.f32.mrf.mxu0
      %v1661 = vadd.f32 0.0, %v1660
      %1662 = vmatmul.f32.gmra.mxu0 %v1569
      %v1663 = vpop.f32.mrf.mxu0
      %v1664 = vadd.f32 0.0, %v1663
      %1665 = vmatmul.f32.gmra.mxu0 %v1572
      %v1666 = vpop.f32.mrf.mxu0
      %v1667 = vadd.f32 0.0, %v1666
      %1668 = vmatmul.f32.gmra.mxu0 %v1575
      %v1669 = vpop.f32.mrf.mxu0
      %v1670 = vadd.f32 0.0, %v1669
      %1671 = vmatmul.f32.gmra.mxu0 %v1578
      %v1672 = vpop.f32.mrf.mxu0
      %v1673 = vadd.f32 0.0, %v1672
      %1674 = vmatmul.f32.gmra.mxu0 %v1581
      %v1675 = vpop.f32.mrf.mxu0
      %v1676 = vadd.f32 0.0, %v1675
      %1677 = vmatmul.f32.gmra.mxu0 %v1584
      %v1678 = vpop.f32.mrf.mxu0
      %v1679 = vadd.f32 0.0, %v1678
      %1680 = vmatmul.f32.gmra.mxu0 %v1587
      %v1681 = vpop.f32.mrf.mxu0
      %v1682 = vadd.f32 0.0, %v1681
      %1683 = vmatmul.f32.gmra.mxu0 %v1590
      %v1684 = vpop.f32.mrf.mxu0
      %v1685 = vadd.f32 0.0, %v1684
      %1686 = vmatmul.f32.gmra.mxu0 %v1593
      %v1687 = vpop.f32.mrf.mxu0
      %v1688 = vadd.f32 0.0, %v1687
      %1689 = vmatmul.f32.gmra.mxu0 %v1596
      %v1690 = vpop.f32.mrf.mxu0
      %v1691 = vadd.f32 0.0, %v1690
      %1692 = vmatmul.f32.gmra.mxu0 %v1599
      %v1693 = vpop.f32.mrf.mxu0
      %v1694 = vadd.f32 0.0, %v1693
      %1695 = vmatmul.f32.gmra.mxu0 %v1602
      %v1696 = vpop.f32.mrf.mxu0
      %v1697 = vadd.f32 0.0, %v1696
      %1698 = vmatmul.f32.gmra.mxu0 %v1605
      %v1699 = vpop.f32.mrf.mxu0
      %v1700 = vadd.f32 0.0, %v1699
      %1701 = vmatmul.f32.gmra.mxu0 %v1608
      %v1702 = vpop.f32.mrf.mxu0
      %v1703 = vadd.f32 0.0, %v1702
      %1704 = vmatmul.f32.gmra.mxu0 %v1611
      %v1705 = vpop.f32.mrf.mxu0
      %v1706 = vadd.f32 0.0, %v1705
      %1707 = vmatmul.f32.gmra.mxu0 %v1614
      %v1708 = vpop.f32.mrf.mxu0
      %v1709 = vadd.f32 0.0, %v1708
      %1710 = vmatmul.f32.gmra.mxu0 %v1617
      %v1711 = vpop.f32.mrf.mxu0
      %v1712 = vadd.f32 0.0, %v1711
      %1713 = vdwg.mxu0
      %1714 = vmatpush.msra.mxu0 0.0
      %1715 = vmatpush.msra.mxu0 0.0
      %1716 = vmatpush.msra.mxu0 0.0
      %1717 = vmatpush.msra.mxu0 0.0
      %1718 = vmatpush.msra.mxu0 0.0
      %1719 = vmatpush.msra.mxu0 0.0
      %1720 = vmatpush.msra.mxu0 0.0
      %1721 = vmatpush.msra.mxu0 0.0
      %1722 = vmatpush.msra.mxu0 0.0
      %1723 = vmatpush.msra.mxu0 0.0
      %1724 = vmatpush.msra.mxu0 0.0
      %1725 = vmatpush.msra.mxu0 0.0
      %1726 = vmatpush.msra.mxu0 %v1623
      %1727 = vmatpush.msra.mxu0 %v1544
      %1728 = vmatpush.msra.mxu0 %v1542
      %1729 = vmatpush.msra.mxu0 %v1540
      %1730 = vmatmul.f32.gmra.mxu0 %v1548
      %v1731 = vpop.f32.mrf.mxu0
      %v1732 = vadd.f32 0.0, %v1731
      %1733 = vmatmul.f32.gmra.mxu0 %v1551
      %v1734 = vpop.f32.mrf.mxu0
      %v1735 = vadd.f32 0.0, %v1734
      %1736 = vmatmul.f32.gmra.mxu0 %v1554
      %v1737 = vpop.f32.mrf.mxu0
      %v1738 = vadd.f32 0.0, %v1737
      %1739 = vmatmul.f32.gmra.mxu0 %v1557
      %v1740 = vpop.f32.mrf.mxu0
      %v1741 = vadd.f32 0.0, %v1740
      %1742 = vmatmul.f32.gmra.mxu0 %v1560
      %v1743 = vpop.f32.mrf.mxu0
      %v1744 = vadd.f32 0.0, %v1743
      %1745 = vmatmul.f32.gmra.mxu0 %v1563
      %v1746 = vpop.f32.mrf.mxu0
      %v1747 = vadd.f32 0.0, %v1746
      %1748 = vmatmul.f32.gmra.mxu0 %v1566
      %v1749 = vpop.f32.mrf.mxu0
      %v1750 = vadd.f32 0.0, %v1749
      %1751 = vmatmul.f32.gmra.mxu0 %v1569
      %v1752 = vpop.f32.mrf.mxu0
      %v1753 = vadd.f32 0.0, %v1752
      %1754 = vmatmul.f32.gmra.mxu0 %v1572
      %v1755 = vpop.f32.mrf.mxu0
      %v1756 = vadd.f32 0.0, %v1755
      %1757 = vmatmul.f32.gmra.mxu0 %v1575
      %v1758 = vpop.f32.mrf.mxu0
      %v1759 = vadd.f32 0.0, %v1758
      %1760 = vmatmul.f32.gmra.mxu0 %v1578
      %v1761 = vpop.f32.mrf.mxu0
      %v1762 = vadd.f32 0.0, %v1761
      %1763 = vmatmul.f32.gmra.mxu0 %v1581
      %v1764 = vpop.f32.mrf.mxu0
      %v1765 = vadd.f32 0.0, %v1764
      %1766 = vmatmul.f32.gmra.mxu0 %v1584
      %v1767 = vpop.f32.mrf.mxu0
      %v1768 = vadd.f32 0.0, %v1767
      %1769 = vmatmul.f32.gmra.mxu0 %v1587
      %v1770 = vpop.f32.mrf.mxu0
      %v1771 = vadd.f32 0.0, %v1770
      %1772 = vmatmul.f32.gmra.mxu0 %v1590
      %v1773 = vpop.f32.mrf.mxu0
      %v1774 = vadd.f32 0.0, %v1773
      %1775 = vmatmul.f32.gmra.mxu0 %v1593
      %v1776 = vpop.f32.mrf.mxu0
      %v1777 = vadd.f32 0.0, %v1776
      %1778 = vmatmul.f32.gmra.mxu0 %v1596
      %v1779 = vpop.f32.mrf.mxu0
      %v1780 = vadd.f32 0.0, %v1779
      %1781 = vmatmul.f32.gmra.mxu0 %v1599
      %v1782 = vpop.f32.mrf.mxu0
      %v1783 = vadd.f32 0.0, %v1782
      %1784 = vmatmul.f32.gmra.mxu0 %v1602
      %v1785 = vpop.f32.mrf.mxu0
      %v1786 = vadd.f32 0.0, %v1785
      %1787 = vmatmul.f32.gmra.mxu0 %v1605
      %v1788 = vpop.f32.mrf.mxu0
      %v1789 = vadd.f32 0.0, %v1788
      %1790 = vmatmul.f32.gmra.mxu0 %v1608
      %v1791 = vpop.f32.mrf.mxu0
      %v1792 = vadd.f32 0.0, %v1791
      %1793 = vmatmul.f32.gmra.mxu0 %v1611
      %v1794 = vpop.f32.mrf.mxu0
      %v1795 = vadd.f32 0.0, %v1794
      %1796 = vmatmul.f32.gmra.mxu0 %v1614
      %v1797 = vpop.f32.mrf.mxu0
      %v1798 = vadd.f32 0.0, %v1797
      %1799 = vmatmul.f32.gmra.mxu0 %v1617
      %v1800 = vpop.f32.mrf.mxu0
      %v1801 = vadd.f32 0.0, %v1800
      %1802 = vdwg.mxu0
      %v1803 = vadd.f32 %v1466, %v1643
      %v1804 = vadd.f32 %v1467, %v1732
      %v1805 = vadd.f32 %v1468, %v1646
      %v1806 = vadd.f32 %v1469, %v1735
      %v1807 = vadd.f32 %v1470, %v1649
      %v1808 = vadd.f32 %v1471, %v1738
      %v1809 = vadd.f32 %v1472, %v1652
      %v1810 = vadd.f32 %v1473, %v1741
      %v1811 = vadd.f32 %v1474, %v1655
      %v1812 = vadd.f32 %v1475, %v1744
      %v1813 = vadd.f32 %v1476, %v1658
      %v1814 = vadd.f32 %v1477, %v1747
      %v1815 = vadd.f32 %v1478, %v1661
      %v1816 = vadd.f32 %v1479, %v1750
      %v1817 = vadd.f32 %v1480, %v1664
      %v1818 = vadd.f32 %v1481, %v1753
      %v1819 = vadd.f32 %v1482, %v1667
      %v1820 = vadd.f32 %v1483, %v1756
      %v1821 = vadd.f32 %v1484, %v1670
      %v1822 = vadd.f32 %v1485, %v1759
      %v1823 = vadd.f32 %v1486, %v1673
      %v1824 = vadd.f32 %v1487, %v1762
      %v1825 = vadd.f32 %v1488, %v1676
      %v1826 = vadd.f32 %v1489, %v1765
      %v1827 = vadd.f32 %v1490, %v1679
      %v1828 = vadd.f32 %v1491, %v1768
      %v1829 = vadd.f32 %v1492, %v1682
      %v1830 = vadd.f32 %v1493, %v1771
      %v1831 = vadd.f32 %v1494, %v1685
      %v1832 = vadd.f32 %v1495, %v1774
      %v1833 = vadd.f32 %v1496, %v1688
      %v1834 = vadd.f32 %v1497, %v1777
      %v1835 = vadd.f32 %v1498, %v1691
      %v1836 = vadd.f32 %v1499, %v1780
      %v1837 = vadd.f32 %v1500, %v1694
      %v1838 = vadd.f32 %v1501, %v1783
      %v1839 = vadd.f32 %v1502, %v1697
      %v1840 = vadd.f32 %v1503, %v1786
      %v1841 = vadd.f32 %v1504, %v1700
      %v1842 = vadd.f32 %v1505, %v1789
      %v1843 = vadd.f32 %v1506, %v1703
      %v1844 = vadd.f32 %v1507, %v1792
      %v1845 = vadd.f32 %v1508, %v1706
      %v1846 = vadd.f32 %v1509, %v1795
      %v1847 = vadd.f32 %v1510, %v1709
      %v1848 = vadd.f32 %v1511, %v1798
      %v1849 = vadd.f32 %v1512, %v1712
      %v1850 = vadd.f32 %v1513, %v1801
      %v1851 = vld [vmem:[%s3] sm:$0x3]
      %v1853 = vperm.slane %v1851, 0
      %v1854 = vperm.slane %v1851, 1
      %v1857 = vadd.f32 %v1803, %v1853
      %v1858 = vadd.f32 %v1804, %v1854
      %v1859 = vadd.f32 %v1805, %v1853
      %v1860 = vadd.f32 %v1806, %v1854
      %v1861 = vadd.f32 %v1807, %v1853
      %v1862 = vadd.f32 %v1808, %v1854
      %v1863 = vadd.f32 %v1809, %v1853
      %v1864 = vadd.f32 %v1810, %v1854
      %v1865 = vadd.f32 %v1811, %v1853
      %v1866 = vadd.f32 %v1812, %v1854
      %v1867 = vadd.f32 %v1813, %v1853
      %v1868 = vadd.f32 %v1814, %v1854
      %v1869 = vadd.f32 %v1815, %v1853
      %v1870 = vadd.f32 %v1816, %v1854
      %v1871 = vadd.f32 %v1817, %v1853
      %v1872 = vadd.f32 %v1818, %v1854
      %v1873 = vadd.f32 %v1819, %v1853
      %v1874 = vadd.f32 %v1820, %v1854
      %v1875 = vadd.f32 %v1821, %v1853
      %v1876 = vadd.f32 %v1822, %v1854
      %v1877 = vadd.f32 %v1823, %v1853
      %v1878 = vadd.f32 %v1824, %v1854
      %v1879 = vadd.f32 %v1825, %v1853
      %v1880 = vadd.f32 %v1826, %v1854
      %v1881 = vadd.f32 %v1827, %v1853
      %v1882 = vadd.f32 %v1828, %v1854
      %v1883 = vadd.f32 %v1829, %v1853
      %v1884 = vadd.f32 %v1830, %v1854
      %v1885 = vadd.f32 %v1831, %v1853
      %v1886 = vadd.f32 %v1832, %v1854
      %v1887 = vadd.f32 %v1833, %v1853
      %v1888 = vadd.f32 %v1834, %v1854
      %v1889 = vadd.f32 %v1835, %v1853
      %v1890 = vadd.f32 %v1836, %v1854
      %v1891 = vadd.f32 %v1837, %v1853
      %v1892 = vadd.f32 %v1838, %v1854
      %v1893 = vadd.f32 %v1839, %v1853
      %v1894 = vadd.f32 %v1840, %v1854
      %v1895 = vadd.f32 %v1841, %v1853
      %v1896 = vadd.f32 %v1842, %v1854
      %v1897 = vadd.f32 %v1843, %v1853
      %v1898 = vadd.f32 %v1844, %v1854
      %v1899 = vadd.f32 %v1845, %v1853
      %v1900 = vadd.f32 %v1846, %v1854
      %v1901 = vadd.f32 %v1847, %v1853
      %v1902 = vadd.f32 %v1848, %v1854
      %v1903 = vadd.f32 %v1849, %v1853
      %v1904 = vadd.f32 %v1850, %v1854
      %vm1953 = vcmask 1046528
      %v1954 = vrot.slane %v1857, 1
      %v1955 = vrot.slane %v1859, 1
      %v1956 = vsel %vm1953, %v1954, %v1955
      %v1957 = vrot.slane %v1858, 1
      %v1958 = vrot.slane %v1860, 1
      %v1959 = vsel %vm1953, %v1957, %v1958
      %v1960 = vrot.slane %v1861, 1
      %v1961 = vsel %vm1953, %v1955, %v1960
      %v1962 = vrot.slane %v1862, 1
      %v1963 = vsel %vm1953, %v1958, %v1962
      %v1964 = vrot.slane %v1863, 1
      %v1965 = vsel %vm1953, %v1960, %v1964
      %v1966 = vrot.slane %v1864, 1
      %v1967 = vsel %vm1953, %v1962, %v1966
      %v1968 = vrot.slane %v1865, 1
      %v1969 = vsel %vm1953, %v1964, %v1968
      %v1970 = vrot.slane %v1866, 1
      %v1971 = vsel %vm1953, %v1966, %v1970
      %v1972 = vrot.slane %v1867, 1
      %v1973 = vsel %vm1953, %v1968, %v1972
      %v1974 = vrot.slane %v1868, 1
      %v1975 = vsel %vm1953, %v1970, %v1974
      %v1976 = vrot.slane %v1869, 1
      %v1977 = vsel %vm1953, %v1972, %v1976
      %v1978 = vrot.slane %v1870, 1
      %v1979 = vsel %vm1953, %v1974, %v1978
      %v1980 = vrot.slane %v1871, 1
      %v1981 = vsel %vm1953, %v1976, %v1980
      %v1982 = vrot.slane %v1872, 1
      %v1983 = vsel %vm1953, %v1978, %v1982
      %v1984 = vrot.slane %v1873, 1
      %v1985 = vsel %vm1953, %v1980, %v1984
      %v1986 = vrot.slane %v1874, 1
      %v1987 = vsel %vm1953, %v1982, %v1986
      %v1988 = vrot.slane %v1875, 1
      %v1989 = vsel %vm1953, %v1984, %v1988
      %v1990 = vrot.slane %v1876, 1
      %v1991 = vsel %vm1953, %v1986, %v1990
      %v1992 = vrot.slane %v1877, 1
      %v1993 = vsel %vm1953, %v1988, %v1992
      %v1994 = vrot.slane %v1878, 1
      %v1995 = vsel %vm1953, %v1990, %v1994
      %v1996 = vrot.slane %v1879, 1
      %v1997 = vsel %vm1953, %v1992, %v1996
      %v1998 = vrot.slane %v1880, 1
      %v1999 = vsel %vm1953, %v1994, %v1998
      %v2000 = vrot.slane %v1881, 1
      %v2001 = vsel %vm1953, %v1996, %v2000
      %v2002 = vrot.slane %v1882, 1
      %v2003 = vsel %vm1953, %v1998, %v2002
      %v2004 = vrot.slane %v1883, 1
      %v2005 = vsel %vm1953, %v2000, %v2004
      %v2006 = vrot.slane %v1884, 1
      %v2007 = vsel %vm1953, %v2002, %v2006
      %v2008 = vrot.slane %v1885, 1
      %v2009 = vsel %vm1953, %v2004, %v2008
      %v2010 = vrot.slane %v1886, 1
      %v2011 = vsel %vm1953, %v2006, %v2010
      %v2012 = vrot.slane %v1887, 1
      %v2013 = vsel %vm1953, %v2008, %v2012
      %v2014 = vrot.slane %v1888, 1
      %v2015 = vsel %vm1953, %v2010, %v2014
      %v2016 = vrot.slane %v1889, 1
      %v2017 = vsel %vm1953, %v2012, %v2016
      %v2018 = vrot.slane %v1890, 1
      %v2019 = vsel %vm1953, %v2014, %v2018
      %v2020 = vrot.slane %v1891, 1
      %v2021 = vsel %vm1953, %v2016, %v2020
      %v2022 = vrot.slane %v1892, 1
      %v2023 = vsel %vm1953, %v2018, %v2022
      %v2024 = vrot.slane %v1893, 1
      %v2025 = vsel %vm1953, %v2020, %v2024
      %v2026 = vrot.slane %v1894, 1
      %v2027 = vsel %vm1953, %v2022, %v2026
      %v2028 = vrot.slane %v1895, 1
      %v2029 = vsel %vm1953, %v2024, %v2028
      %v2030 = vrot.slane %v1896, 1
      %v2031 = vsel %vm1953, %v2026, %v2030
      %v2032 = vrot.slane %v1897, 1
      %v2033 = vsel %vm1953, %v2028, %v2032
      %v2034 = vrot.slane %v1898, 1
      %v2035 = vsel %vm1953, %v2030, %v2034
      %v2036 = vrot.slane %v1899, 1
      %v2037 = vsel %vm1953, %v2032, %v2036
      %v2038 = vrot.slane %v1900, 1
      %v2039 = vsel %vm1953, %v2034, %v2038
      %v2040 = vrot.slane %v1901, 1
      %v2041 = vsel %vm1953, %v2036, %v2040
      %v2042 = vrot.slane %v1902, 1
      %v2043 = vsel %vm1953, %v2038, %v2042
      %v2044 = vrot.slane %v1903, 1
      %v2045 = vsel %vm1953, %v2040, %v2044
      %v2046 = vrot.slane %v1904, 1
      %v2047 = vsel %vm1953, %v2042, %v2046
      %v2096 = vmax.f32 %v1857, %v1956
      %v2097 = vmax.f32 %v1858, %v1959
      %v2098 = vmax.f32 %v1859, %v1961
      %v2099 = vmax.f32 %v1860, %v1963
      %v2100 = vmax.f32 %v1861, %v1965
      %v2101 = vmax.f32 %v1862, %v1967
      %v2102 = vmax.f32 %v1863, %v1969
      %v2103 = vmax.f32 %v1864, %v1971
      %v2104 = vmax.f32 %v1865, %v1973
      %v2105 = vmax.f32 %v1866, %v1975
      %v2106 = vmax.f32 %v1867, %v1977
      %v2107 = vmax.f32 %v1868, %v1979
      %v2108 = vmax.f32 %v1869, %v1981
      %v2109 = vmax.f32 %v1870, %v1983
      %v2110 = vmax.f32 %v1871, %v1985
      %v2111 = vmax.f32 %v1872, %v1987
      %v2112 = vmax.f32 %v1873, %v1989
      %v2113 = vmax.f32 %v1874, %v1991
      %v2114 = vmax.f32 %v1875, %v1993
      %v2115 = vmax.f32 %v1876, %v1995
      %v2116 = vmax.f32 %v1877, %v1997
      %v2117 = vmax.f32 %v1878, %v1999
      %v2118 = vmax.f32 %v1879, %v2001
      %v2119 = vmax.f32 %v1880, %v2003
      %v2120 = vmax.f32 %v1881, %v2005
      %v2121 = vmax.f32 %v1882, %v2007
      %v2122 = vmax.f32 %v1883, %v2009
      %v2123 = vmax.f32 %v1884, %v2011
      %v2124 = vmax.f32 %v1885, %v2013
      %v2125 = vmax.f32 %v1886, %v2015
      %v2126 = vmax.f32 %v1887, %v2017
      %v2127 = vmax.f32 %v1888, %v2019
      %v2128 = vmax.f32 %v1889, %v2021
      %v2129 = vmax.f32 %v1890, %v2023
      %v2130 = vmax.f32 %v1891, %v2025
      %v2131 = vmax.f32 %v1892, %v2027
      %v2132 = vmax.f32 %v1893, %v2029
      %v2133 = vmax.f32 %v1894, %v2031
      %v2134 = vmax.f32 %v1895, %v2033
      %v2135 = vmax.f32 %v1896, %v2035
      %v2136 = vmax.f32 %v1897, %v2037
      %v2137 = vmax.f32 %v1898, %v2039
      %v2138 = vmax.f32 %v1899, %v2041
      %v2139 = vmax.f32 %v1900, %v2043
      %v2140 = vmax.f32 %v1901, %v2045
      %v2141 = vmax.f32 %v1902, %v2047
      %v2142 = vmax.f32 %v1903, %v2044
      %v2143 = vmax.f32 %v1904, %v2046
      %v2144 = vld [vmem:[%s1] sm:$0xff]
      %v2145 = vld [vmem:[%s1 + $0x8] sm:$0xff]
      %v2146 = vld [vmem:[%s1 + $0x10] sm:$0xff]
      %v2147 = vld [vmem:[%s1 + $0x18] sm:$0xff]
      %v2148 = vld [vmem:[%s1 + $0x20] sm:$0xff]
      %v2149 = vld [vmem:[%s1 + $0x28] sm:$0xff]
      %v2150 = vld [vmem:[%s1 + $0x30] sm:$0xff]
      %v2151 = vld [vmem:[%s1 + $0x38] sm:$0xff]
      %v2152 = vld [vmem:[%s1 + $0x40] sm:$0xff]
      %v2153 = vld [vmem:[%s1 + $0x48] sm:$0xff]
      %v2154 = vld [vmem:[%s1 + $0x50] sm:$0xff]
      %v2155 = vld [vmem:[%s1 + $0x58] sm:$0xff]
      %v2156 = vld [vmem:[%s1 + $0x60] sm:$0xff]
      %v2157 = vld [vmem:[%s1 + $0x68] sm:$0xff]
      %v2158 = vld [vmem:[%s1 + $0x70] sm:$0xff]
      %v2159 = vld [vmem:[%s1 + $0x78] sm:$0xff]
      %v2160 = vld [vmem:[%s1 + $0x80] sm:$0xff]
      %v2161 = vld [vmem:[%s1 + $0x88] sm:$0xff]
      %v2162 = vld [vmem:[%s1 + $0x90] sm:$0xff]
      %v2163 = vld [vmem:[%s1 + $0x98] sm:$0xff]
      %v2164 = vld [vmem:[%s1 + $0xa0] sm:$0xff]
      %v2165 = vld [vmem:[%s1 + $0xa8] sm:$0xff]
      %v2166 = vld [vmem:[%s1 + $0xb0] sm:$0xff]
      %v2167 = vld [vmem:[%s1 + $0xb8] sm:$0xff]
      %v2168 = vld [vmem:[%s1 + $0xc0] sm:$0xff]
      %v2169 = vld [vmem:[%s1 + $0xc8] sm:$0xff]
      %v2170 = vld [vmem:[%s1 + $0xd0] sm:$0xff]
      %v2171 = vld [vmem:[%s1 + $0xd8] sm:$0xff]
      %v2172 = vld [vmem:[%s1 + $0xe0] sm:$0xff]
      %v2173 = vld [vmem:[%s1 + $0xe8] sm:$0xff]
      %v2174 = vld [vmem:[%s1 + $0xf0] sm:$0xff]
      %v2175 = vld [vmem:[%s1 + $0xf8] sm:$0xff]
      %vm2176 = vcmask 515072
      %v2178 = vsel %vm2176, %v2145, 0
      %v2181 = vsel %vm2176, %v2147, 0
      %v2184 = vsel %vm2176, %v2149, 0
      %v2187 = vsel %vm2176, %v2151, 0
      %v2190 = vsel %vm2176, %v2153, 0
      %v2193 = vsel %vm2176, %v2155, 0
      %v2196 = vsel %vm2176, %v2157, 0
      %v2199 = vsel %vm2176, %v2159, 0
      %v2202 = vsel %vm2176, %v2161, 0
      %v2205 = vsel %vm2176, %v2163, 0
      %v2208 = vsel %vm2176, %v2165, 0
      %v2211 = vsel %vm2176, %v2167, 0
      %v2214 = vsel %vm2176, %v2169, 0
      %v2217 = vsel %vm2176, %v2171, 0
      %v2220 = vsel %vm2176, %v2173, 0
      %v2223 = vsel %vm2176, %v2175, 0
      %v2226 = vsel %vm1953, %v2142, 0
      %v2229 = vsel %vm1953, %v2143, 0
      %2231 = vmatpush.msra.mxu0 %v2126
      %2232 = vmatpush.msra.mxu0 %v2124
      %2233 = vmatpush.msra.mxu0 %v2122
      %2234 = vmatpush.msra.mxu0 %v2120
      %2235 = vmatpush.msra.mxu0 %v2118
      %2236 = vmatpush.msra.mxu0 %v2116
      %2237 = vmatpush.msra.mxu0 %v2114
      %2238 = vmatpush.msra.mxu0 %v2112
      %2239 = vmatpush.msra.mxu0 %v2110
      %2240 = vmatpush.msra.mxu0 %v2108
      %2241 = vmatpush.msra.mxu0 %v2106
      %2242 = vmatpush.msra.mxu0 %v2104
      %2243 = vmatpush.msra.mxu0 %v2102
      %2244 = vmatpush.msra.mxu0 %v2100
      %2245 = vmatpush.msra.mxu0 %v2098
      %2246 = vmatpush.msra.mxu0 %v2096
      %2247 = vmatmul.f32.gmra.mxu0 %v2144
      %v2248 = vpop.f32.mrf.mxu0
      %v2249 = vadd.f32 0.0, %v2248
      %2250 = vmatmul.f32.gmra.mxu0 %v2146
      %v2251 = vpop.f32.mrf.mxu0
      %v2252 = vadd.f32 0.0, %v2251
      %2253 = vmatmul.f32.gmra.mxu0 %v2148
      %v2254 = vpop.f32.mrf.mxu0
      %v2255 = vadd.f32 0.0, %v2254
      %2256 = vmatmul.f32.gmra.mxu0 %v2150
      %v2257 = vpop.f32.mrf.mxu0
      %v2258 = vadd.f32 0.0, %v2257
      %2259 = vmatmul.f32.gmra.mxu0 %v2152
      %v2260 = vpop.f32.mrf.mxu0
      %v2261 = vadd.f32 0.0, %v2260
      %2262 = vmatmul.f32.gmra.mxu0 %v2154
      %v2263 = vpop.f32.mrf.mxu0
      %v2264 = vadd.f32 0.0, %v2263
      %2265 = vmatmul.f32.gmra.mxu0 %v2156
      %v2266 = vpop.f32.mrf.mxu0
      %v2267 = vadd.f32 0.0, %v2266
      %2268 = vmatmul.f32.gmra.mxu0 %v2158
      %v2269 = vpop.f32.mrf.mxu0
      %v2270 = vadd.f32 0.0, %v2269
      %2271 = vmatmul.f32.gmra.mxu0 %v2160
      %v2272 = vpop.f32.mrf.mxu0
      %v2273 = vadd.f32 0.0, %v2272
      %2274 = vmatmul.f32.gmra.mxu0 %v2162
      %v2275 = vpop.f32.mrf.mxu0
      %v2276 = vadd.f32 0.0, %v2275
      %2277 = vmatmul.f32.gmra.mxu0 %v2164
      %v2278 = vpop.f32.mrf.mxu0
      %v2279 = vadd.f32 0.0, %v2278
      %2280 = vmatmul.f32.gmra.mxu0 %v2166
      %v2281 = vpop.f32.mrf.mxu0
      %v2282 = vadd.f32 0.0, %v2281
      %2283 = vmatmul.f32.gmra.mxu0 %v2168
      %v2284 = vpop.f32.mrf.mxu0
      %v2285 = vadd.f32 0.0, %v2284
      %2286 = vmatmul.f32.gmra.mxu0 %v2170
      %v2287 = vpop.f32.mrf.mxu0
      %v2288 = vadd.f32 0.0, %v2287
      %2289 = vmatmul.f32.gmra.mxu0 %v2172
      %v2290 = vpop.f32.mrf.mxu0
      %v2291 = vadd.f32 0.0, %v2290
      %2292 = vmatmul.f32.gmra.mxu0 %v2174
      %v2293 = vpop.f32.mrf.mxu0
      %v2294 = vadd.f32 0.0, %v2293
      %2295 = vdwg.mxu0
      %2296 = vmatpush.msra.mxu0 0.0
      %2297 = vmatpush.msra.mxu0 0.0
      %2298 = vmatpush.msra.mxu0 0.0
      %2299 = vmatpush.msra.mxu0 0.0
      %2300 = vmatpush.msra.mxu0 0.0
      %2301 = vmatpush.msra.mxu0 0.0
      %2302 = vmatpush.msra.mxu0 0.0
      %2303 = vmatpush.msra.mxu0 0.0
      %2304 = vmatpush.msra.mxu0 %v2226
      %2305 = vmatpush.msra.mxu0 %v2140
      %2306 = vmatpush.msra.mxu0 %v2138
      %2307 = vmatpush.msra.mxu0 %v2136
      %2308 = vmatpush.msra.mxu0 %v2134
      %2309 = vmatpush.msra.mxu0 %v2132
      %2310 = vmatpush.msra.mxu0 %v2130
      %2311 = vmatpush.msra.mxu0 %v2128
      %2312 = vmatmul.f32.gmra.mxu0 %v2178
      %v2313 = vpop.f32.mrf.mxu0
      %v2314 = vadd.f32 %v2249, %v2313
      %2315 = vmatmul.f32.gmra.mxu0 %v2181
      %v2316 = vpop.f32.mrf.mxu0
      %v2317 = vadd.f32 %v2252, %v2316
      %2318 = vmatmul.f32.gmra.mxu0 %v2184
      %v2319 = vpop.f32.mrf.mxu0
      %v2320 = vadd.f32 %v2255, %v2319
      %2321 = vmatmul.f32.gmra.mxu0 %v2187
      %v2322 = vpop.f32.mrf.mxu0
      %v2323 = vadd.f32 %v2258, %v2322
      %2324 = vmatmul.f32.gmra.mxu0 %v2190
      %v2325 = vpop.f32.mrf.mxu0
      %v2326 = vadd.f32 %v2261, %v2325
      %2327 = vmatmul.f32.gmra.mxu0 %v2193
      %v2328 = vpop.f32.mrf.mxu0
      %v2329 = vadd.f32 %v2264, %v2328
      %2330 = vmatmul.f32.gmra.mxu0 %v2196
      %v2331 = vpop.f32.mrf.mxu0
      %v2332 = vadd.f32 %v2267, %v2331
      %2333 = vmatmul.f32.gmra.mxu0 %v2199
      %v2334 = vpop.f32.mrf.mxu0
      %v2335 = vadd.f32 %v2270, %v2334
      %2336 = vmatmul.f32.gmra.mxu0 %v2202
      %v2337 = vpop.f32.mrf.mxu0
      %v2338 = vadd.f32 %v2273, %v2337
      %2339 = vmatmul.f32.gmra.mxu0 %v2205
      %v2340 = vpop.f32.mrf.mxu0
      %v2341 = vadd.f32 %v2276, %v2340
      %2342 = vmatmul.f32.gmra.mxu0 %v2208
      %v2343 = vpop.f32.mrf.mxu0
      %v2344 = vadd.f32 %v2279, %v2343
      %2345 = vmatmul.f32.gmra.mxu0 %v2211
      %v2346 = vpop.f32.mrf.mxu0
      %v2347 = vadd.f32 %v2282, %v2346
      %2348 = vmatmul.f32.gmra.mxu0 %v2214
      %v2349 = vpop.f32.mrf.mxu0
      %v2350 = vadd.f32 %v2285, %v2349
      %2351 = vmatmul.f32.gmra.mxu0 %v2217
      %v2352 = vpop.f32.mrf.mxu0
      %v2353 = vadd.f32 %v2288, %v2352
      %2354 = vmatmul.f32.gmra.mxu0 %v2220
      %v2355 = vpop.f32.mrf.mxu0
      %v2356 = vadd.f32 %v2291, %v2355
      %2357 = vmatmul.f32.gmra.mxu0 %v2223
      %v2358 = vpop.f32.mrf.mxu0
      %v2359 = vadd.f32 %v2294, %v2358
      %2360 = vdwg.mxu0
      %2361 = vmatpush.msra.mxu0 %v2127
      %2362 = vmatpush.msra.mxu0 %v2125
      %2363 = vmatpush.msra.mxu0 %v2123
      %2364 = vmatpush.msra.mxu0 %v2121
      %2365 = vmatpush.msra.mxu0 %v2119
      %2366 = vmatpush.msra.mxu0 %v2117
      %2367 = vmatpush.msra.mxu0 %v2115
      %2368 = vmatpush.msra.mxu0 %v2113
      %2369 = vmatpush.msra.mxu0 %v2111
      %2370 = vmatpush.msra.mxu0 %v2109
      %2371 = vmatpush.msra.mxu0 %v2107
      %2372 = vmatpush.msra.mxu0 %v2105
      %2373 = vmatpush.msra.mxu0 %v2103
      %2374 = vmatpush.msra.mxu0 %v2101
      %2375 = vmatpush.msra.mxu0 %v2099
      %2376 = vmatpush.msra.mxu0 %v2097
      %2377 = vmatmul.f32.gmra.mxu0 %v2144
      %v2378 = vpop.f32.mrf.mxu0
      %v2379 = vadd.f32 0.0, %v2378
      %2380 = vmatmul.f32.gmra.mxu0 %v2146
      %v2381 = vpop.f32.mrf.mxu0
      %v2382 = vadd.f32 0.0, %v2381
      %2383 = vmatmul.f32.gmra.mxu0 %v2148
      %v2384 = vpop.f32.mrf.mxu0
      %v2385 = vadd.f32 0.0, %v2384
      %2386 = vmatmul.f32.gmra.mxu0 %v2150
      %v2387 = vpop.f32.mrf.mxu0
      %v2388 = vadd.f32 0.0, %v2387
      %2389 = vmatmul.f32.gmra.mxu0 %v2152
      %v2390 = vpop.f32.mrf.mxu0
      %v2391 = vadd.f32 0.0, %v2390
      %2392 = vmatmul.f32.gmra.mxu0 %v2154
      %v2393 = vpop.f32.mrf.mxu0
      %v2394 = vadd.f32 0.0, %v2393
      %2395 = vmatmul.f32.gmra.mxu0 %v2156
      %v2396 = vpop.f32.mrf.mxu0
      %v2397 = vadd.f32 0.0, %v2396
      %2398 = vmatmul.f32.gmra.mxu0 %v2158
      %v2399 = vpop.f32.mrf.mxu0
      %v2400 = vadd.f32 0.0, %v2399
      %2401 = vmatmul.f32.gmra.mxu0 %v2160
      %v2402 = vpop.f32.mrf.mxu0
      %v2403 = vadd.f32 0.0, %v2402
      %2404 = vmatmul.f32.gmra.mxu0 %v2162
      %v2405 = vpop.f32.mrf.mxu0
      %v2406 = vadd.f32 0.0, %v2405
      %2407 = vmatmul.f32.gmra.mxu0 %v2164
      %v2408 = vpop.f32.mrf.mxu0
      %v2409 = vadd.f32 0.0, %v2408
      %2410 = vmatmul.f32.gmra.mxu0 %v2166
      %v2411 = vpop.f32.mrf.mxu0
      %v2412 = vadd.f32 0.0, %v2411
      %2413 = vmatmul.f32.gmra.mxu0 %v2168
      %v2414 = vpop.f32.mrf.mxu0
      %v2415 = vadd.f32 0.0, %v2414
      %2416 = vmatmul.f32.gmra.mxu0 %v2170
      %v2417 = vpop.f32.mrf.mxu0
      %v2418 = vadd.f32 0.0, %v2417
      %2419 = vmatmul.f32.gmra.mxu0 %v2172
      %v2420 = vpop.f32.mrf.mxu0
      %v2421 = vadd.f32 0.0, %v2420
      %2422 = vmatmul.f32.gmra.mxu0 %v2174
      %v2423 = vpop.f32.mrf.mxu0
      %v2424 = vadd.f32 0.0, %v2423
      %2425 = vdwg.mxu0
      %2426 = vmatpush.msra.mxu0 0.0
      %2427 = vmatpush.msra.mxu0 0.0
      %2428 = vmatpush.msra.mxu0 0.0
      %2429 = vmatpush.msra.mxu0 0.0
      %2430 = vmatpush.msra.mxu0 0.0
      %2431 = vmatpush.msra.mxu0 0.0
      %2432 = vmatpush.msra.mxu0 0.0
      %2433 = vmatpush.msra.mxu0 0.0
      %2434 = vmatpush.msra.mxu0 %v2229
      %2435 = vmatpush.msra.mxu0 %v2141
      %2436 = vmatpush.msra.mxu0 %v2139
      %2437 = vmatpush.msra.mxu0 %v2137
      %2438 = vmatpush.msra.mxu0 %v2135
      %2439 = vmatpush.msra.mxu0 %v2133
      %2440 = vmatpush.msra.mxu0 %v2131
      %2441 = vmatpush.msra.mxu0 %v2129
      %2442 = vmatmul.f32.gmra.mxu0 %v2178
      %v2443 = vpop.f32.mrf.mxu0
      %v2444 = vadd.f32 %v2379, %v2443
      %2445 = vmatmul.f32.gmra.mxu0 %v2181
      %v2446 = vpop.f32.mrf.mxu0
      %v2447 = vadd.f32 %v2382, %v2446
      %2448 = vmatmul.f32.gmra.mxu0 %v2184
      %v2449 = vpop.f32.mrf.mxu0
      %v2450 = vadd.f32 %v2385, %v2449
      %2451 = vmatmul.f32.gmra.mxu0 %v2187
      %v2452 = vpop.f32.mrf.mxu0
      %v2453 = vadd.f32 %v2388, %v2452
      %2454 = vmatmul.f32.gmra.mxu0 %v2190
      %v2455 = vpop.f32.mrf.mxu0
      %v2456 = vadd.f32 %v2391, %v2455
      %2457 = vmatmul.f32.gmra.mxu0 %v2193
      %v2458 = vpop.f32.mrf.mxu0
      %v2459 = vadd.f32 %v2394, %v2458
      %2460 = vmatmul.f32.gmra.mxu0 %v2196
      %v2461 = vpop.f32.mrf.mxu0
      %v2462 = vadd.f32 %v2397, %v2461
      %2463 = vmatmul.f32.gmra.mxu0 %v2199
      %v2464 = vpop.f32.mrf.mxu0
      %v2465 = vadd.f32 %v2400, %v2464
      %2466 = vmatmul.f32.gmra.mxu0 %v2202
      %v2467 = vpop.f32.mrf.mxu0
      %v2468 = vadd.f32 %v2403, %v2467
      %2469 = vmatmul.f32.gmra.mxu0 %v2205
      %v2470 = vpop.f32.mrf.mxu0
      %v2471 = vadd.f32 %v2406, %v2470
      %2472 = vmatmul.f32.gmra.mxu0 %v2208
      %v2473 = vpop.f32.mrf.mxu0
      %v2474 = vadd.f32 %v2409, %v2473
      %2475 = vmatmul.f32.gmra.mxu0 %v2211
      %v2476 = vpop.f32.mrf.mxu0
      %v2477 = vadd.f32 %v2412, %v2476
      %2478 = vmatmul.f32.gmra.mxu0 %v2214
      %v2479 = vpop.f32.mrf.mxu0
      %v2480 = vadd.f32 %v2415, %v2479
      %2481 = vmatmul.f32.gmra.mxu0 %v2217
      %v2482 = vpop.f32.mrf.mxu0
      %v2483 = vadd.f32 %v2418, %v2482
      %2484 = vmatmul.f32.gmra.mxu0 %v2220
      %v2485 = vpop.f32.mrf.mxu0
      %v2486 = vadd.f32 %v2421, %v2485
      %2487 = vmatmul.f32.gmra.mxu0 %v2223
      %v2488 = vpop.f32.mrf.mxu0
      %v2489 = vadd.f32 %v2424, %v2488
      %2490 = vdwg.mxu0
      %2523 = vrot.lane.b32.xlu0 %v2314, 118
      %v2524 = vpop.permute.xlu0 %2523
      %2525 = vrot.lane.b32.xlu0 %v2444, 118
      %v2526 = vpop.permute.xlu0 %2525
      %2527 = vrot.lane.b32.xlu0 %v2317, 118
      %v2528 = vpop.permute.xlu0 %2527
      %2529 = vrot.lane.b32.xlu0 %v2447, 118
      %v2530 = vpop.permute.xlu0 %2529
      %2531 = vrot.lane.b32.xlu0 %v2320, 118
      %v2532 = vpop.permute.xlu0 %2531
      %2533 = vrot.lane.b32.xlu0 %v2450, 118
      %v2534 = vpop.permute.xlu0 %2533
      %2535 = vrot.lane.b32.xlu0 %v2323, 118
      %v2536 = vpop.permute.xlu0 %2535
      %2537 = vrot.lane.b32.xlu0 %v2453, 118
      %v2538 = vpop.permute.xlu0 %2537
      %2539 = vrot.lane.b32.xlu0 %v2326, 118
      %v2540 = vpop.permute.xlu0 %2539
      %2541 = vrot.lane.b32.xlu0 %v2456, 118
      %v2542 = vpop.permute.xlu0 %2541
      %2543 = vrot.lane.b32.xlu0 %v2329, 118
      %v2544 = vpop.permute.xlu0 %2543
      %2545 = vrot.lane.b32.xlu0 %v2459, 118
      %v2546 = vpop.permute.xlu0 %2545
      %2547 = vrot.lane.b32.xlu0 %v2332, 118
      %v2548 = vpop.permute.xlu0 %2547
      %2549 = vrot.lane.b32.xlu0 %v2462, 118
      %v2550 = vpop.permute.xlu0 %2549
      %2551 = vrot.lane.b32.xlu0 %v2335, 118
      %v2552 = vpop.permute.xlu0 %2551
      %2553 = vrot.lane.b32.xlu0 %v2465, 118
      %v2554 = vpop.permute.xlu0 %2553
      %2555 = vrot.lane.b32.xlu0 %v2338, 118
      %v2556 = vpop.permute.xlu0 %2555
      %2557 = vrot.lane.b32.xlu0 %v2468, 118
      %v2558 = vpop.permute.xlu0 %2557
      %2559 = vrot.lane.b32.xlu0 %v2341, 118
      %v2560 = vpop.permute.xlu0 %2559
      %2561 = vrot.lane.b32.xlu0 %v2471, 118
      %v2562 = vpop.permute.xlu0 %2561
      %2563 = vrot.lane.b32.xlu0 %v2344, 118
      %v2564 = vpop.permute.xlu0 %2563
      %2565 = vrot.lane.b32.xlu0 %v2474, 118
      %v2566 = vpop.permute.xlu0 %2565
      %2567 = vrot.lane.b32.xlu0 %v2347, 118
      %v2568 = vpop.permute.xlu0 %2567
      %2569 = vrot.lane.b32.xlu0 %v2477, 118
      %v2570 = vpop.permute.xlu0 %2569
      %2571 = vrot.lane.b32.xlu0 %v2350, 118
      %v2572 = vpop.permute.xlu0 %2571
      %2573 = vrot.lane.b32.xlu0 %v2480, 118
      %v2574 = vpop.permute.xlu0 %2573
      %2575 = vrot.lane.b32.xlu0 %v2353, 118
      %v2576 = vpop.permute.xlu0 %2575
      %2577 = vrot.lane.b32.xlu0 %v2483, 118
      %v2578 = vpop.permute.xlu0 %2577
      %2579 = vrot.lane.b32.xlu0 %v2356, 118
      %v2580 = vpop.permute.xlu0 %2579
      %2581 = vrot.lane.b32.xlu0 %v2486, 118
      %v2582 = vpop.permute.xlu0 %2581
      %2583 = vrot.lane.b32.xlu0 %v2359, 118
      %v2584 = vpop.permute.xlu0 %2583
      %2585 = vrot.lane.b32.xlu0 %v2489, 118
      %v2586 = vpop.permute.xlu0 %2585
      %vm2587 = vcmask 965632
      %v2588 = vsel %vm2587, %v2524, %v2526
      %v2589 = vsel %vm2587, %v2528, %v2530
      %v2590 = vsel %vm2587, %v2532, %v2534
      %v2591 = vsel %vm2587, %v2536, %v2538
      %v2592 = vsel %vm2587, %v2540, %v2542
      %v2593 = vsel %vm2587, %v2544, %v2546
      %v2594 = vsel %vm2587, %v2548, %v2550
      %v2595 = vsel %vm2587, %v2552, %v2554
      %v2596 = vsel %vm2587, %v2556, %v2558
      %v2597 = vsel %vm2587, %v2560, %v2562
      %v2598 = vsel %vm2587, %v2564, %v2566
      %v2599 = vsel %vm2587, %v2568, %v2570
      %v2600 = vsel %vm2587, %v2572, %v2574
      %v2601 = vsel %vm2587, %v2576, %v2578
      %v2602 = vsel %vm2587, %v2580, %v2582
      %v2603 = vsel %vm2587, %v2584, %v2586
      %v2636 = vmax.f32 %v2314, %v2588
      %v2637 = vmax.f32 %v2444, %v2526
      %v2638 = vmax.f32 %v2317, %v2589
      %v2639 = vmax.f32 %v2447, %v2530
      %v2640 = vmax.f32 %v2320, %v2590
      %v2641 = vmax.f32 %v2450, %v2534
      %v2642 = vmax.f32 %v2323, %v2591
      %v2643 = vmax.f32 %v2453, %v2538
      %v2644 = vmax.f32 %v2326, %v2592
      %v2645 = vmax.f32 %v2456, %v2542
      %v2646 = vmax.f32 %v2329, %v2593
      %v2647 = vmax.f32 %v2459, %v2546
      %v2648 = vmax.f32 %v2332, %v2594
      %v2649 = vmax.f32 %v2462, %v2550
      %v2650 = vmax.f32 %v2335, %v2595
      %v2651 = vmax.f32 %v2465, %v2554
      %v2652 = vmax.f32 %v2338, %v2596
      %v2653 = vmax.f32 %v2468, %v2558
      %v2654 = vmax.f32 %v2341, %v2597
      %v2655 = vmax.f32 %v2471, %v2562
      %v2656 = vmax.f32 %v2344, %v2598
      %v2657 = vmax.f32 %v2474, %v2566
      %v2658 = vmax.f32 %v2347, %v2599
      %v2659 = vmax.f32 %v2477, %v2570
      %v2660 = vmax.f32 %v2350, %v2600
      %v2661 = vmax.f32 %v2480, %v2574
      %v2662 = vmax.f32 %v2353, %v2601
      %v2663 = vmax.f32 %v2483, %v2578
      %v2664 = vmax.f32 %v2356, %v2602
      %v2665 = vmax.f32 %v2486, %v2582
      %v2666 = vmax.f32 %v2359, %v2603
      %v2667 = vmax.f32 %v2489, %v2586
      %v2668 = vmax.f32 %v2636, 0.0
      %v2669 = vmax.f32 %v2637, 0.0
      %v2670 = vmax.f32 %v2638, 0.0
      %v2671 = vmax.f32 %v2639, 0.0
      %v2672 = vmax.f32 %v2640, 0.0
      %v2673 = vmax.f32 %v2641, 0.0
      %v2674 = vmax.f32 %v2642, 0.0
      %v2675 = vmax.f32 %v2643, 0.0
      %v2676 = vmax.f32 %v2644, 0.0
      %v2677 = vmax.f32 %v2645, 0.0
      %v2678 = vmax.f32 %v2646, 0.0
      %v2679 = vmax.f32 %v2647, 0.0
      %v2680 = vmax.f32 %v2648, 0.0
      %v2681 = vmax.f32 %v2649, 0.0
      %v2682 = vmax.f32 %v2650, 0.0
      %v2683 = vmax.f32 %v2651, 0.0
      %v2684 = vmax.f32 %v2652, 0.0
      %v2685 = vmax.f32 %v2653, 0.0
      %v2686 = vmax.f32 %v2654, 0.0
      %v2687 = vmax.f32 %v2655, 0.0
      %v2688 = vmax.f32 %v2656, 0.0
      %v2689 = vmax.f32 %v2657, 0.0
      %v2690 = vmax.f32 %v2658, 0.0
      %v2691 = vmax.f32 %v2659, 0.0
      %v2692 = vmax.f32 %v2660, 0.0
      %v2693 = vmax.f32 %v2661, 0.0
      %v2694 = vmax.f32 %v2662, 0.0
      %v2695 = vmax.f32 %v2663, 0.0
      %v2696 = vmax.f32 %v2664, 0.0
      %v2697 = vmax.f32 %v2665, 0.0
      %v2698 = vmax.f32 %v2666, 0.0
      %v2699 = vmax.f32 %v2667, 0.0
      %v2700 = vpack.c.bf16 %v2672, %v2668
      %v2701 = vpack.c.bf16 %v2673, %v2669
      %v2702 = vpack.c.bf16 %v2680, %v2676
      %v2703 = vpack.c.bf16 %v2681, %v2677
      %v2704 = vpack.c.bf16 %v2688, %v2684
      %v2705 = vpack.c.bf16 %v2689, %v2685
      %v2706 = vpack.c.bf16 %v2696, %v2692
      %v2707 = vpack.c.bf16 %v2697, %v2693
      %v2708 = vld [vmem:[%s4] sm:$0xff]
      %v2709 = vld [vmem:[%s4 + $0x8] sm:$0xff]
      %v2710 = vld [vmem:[%s4 + $0x10] sm:$0xff]
      %v2711 = vld [vmem:[%s4 + $0x18] sm:$0xff]
      %v2712 = vld [vmem:[%s4 + $0x20] sm:$0xff]
      %v2713 = vld [vmem:[%s4 + $0x28] sm:$0xff]
      %v2714 = vld [vmem:[%s4 + $0x30] sm:$0xff]
      %v2715 = vld [vmem:[%s4 + $0x38] sm:$0xff]
      %v2716 = vld [vmem:[%s4 + $0x40] sm:$0xff]
      %v2717 = vld [vmem:[%s4 + $0x48] sm:$0xff]
      %v2718 = vld [vmem:[%s4 + $0x50] sm:$0xff]
      %v2719 = vld [vmem:[%s4 + $0x58] sm:$0xff]
      %v2720 = vld [vmem:[%s4 + $0x60] sm:$0xff]
      %v2721 = vld [vmem:[%s4 + $0x68] sm:$0xff]
      %v2722 = vld [vmem:[%s4 + $0x70] sm:$0xff]
      %v2723 = vld [vmem:[%s4 + $0x78] sm:$0xff]
      %v2724 = vld [vmem:[%s4 + $0x80] sm:$0xff]
      %v2725 = vld [vmem:[%s4 + $0x88] sm:$0xff]
      %v2726 = vld [vmem:[%s4 + $0x90] sm:$0xff]
      %v2727 = vld [vmem:[%s4 + $0x98] sm:$0xff]
      %v2728 = vld [vmem:[%s4 + $0xa0] sm:$0xff]
      %v2729 = vld [vmem:[%s4 + $0xa8] sm:$0xff]
      %v2730 = vld [vmem:[%s4 + $0xb0] sm:$0xff]
      %v2731 = vld [vmem:[%s4 + $0xb8] sm:$0xff]
      %v2732 = vld [vmem:[%s4 + $0xc0] sm:$0xff]
      %v2733 = vld [vmem:[%s4 + $0xc8] sm:$0xff]
      %v2734 = vld [vmem:[%s4 + $0xd0] sm:$0xff]
      %v2735 = vld [vmem:[%s4 + $0xd8] sm:$0xff]
      %v2736 = vld [vmem:[%s4 + $0xe0] sm:$0x77]
      %v2769 = vrot.slane %v2668, 1
      %v2770 = vrot.slane %v2670, 1
      %v2771 = vsel %vm1953, %v2769, %v2770
      %v2772 = vrot.slane %v2669, 1
      %v2773 = vrot.slane %v2671, 1
      %v2774 = vsel %vm1953, %v2772, %v2773
      %v2775 = vrot.slane %v2672, 1
      %v2776 = vrot.slane %v2674, 1
      %v2777 = vsel %vm1953, %v2775, %v2776
      %v2778 = vrot.slane %v2673, 1
      %v2779 = vrot.slane %v2675, 1
      %v2780 = vsel %vm1953, %v2778, %v2779
      %v2781 = vrot.slane %v2676, 1
      %v2782 = vrot.slane %v2678, 1
      %v2783 = vsel %vm1953, %v2781, %v2782
      %v2784 = vrot.slane %v2677, 1
      %v2785 = vrot.slane %v2679, 1
      %v2786 = vsel %vm1953, %v2784, %v2785
      %v2787 = vrot.slane %v2680, 1
      %v2788 = vrot.slane %v2682, 1
      %v2789 = vsel %vm1953, %v2787, %v2788
      %v2790 = vrot.slane %v2681, 1
      %v2791 = vrot.slane %v2683, 1
      %v2792 = vsel %vm1953, %v2790, %v2791
      %v2793 = vrot.slane %v2684, 1
      %v2794 = vrot.slane %v2686, 1
      %v2795 = vsel %vm1953, %v2793, %v2794
      %v2796 = vrot.slane %v2685, 1
      %v2797 = vrot.slane %v2687, 1
      %v2798 = vsel %vm1953, %v2796, %v2797
      %v2799 = vrot.slane %v2688, 1
      %v2800 = vrot.slane %v2690, 1
      %v2801 = vsel %vm1953, %v2799, %v2800
      %v2802 = vrot.slane %v2689, 1
      %v2803 = vrot.slane %v2691, 1
      %v2804 = vsel %vm1953, %v2802, %v2803
      %v2805 = vrot.slane %v2692, 1
      %v2806 = vrot.slane %v2694, 1
      %v2807 = vsel %vm1953, %v2805, %v2806
      %v2808 = vrot.slane %v2693, 1
      %v2809 = vrot.slane %v2695, 1
      %v2810 = vsel %vm1953, %v2808, %v2809
      %v2811 = vrot.slane %v2696, 1
      %v2812 = vrot.slane %v2698, 1
      %v2813 = vsel %vm1953, %v2811, %v2812
      %v2814 = vrot.slane %v2697, 1
      %v2815 = vrot.slane %v2699, 1
      %v2816 = vsel %vm1953, %v2814, %v2815
      %v2833 = vpack.c.bf16 %v2777, %v2771
      %v2834 = vpack.c.bf16 %v2780, %v2774
      %v2835 = vpack.c.bf16 %v2789, %v2783
      %v2836 = vpack.c.bf16 %v2792, %v2786
      %v2837 = vpack.c.bf16 %v2801, %v2795
      %v2838 = vpack.c.bf16 %v2804, %v2798
      %v2839 = vpack.c.bf16 %v2813, %v2807
      %v2840 = vpack.c.bf16 %v2816, %v2810
      %s2841 = scalar_lea.vmem %s4, 232
      %v2842 = vld [vmem:[%s2841] sm:$0xff]
      %v2843 = vld [vmem:[%s2841 + $0x8] sm:$0xff]
      %v2844 = vld [vmem:[%s2841 + $0x10] sm:$0xff]
      %v2845 = vld [vmem:[%s2841 + $0x18] sm:$0xff]
      %v2846 = vld [vmem:[%s2841 + $0x20] sm:$0xff]
      %v2847 = vld [vmem:[%s2841 + $0x28] sm:$0xff]
      %v2848 = vld [vmem:[%s2841 + $0x30] sm:$0xff]
      %v2849 = vld [vmem:[%s2841 + $0x38] sm:$0xff]
      %v2850 = vld [vmem:[%s2841 + $0x40] sm:$0xff]
      %v2851 = vld [vmem:[%s2841 + $0x48] sm:$0xff]
      %v2852 = vld [vmem:[%s2841 + $0x50] sm:$0xff]
      %v2853 = vld [vmem:[%s2841 + $0x58] sm:$0xff]
      %v2854 = vld [vmem:[%s2841 + $0x60] sm:$0xff]
      %v2855 = vld [vmem:[%s2841 + $0x68] sm:$0xff]
      %v2856 = vld [vmem:[%s2841 + $0x70] sm:$0xff]
      %v2857 = vld [vmem:[%s2841 + $0x78] sm:$0xff]
      %v2858 = vld [vmem:[%s2841 + $0x80] sm:$0xff]
      %v2859 = vld [vmem:[%s2841 + $0x88] sm:$0xff]
      %v2860 = vld [vmem:[%s2841 + $0x90] sm:$0xff]
      %v2861 = vld [vmem:[%s2841 + $0x98] sm:$0xff]
      %v2862 = vld [vmem:[%s2841 + $0xa0] sm:$0xff]
      %v2863 = vld [vmem:[%s2841 + $0xa8] sm:$0xff]
      %v2864 = vld [vmem:[%s2841 + $0xb0] sm:$0xff]
      %v2865 = vld [vmem:[%s2841 + $0xb8] sm:$0xff]
      %v2866 = vld [vmem:[%s2841 + $0xc0] sm:$0xff]
      %v2867 = vld [vmem:[%s2841 + $0xc8] sm:$0xff]
      %v2868 = vld [vmem:[%s2841 + $0xd0] sm:$0xff]
      %v2869 = vld [vmem:[%s2841 + $0xd8] sm:$0xff]
      %v2870 = vld [vmem:[%s2841 + $0xe0] sm:$0x77]
      %v2900 = vunpack.c.l.b16 %v2842
      %v2901 = vunpack.c.h.b16 %v2842
      %v2902 = vunpack.c.l.b16 %v2843
      %v2903 = vunpack.c.h.b16 %v2843
      %v2904 = vunpack.c.l.b16 %v2844
      %v2905 = vunpack.c.h.b16 %v2844
      %v2906 = vunpack.c.l.b16 %v2845
      %v2907 = vunpack.c.h.b16 %v2845
      %v2908 = vunpack.c.l.b16 %v2846
      %v2909 = vunpack.c.h.b16 %v2846
      %v2910 = vunpack.c.l.b16 %v2847
      %v2911 = vunpack.c.h.b16 %v2847
      %v2912 = vunpack.c.l.b16 %v2848
      %v2913 = vunpack.c.h.b16 %v2848
      %v2914 = vunpack.c.l.b16 %v2849
      %v2915 = vunpack.c.h.b16 %v2849
      %v2916 = vunpack.c.l.b16 %v2850
      %v2917 = vunpack.c.h.b16 %v2850
      %v2918 = vunpack.c.l.b16 %v2851
      %v2919 = vunpack.c.h.b16 %v2851
      %v2920 = vunpack.c.l.b16 %v2852
      %v2921 = vunpack.c.h.b16 %v2852
      %v2922 = vunpack.c.l.b16 %v2853
      %v2923 = vunpack.c.h.b16 %v2853
      %v2924 = vunpack.c.l.b16 %v2854
      %v2925 = vunpack.c.h.b16 %v2854
      %v2926 = vunpack.c.l.b16 %v2855
      %v2927 = vunpack.c.h.b16 %v2855
      %v2928 = vunpack.c.l.b16 %v2856
      %v2929 = vunpack.c.h.b16 %v2856
      %v2930 = vunpack.c.l.b16 %v2857
      %v2931 = vunpack.c.h.b16 %v2857
      %v2932 = vunpack.c.l.b16 %v2858
      %v2933 = vunpack.c.h.b16 %v2858
      %v2934 = vunpack.c.l.b16 %v2859
      %v2935 = vunpack.c.h.b16 %v2859
      %v2936 = vunpack.c.l.b16 %v2860
      %v2937 = vunpack.c.h.b16 %v2860
      %v2938 = vunpack.c.l.b16 %v2861
      %v2939 = vunpack.c.h.b16 %v2861
      %v2940 = vunpack.c.l.b16 %v2862
      %v2941 = vunpack.c.h.b16 %v2862
      %v2942 = vunpack.c.l.b16 %v2863
      %v2943 = vunpack.c.h.b16 %v2863
      %v2944 = vunpack.c.l.b16 %v2864
      %v2945 = vunpack.c.h.b16 %v2864
      %v2946 = vunpack.c.l.b16 %v2865
      %v2947 = vunpack.c.h.b16 %v2865
      %v2948 = vunpack.c.l.b16 %v2866
      %v2949 = vunpack.c.h.b16 %v2866
      %v2950 = vunpack.c.l.b16 %v2867
      %v2951 = vunpack.c.h.b16 %v2867
      %v2952 = vunpack.c.l.b16 %v2868
      %v2953 = vunpack.c.h.b16 %v2868
      %v2954 = vunpack.c.l.b16 %v2869
      %v2955 = vunpack.c.h.b16 %v2869
      %v2956 = vunpack.c.l.b16 %v2870
      %v2957 = vunpack.c.h.b16 %v2870
      %v2958 = vpack.c.b16 %v2902, %v2900
      %v2959 = vpack.c.b16 %v2903, %v2901
      %v2960 = vpack.c.b16 %v2906, %v2904
      %v2961 = vpack.c.b16 %v2907, %v2905
      %v2962 = vpack.c.b16 %v2910, %v2908
      %v2963 = vpack.c.b16 %v2911, %v2909
      %v2964 = vpack.c.b16 %v2914, %v2912
      %v2965 = vpack.c.b16 %v2915, %v2913
      %v2966 = vpack.c.b16 %v2918, %v2916
      %v2967 = vpack.c.b16 %v2919, %v2917
      %v2968 = vpack.c.b16 %v2922, %v2920
      %v2969 = vpack.c.b16 %v2923, %v2921
      %v2970 = vpack.c.b16 %v2926, %v2924
      %v2971 = vpack.c.b16 %v2927, %v2925
      %v2972 = vpack.c.b16 %v2930, %v2928
      %v2973 = vpack.c.b16 %v2931, %v2929
      %v2974 = vpack.c.b16 %v2934, %v2932
      %v2975 = vpack.c.b16 %v2935, %v2933
      %v2976 = vpack.c.b16 %v2938, %v2936
      %v2977 = vpack.c.b16 %v2939, %v2937
      %v2978 = vpack.c.b16 %v2942, %v2940
      %v2979 = vpack.c.b16 %v2943, %v2941
      %v2980 = vpack.c.b16 %v2946, %v2944
      %v2981 = vpack.c.b16 %v2947, %v2945
      %v2982 = vpack.c.b16 %v2950, %v2948
      %v2983 = vpack.c.b16 %v2951, %v2949
      %v2984 = vpack.c.b16 %v2954, %v2952
      %v2985 = vpack.c.b16 %v2955, %v2953
      %v2986 = vpack.c.b16 %v2956, %v2956
      %v2987 = vpack.c.b16 %v2957, %v2957
      %vm3016 = vcmask 834560
      %v3018 = vsel %vm3016, %v2834, 0
      %v3021 = vsel %vm3016, %v2836, 0
      %v3024 = vsel %vm3016, %v2838, 0
      %v3027 = vsel %vm3016, %v2840, 0
      %vm3029 = vcmask 1042432
      %v3031 = vsel %vm3029, %v2986, 0
      %v3034 = vsel %vm3029, %v2987, 0
      %3036 = vmatpush.bf16.msra.mxu0 %v2972
      %3037 = vmatpush.bf16.msra.mxu0 %v2970
      %3038 = vmatpush.bf16.msra.mxu0 %v2968
      %3039 = vmatpush.bf16.msra.mxu0 %v2966
      %3040 = vmatpush.bf16.msra.mxu0 %v2964
      %3041 = vmatpush.bf16.msra.mxu0 %v2962
      %3042 = vmatpush.bf16.msra.mxu0 %v2960
      %3043 = vmatpush.bf16.msra.mxu0 %v2958
      %3044 = vmatmul.bf16.gmra.mxu0 %v2833
      %v3045 = vpop.f32.mrf.mxu0
      %v3046 = vadd.f32 0.0, %v3045
      %v3047 = vpop.f32.mrf.mxu0
      %v3048 = vadd.f32 0.0, %v3047
      %3049 = vmatmul.bf16.gmra.mxu0 %v2835
      %v3050 = vpop.f32.mrf.mxu0
      %v3051 = vadd.f32 0.0, %v3050
      %v3052 = vpop.f32.mrf.mxu0
      %v3053 = vadd.f32 0.0, %v3052
      %3054 = vmatmul.bf16.gmra.mxu0 %v2837
      %v3055 = vpop.f32.mrf.mxu0
      %v3056 = vadd.f32 0.0, %v3055
      %v3057 = vpop.f32.mrf.mxu0
      %v3058 = vadd.f32 0.0, %v3057
      %3059 = vmatmul.bf16.gmra.mxu0 %v2839
      %v3060 = vpop.f32.mrf.mxu0
      %v3061 = vadd.f32 0.0, %v3060
      %v3062 = vpop.f32.mrf.mxu0
      %v3063 = vadd.f32 0.0, %v3062
      %3064 = vdwg.mxu0
      %3065 = vmatpush.bf16.msra.mxu0 0
      %3066 = vmatpush.bf16.msra.mxu0 %v3031
      %3067 = vmatpush.bf16.msra.mxu0 %v2984
      %3068 = vmatpush.bf16.msra.mxu0 %v2982
      %3069 = vmatpush.bf16.msra.mxu0 %v2980
      %3070 = vmatpush.bf16.msra.mxu0 %v2978
      %3071 = vmatpush.bf16.msra.mxu0 %v2976
      %3072 = vmatpush.bf16.msra.mxu0 %v2974
      %3073 = vmatmul.bf16.gmra.mxu0 %v3018
      %v3074 = vpop.f32.mrf.mxu0
      %v3075 = vadd.f32 %v3046, %v3074
      %v3076 = vpop.f32.mrf.mxu0
      %v3077 = vadd.f32 %v3048, %v3076
      %3078 = vmatmul.bf16.gmra.mxu0 %v3021
      %v3079 = vpop.f32.mrf.mxu0
      %v3080 = vadd.f32 %v3051, %v3079
      %v3081 = vpop.f32.mrf.mxu0
      %v3082 = vadd.f32 %v3053, %v3081
      %3083 = vmatmul.bf16.gmra.mxu0 %v3024
      %v3084 = vpop.f32.mrf.mxu0
      %v3085 = vadd.f32 %v3056, %v3084
      %v3086 = vpop.f32.mrf.mxu0
      %v3087 = vadd.f32 %v3058, %v3086
      %3088 = vmatmul.bf16.gmra.mxu0 %v3027
      %v3089 = vpop.f32.mrf.mxu0
      %v3090 = vadd.f32 %v3061, %v3089
      %v3091 = vpop.f32.mrf.mxu0
      %v3092 = vadd.f32 %v3063, %v3091
      %3093 = vdwg.mxu0
      %3094 = vmatpush.bf16.msra.mxu0 %v2973
      %3095 = vmatpush.bf16.msra.mxu0 %v2971
      %3096 = vmatpush.bf16.msra.mxu0 %v2969
      %3097 = vmatpush.bf16.msra.mxu0 %v2967
      %3098 = vmatpush.bf16.msra.mxu0 %v2965
      %3099 = vmatpush.bf16.msra.mxu0 %v2963
      %3100 = vmatpush.bf16.msra.mxu0 %v2961
      %3101 = vmatpush.bf16.msra.mxu0 %v2959
      %3102 = vmatmul.bf16.gmra.mxu0 %v2833
      %v3103 = vpop.f32.mrf.mxu0
      %v3104 = vadd.f32 0.0, %v3103
      %v3105 = vpop.f32.mrf.mxu0
      %v3106 = vadd.f32 0.0, %v3105
      %3107 = vmatmul.bf16.gmra.mxu0 %v2835
      %v3108 = vpop.f32.mrf.mxu0
      %v3109 = vadd.f32 0.0, %v3108
      %v3110 = vpop.f32.mrf.mxu0
      %v3111 = vadd.f32 0.0, %v3110
      %3112 = vmatmul.bf16.gmra.mxu0 %v2837
      %v3113 = vpop.f32.mrf.mxu0
      %v3114 = vadd.f32 0.0, %v3113
      %v3115 = vpop.f32.mrf.mxu0
      %v3116 = vadd.f32 0.0, %v3115
      %3117 = vmatmul.bf16.gmra.mxu0 %v2839
      %v3118 = vpop.f32.mrf.mxu0
      %v3119 = vadd.f32 0.0, %v3118
      %v3120 = vpop.f32.mrf.mxu0
      %v3121 = vadd.f32 0.0, %v3120
      %3122 = vdwg.mxu0
      %3123 = vmatpush.bf16.msra.mxu0 0
      %3124 = vmatpush.bf16.msra.mxu0 %v3034
      %3125 = vmatpush.bf16.msra.mxu0 %v2985
      %3126 = vmatpush.bf16.msra.mxu0 %v2983
      %3127 = vmatpush.bf16.msra.mxu0 %v2981
      %3128 = vmatpush.bf16.msra.mxu0 %v2979
      %3129 = vmatpush.bf16.msra.mxu0 %v2977
      %3130 = vmatpush.bf16.msra.mxu0 %v2975
      %3131 = vmatmul.bf16.gmra.mxu0 %v3018
      %v3132 = vpop.f32.mrf.mxu0
      %v3133 = vadd.f32 %v3104, %v3132
      %v3134 = vpop.f32.mrf.mxu0
      %v3135 = vadd.f32 %v3106, %v3134
      %3136 = vmatmul.bf16.gmra.mxu0 %v3021
      %v3137 = vpop.f32.mrf.mxu0
      %v3138 = vadd.f32 %v3109, %v3137
      %v3139 = vpop.f32.mrf.mxu0
      %v3140 = vadd.f32 %v3111, %v3139
      %3141 = vmatmul.bf16.gmra.mxu0 %v3024
      %v3142 = vpop.f32.mrf.mxu0
      %v3143 = vadd.f32 %v3114, %v3142
      %v3144 = vpop.f32.mrf.mxu0
      %v3145 = vadd.f32 %v3116, %v3144
      %3146 = vmatmul.bf16.gmra.mxu0 %v3027
      %v3147 = vpop.f32.mrf.mxu0
      %v3148 = vadd.f32 %v3119, %v3147
      %v3149 = vpop.f32.mrf.mxu0
      %v3150 = vadd.f32 %v3121, %v3149
      %3151 = vdwg.mxu0
      %v3181 = vunpack.c.l.b16 %v2708
      %v3182 = vunpack.c.h.b16 %v2708
      %v3183 = vunpack.c.l.b16 %v2709
      %v3184 = vunpack.c.h.b16 %v2709
      %v3185 = vunpack.c.l.b16 %v2710
      %v3186 = vunpack.c.h.b16 %v2710
      %v3187 = vunpack.c.l.b16 %v2711
      %v3188 = vunpack.c.h.b16 %v2711
      %v3189 = vunpack.c.l.b16 %v2712
      %v3190 = vunpack.c.h.b16 %v2712
      %v3191 = vunpack.c.l.b16 %v2713
      %v3192 = vunpack.c.h.b16 %v2713
      %v3193 = vunpack.c.l.b16 %v2714
      %v3194 = vunpack.c.h.b16 %v2714
      %v3195 = vunpack.c.l.b16 %v2715
      %v3196 = vunpack.c.h.b16 %v2715
      %v3197 = vunpack.c.l.b16 %v2716
      %v3198 = vunpack.c.h.b16 %v2716
      %v3199 = vunpack.c.l.b16 %v2717
      %v3200 = vunpack.c.h.b16 %v2717
      %v3201 = vunpack.c.l.b16 %v2718
      %v3202 = vunpack.c.h.b16 %v2718
      %v3203 = vunpack.c.l.b16 %v2719
      %v3204 = vunpack.c.h.b16 %v2719
      %v3205 = vunpack.c.l.b16 %v2720
      %v3206 = vunpack.c.h.b16 %v2720
      %v3207 = vunpack.c.l.b16 %v2721
      %v3208 = vunpack.c.h.b16 %v2721
      %v3209 = vunpack.c.l.b16 %v2722
      %v3210 = vunpack.c.h.b16 %v2722
      %v3211 = vunpack.c.l.b16 %v2723
      %v3212 = vunpack.c.h.b16 %v2723
      %v3213 = vunpack.c.l.b16 %v2724
      %v3214 = vunpack.c.h.b16 %v2724
      %v3215 = vunpack.c.l.b16 %v2725
      %v3216 = vunpack.c.h.b16 %v2725
      %v3217 = vunpack.c.l.b16 %v2726
      %v3218 = vunpack.c.h.b16 %v2726
      %v3219 = vunpack.c.l.b16 %v2727
      %v3220 = vunpack.c.h.b16 %v2727
      %v3221 = vunpack.c.l.b16 %v2728
      %v3222 = vunpack.c.h.b16 %v2728
      %v3223 = vunpack.c.l.b16 %v2729
      %v3224 = vunpack.c.h.b16 %v2729
      %v3225 = vunpack.c.l.b16 %v2730
      %v3226 = vunpack.c.h.b16 %v2730
      %v3227 = vunpack.c.l.b16 %v2731
      %v3228 = vunpack.c.h.b16 %v2731
      %v3229 = vunpack.c.l.b16 %v2732
      %v3230 = vunpack.c.h.b16 %v2732
      %v3231 = vunpack.c.l.b16 %v2733
      %v3232 = vunpack.c.h.b16 %v2733
      %v3233 = vunpack.c.l.b16 %v2734
      %v3234 = vunpack.c.h.b16 %v2734
      %v3235 = vunpack.c.l.b16 %v2735
      %v3236 = vunpack.c.h.b16 %v2735
      %v3237 = vunpack.c.l.b16 %v2736
      %v3238 = vunpack.c.h.b16 %v2736
      %v3239 = vpack.c.b16 %v3183, %v3181
      %v3240 = vpack.c.b16 %v3184, %v3182
      %v3241 = vpack.c.b16 %v3187, %v3185
      %v3242 = vpack.c.b16 %v3188, %v3186
      %v3243 = vpack.c.b16 %v3191, %v3189
      %v3244 = vpack.c.b16 %v3192, %v3190
      %v3245 = vpack.c.b16 %v3195, %v3193
      %v3246 = vpack.c.b16 %v3196, %v3194
      %v3247 = vpack.c.b16 %v3199, %v3197
      %v3248 = vpack.c.b16 %v3200, %v3198
      %v3249 = vpack.c.b16 %v3203, %v3201
      %v3250 = vpack.c.b16 %v3204, %v3202
      %v3251 = vpack.c.b16 %v3207, %v3205
      %v3252 = vpack.c.b16 %v3208, %v3206
      %v3253 = vpack.c.b16 %v3211, %v3209
      %v3254 = vpack.c.b16 %v3212, %v3210
      %v3255 = vpack.c.b16 %v3215, %v3213
      %v3256 = vpack.c.b16 %v3216, %v3214
      %v3257 = vpack.c.b16 %v3219, %v3217
      %v3258 = vpack.c.b16 %v3220, %v3218
      %v3259 = vpack.c.b16 %v3223, %v3221
      %v3260 = vpack.c.b16 %v3224, %v3222
      %v3261 = vpack.c.b16 %v3227, %v3225
      %v3262 = vpack.c.b16 %v3228, %v3226
      %v3263 = vpack.c.b16 %v3231, %v3229
      %v3264 = vpack.c.b16 %v3232, %v3230
      %v3265 = vpack.c.b16 %v3235, %v3233
      %v3266 = vpack.c.b16 %v3236, %v3234
      %v3267 = vpack.c.b16 %v3237, %v3237
      %v3268 = vpack.c.b16 %v3238, %v3238
      %v3298 = vsel %vm3016, %v2701, 0
      %v3301 = vsel %vm3016, %v2703, 0
      %v3304 = vsel %vm3016, %v2705, 0
      %v3307 = vsel %vm3016, %v2707, 0
      %v3310 = vsel %vm3029, %v3267, 0
      %v3313 = vsel %vm3029, %v3268, 0
      %3315 = vmatpush.bf16.msra.mxu0 %v3253
      %3316 = vmatpush.bf16.msra.mxu0 %v3251
      %3317 = vmatpush.bf16.msra.mxu0 %v3249
      %3318 = vmatpush.bf16.msra.mxu0 %v3247
      %3319 = vmatpush.bf16.msra.mxu0 %v3245
      %3320 = vmatpush.bf16.msra.mxu0 %v3243
      %3321 = vmatpush.bf16.msra.mxu0 %v3241
      %3322 = vmatpush.bf16.msra.mxu0 %v3239
      %3323 = vmatmul.bf16.gmra.mxu0 %v2700
      %v3324 = vpop.f32.mrf.mxu0
      %v3325 = vadd.f32 %v3075, %v3324
      %v3326 = vpop.f32.mrf.mxu0
      %v3327 = vadd.f32 %v3077, %v3326
      %3328 = vmatmul.bf16.gmra.mxu0 %v2702
      %v3329 = vpop.f32.mrf.mxu0
      %v3330 = vadd.f32 %v3080, %v3329
      %v3331 = vpop.f32.mrf.mxu0
      %v3332 = vadd.f32 %v3082, %v3331
      %3333 = vmatmul.bf16.gmra.mxu0 %v2704
      %v3334 = vpop.f32.mrf.mxu0
      %v3335 = vadd.f32 %v3085, %v3334
      %v3336 = vpop.f32.mrf.mxu0
      %v3337 = vadd.f32 %v3087, %v3336
      %3338 = vmatmul.bf16.gmra.mxu0 %v2706
      %v3339 = vpop.f32.mrf.mxu0
      %v3340 = vadd.f32 %v3090, %v3339
      %v3341 = vpop.f32.mrf.mxu0
      %v3342 = vadd.f32 %v3092, %v3341
      %3343 = vdwg.mxu0
      %3344 = vmatpush.bf16.msra.mxu0 0
      %3345 = vmatpush.bf16.msra.mxu0 %v3310
      %3346 = vmatpush.bf16.msra.mxu0 %v3265
      %3347 = vmatpush.bf16.msra.mxu0 %v3263
      %3348 = vmatpush.bf16.msra.mxu0 %v3261
      %3349 = vmatpush.bf16.msra.mxu0 %v3259
      %3350 = vmatpush.bf16.msra.mxu0 %v3257
      %3351 = vmatpush.bf16.msra.mxu0 %v3255
      %3352 = vmatmul.bf16.gmra.mxu0 %v3298
      %v3353 = vpop.f32.mrf.mxu0
      %v3354 = vadd.f32 %v3325, %v3353
      %v3355 = vpop.f32.mrf.mxu0
      %v3356 = vadd.f32 %v3327, %v3355
      %3357 = vmatmul.bf16.gmra.mxu0 %v3301
      %v3358 = vpop.f32.mrf.mxu0
      %v3359 = vadd.f32 %v3330, %v3358
      %v3360 = vpop.f32.mrf.mxu0
      %v3361 = vadd.f32 %v3332, %v3360
      %3362 = vmatmul.bf16.gmra.mxu0 %v3304
      %v3363 = vpop.f32.mrf.mxu0
      %v3364 = vadd.f32 %v3335, %v3363
      %v3365 = vpop.f32.mrf.mxu0
      %v3366 = vadd.f32 %v3337, %v3365
      %3367 = vmatmul.bf16.gmra.mxu0 %v3307
      %v3368 = vpop.f32.mrf.mxu0
      %v3369 = vadd.f32 %v3340, %v3368
      %v3370 = vpop.f32.mrf.mxu0
      %v3371 = vadd.f32 %v3342, %v3370
      %3372 = vdwg.mxu0
      %3373 = vmatpush.bf16.msra.mxu0 %v3254
      %3374 = vmatpush.bf16.msra.mxu0 %v3252
      %3375 = vmatpush.bf16.msra.mxu0 %v3250
      %3376 = vmatpush.bf16.msra.mxu0 %v3248
      %3377 = vmatpush.bf16.msra.mxu0 %v3246
      %3378 = vmatpush.bf16.msra.mxu0 %v3244
      %3379 = vmatpush.bf16.msra.mxu0 %v3242
      %3380 = vmatpush.bf16.msra.mxu0 %v3240
      %3381 = vmatmul.bf16.gmra.mxu0 %v2700
      %v3382 = vpop.f32.mrf.mxu0
      %v3383 = vadd.f32 %v3133, %v3382
      %v3384 = vpop.f32.mrf.mxu0
      %v3385 = vadd.f32 %v3135, %v3384
      %3386 = vmatmul.bf16.gmra.mxu0 %v2702
      %v3387 = vpop.f32.mrf.mxu0
      %v3388 = vadd.f32 %v3138, %v3387
      %v3389 = vpop.f32.mrf.mxu0
      %v3390 = vadd.f32 %v3140, %v3389
      %3391 = vmatmul.bf16.gmra.mxu0 %v2704
      %v3392 = vpop.f32.mrf.mxu0
      %v3393 = vadd.f32 %v3143, %v3392
      %v3394 = vpop.f32.mrf.mxu0
      %v3395 = vadd.f32 %v3145, %v3394
      %3396 = vmatmul.bf16.gmra.mxu0 %v2706
      %v3397 = vpop.f32.mrf.mxu0
      %v3398 = vadd.f32 %v3148, %v3397
      %v3399 = vpop.f32.mrf.mxu0
      %v3400 = vadd.f32 %v3150, %v3399
      %3401 = vdwg.mxu0
      %3402 = vmatpush.bf16.msra.mxu0 0
      %3403 = vmatpush.bf16.msra.mxu0 %v3313
      %3404 = vmatpush.bf16.msra.mxu0 %v3266
      %3405 = vmatpush.bf16.msra.mxu0 %v3264
      %3406 = vmatpush.bf16.msra.mxu0 %v3262
      %3407 = vmatpush.bf16.msra.mxu0 %v3260
      %3408 = vmatpush.bf16.msra.mxu0 %v3258
      %3409 = vmatpush.bf16.msra.mxu0 %v3256
      %3410 = vmatmul.bf16.gmra.mxu0 %v3298
      %v3411 = vpop.f32.mrf.mxu0
      %v3412 = vadd.f32 %v3383, %v3411
      %v3413 = vpop.f32.mrf.mxu0
      %v3414 = vadd.f32 %v3385, %v3413
      %3415 = vmatmul.bf16.gmra.mxu0 %v3301
      %v3416 = vpop.f32.mrf.mxu0
      %v3417 = vadd.f32 %v3388, %v3416
      %v3418 = vpop.f32.mrf.mxu0
      %v3419 = vadd.f32 %v3390, %v3418
      %3420 = vmatmul.bf16.gmra.mxu0 %v3304
      %v3421 = vpop.f32.mrf.mxu0
      %v3422 = vadd.f32 %v3393, %v3421
      %v3423 = vpop.f32.mrf.mxu0
      %v3424 = vadd.f32 %v3395, %v3423
      %3425 = vmatmul.bf16.gmra.mxu0 %v3307
      %v3426 = vpop.f32.mrf.mxu0
      %v3427 = vadd.f32 %v3398, %v3426
      %v3428 = vpop.f32.mrf.mxu0
      %v3429 = vadd.f32 %v3400, %v3428
      %3430 = vdwg.mxu0
      %vm3431 = vcmask 1045504
      %v3432 = vrot.slane %v2668, 2
      %v3433 = vrot.slane %v2670, 2
      %v3434 = vsel %vm3431, %v3432, %v3433
      %v3435 = vrot.slane %v2669, 2
      %v3436 = vrot.slane %v2671, 2
      %v3437 = vsel %vm3431, %v3435, %v3436
      %v3438 = vrot.slane %v2672, 2
      %v3439 = vrot.slane %v2674, 2
      %v3440 = vsel %vm3431, %v3438, %v3439
      %v3441 = vrot.slane %v2673, 2
      %v3442 = vrot.slane %v2675, 2
      %v3443 = vsel %vm3431, %v3441, %v3442
      %v3444 = vrot.slane %v2676, 2
      %v3445 = vrot.slane %v2678, 2
      %v3446 = vsel %vm3431, %v3444, %v3445
      %v3447 = vrot.slane %v2677, 2
      %v3448 = vrot.slane %v2679, 2
      %v3449 = vsel %vm3431, %v3447, %v3448
      %v3450 = vrot.slane %v2680, 2
      %v3451 = vrot.slane %v2682, 2
      %v3452 = vsel %vm3431, %v3450, %v3451
      %v3453 = vrot.slane %v2681, 2
      %v3454 = vrot.slane %v2683, 2
      %v3455 = vsel %vm3431, %v3453, %v3454
      %v3456 = vrot.slane %v2684, 2
      %v3457 = vrot.slane %v2686, 2
      %v3458 = vsel %vm3431, %v3456, %v3457
      %v3459 = vrot.slane %v2685, 2
      %v3460 = vrot.slane %v2687, 2
      %v3461 = vsel %vm3431, %v3459, %v3460
      %v3462 = vrot.slane %v2688, 2
      %v3463 = vrot.slane %v2690, 2
      %v3464 = vsel %vm3431, %v3462, %v3463
      %v3465 = vrot.slane %v2689, 2
      %v3466 = vrot.slane %v2691, 2
      %v3467 = vsel %vm3431, %v3465, %v3466
      %v3468 = vrot.slane %v2692, 2
      %v3469 = vrot.slane %v2694, 2
      %v3470 = vsel %vm3431, %v3468, %v3469
      %v3471 = vrot.slane %v2693, 2
      %v3472 = vrot.slane %v2695, 2
      %v3473 = vsel %vm3431, %v3471, %v3472
      %v3474 = vrot.slane %v2696, 2
      %v3475 = vrot.slane %v2698, 2
      %v3476 = vsel %vm3431, %v3474, %v3475
      %v3477 = vrot.slane %v2697, 2
      %v3478 = vrot.slane %v2699, 2
      %v3479 = vsel %vm3431, %v3477, %v3478
      %v3496 = vpack.c.bf16 %v3440, %v3434
      %v3497 = vpack.c.bf16 %v3443, %v3437
      %v3498 = vpack.c.bf16 %v3452, %v3446
      %v3499 = vpack.c.bf16 %v3455, %v3449
      %v3500 = vpack.c.bf16 %v3464, %v3458
      %v3501 = vpack.c.bf16 %v3467, %v3461
      %v3502 = vpack.c.bf16 %v3476, %v3470
      %v3503 = vpack.c.bf16 %v3479, %v3473
      %s3504 = scalar_lea.vmem %s4, 464
      %v3505 = vld [vmem:[%s3504] sm:$0xff]
      %v3506 = vld [vmem:[%s3504 + $0x8] sm:$0xff]
      %v3507 = vld [vmem:[%s3504 + $0x10] sm:$0xff]
      %v3508 = vld [vmem:[%s3504 + $0x18] sm:$0xff]
      %v3509 = vld [vmem:[%s3504 + $0x20] sm:$0xff]
      %v3510 = vld [vmem:[%s3504 + $0x28] sm:$0xff]
      %v3511 = vld [vmem:[%s3504 + $0x30] sm:$0xff]
      %v3512 = vld [vmem:[%s3504 + $0x38] sm:$0xff]
      %v3513 = vld [vmem:[%s3504 + $0x40] sm:$0xff]
      %v3514 = vld [vmem:[%s3504 + $0x48] sm:$0xff]
      %v3515 = vld [vmem:[%s3504 + $0x50] sm:$0xff]
      %v3516 = vld [vmem:[%s3504 + $0x58] sm:$0xff]
      %v3517 = vld [vmem:[%s3504 + $0x60] sm:$0xff]
      %v3518 = vld [vmem:[%s3504 + $0x68] sm:$0xff]
      %v3519 = vld [vmem:[%s3504 + $0x70] sm:$0xff]
      %v3520 = vld [vmem:[%s3504 + $0x78] sm:$0xff]
      %v3521 = vld [vmem:[%s3504 + $0x80] sm:$0xff]
      %v3522 = vld [vmem:[%s3504 + $0x88] sm:$0xff]
      %v3523 = vld [vmem:[%s3504 + $0x90] sm:$0xff]
      %v3524 = vld [vmem:[%s3504 + $0x98] sm:$0xff]
      %v3525 = vld [vmem:[%s3504 + $0xa0] sm:$0xff]
      %v3526 = vld [vmem:[%s3504 + $0xa8] sm:$0xff]
      %v3527 = vld [vmem:[%s3504 + $0xb0] sm:$0xff]
      %v3528 = vld [vmem:[%s3504 + $0xb8] sm:$0xff]
      %v3529 = vld [vmem:[%s3504 + $0xc0] sm:$0xff]
      %v3530 = vld [vmem:[%s3504 + $0xc8] sm:$0xff]
      %v3531 = vld [vmem:[%s3504 + $0xd0] sm:$0xff]
      %v3532 = vld [vmem:[%s3504 + $0xd8] sm:$0xff]
      %v3533 = vld [vmem:[%s3504 + $0xe0] sm:$0x77]
      %v3563 = vunpack.c.l.b16 %v3505
      %v3564 = vunpack.c.h.b16 %v3505
      %v3565 = vunpack.c.l.b16 %v3506
      %v3566 = vunpack.c.h.b16 %v3506
      %v3567 = vunpack.c.l.b16 %v3507
      %v3568 = vunpack.c.h.b16 %v3507
      %v3569 = vunpack.c.l.b16 %v3508
      %v3570 = vunpack.c.h.b16 %v3508
      %v3571 = vunpack.c.l.b16 %v3509
      %v3572 = vunpack.c.h.b16 %v3509
      %v3573 = vunpack.c.l.b16 %v3510
      %v3574 = vunpack.c.h.b16 %v3510
      %v3575 = vunpack.c.l.b16 %v3511
      %v3576 = vunpack.c.h.b16 %v3511
      %v3577 = vunpack.c.l.b16 %v3512
      %v3578 = vunpack.c.h.b16 %v3512
      %v3579 = vunpack.c.l.b16 %v3513
      %v3580 = vunpack.c.h.b16 %v3513
      %v3581 = vunpack.c.l.b16 %v3514
      %v3582 = vunpack.c.h.b16 %v3514
      %v3583 = vunpack.c.l.b16 %v3515
      %v3584 = vunpack.c.h.b16 %v3515
      %v3585 = vunpack.c.l.b16 %v3516
      %v3586 = vunpack.c.h.b16 %v3516
      %v3587 = vunpack.c.l.b16 %v3517
      %v3588 = vunpack.c.h.b16 %v3517
      %v3589 = vunpack.c.l.b16 %v3518
      %v3590 = vunpack.c.h.b16 %v3518
      %v3591 = vunpack.c.l.b16 %v3519
      %v3592 = vunpack.c.h.b16 %v3519
      %v3593 = vunpack.c.l.b16 %v3520
      %v3594 = vunpack.c.h.b16 %v3520
      %v3595 = vunpack.c.l.b16 %v3521
      %v3596 = vunpack.c.h.b16 %v3521
      %v3597 = vunpack.c.l.b16 %v3522
      %v3598 = vunpack.c.h.b16 %v3522
      %v3599 = vunpack.c.l.b16 %v3523
      %v3600 = vunpack.c.h.b16 %v3523
      %v3601 = vunpack.c.l.b16 %v3524
      %v3602 = vunpack.c.h.b16 %v3524
      %v3603 = vunpack.c.l.b16 %v3525
      %v3604 = vunpack.c.h.b16 %v3525
      %v3605 = vunpack.c.l.b16 %v3526
      %v3606 = vunpack.c.h.b16 %v3526
      %v3607 = vunpack.c.l.b16 %v3527
      %v3608 = vunpack.c.h.b16 %v3527
      %v3609 = vunpack.c.l.b16 %v3528
      %v3610 = vunpack.c.h.b16 %v3528
      %v3611 = vunpack.c.l.b16 %v3529
      %v3612 = vunpack.c.h.b16 %v3529
      %v3613 = vunpack.c.l.b16 %v3530
      %v3614 = vunpack.c.h.b16 %v3530
      %v3615 = vunpack.c.l.b16 %v3531
      %v3616 = vunpack.c.h.b16 %v3531
      %v3617 = vunpack.c.l.b16 %v3532
      %v3618 = vunpack.c.h.b16 %v3532
      %v3619 = vunpack.c.l.b16 %v3533
      %v3620 = vunpack.c.h.b16 %v3533
      %v3621 = vpack.c.b16 %v3565, %v3563
      %v3622 = vpack.c.b16 %v3566, %v3564
      %v3623 = vpack.c.b16 %v3569, %v3567
      %v3624 = vpack.c.b16 %v3570, %v3568
      %v3625 = vpack.c.b16 %v3573, %v3571
      %v3626 = vpack.c.b16 %v3574, %v3572
      %v3627 = vpack.c.b16 %v3577, %v3575
      %v3628 = vpack.c.b16 %v3578, %v3576
      %v3629 = vpack.c.b16 %v3581, %v3579
      %v3630 = vpack.c.b16 %v3582, %v3580
      %v3631 = vpack.c.b16 %v3585, %v3583
      %v3632 = vpack.c.b16 %v3586, %v3584
      %v3633 = vpack.c.b16 %v3589, %v3587
      %v3634 = vpack.c.b16 %v3590, %v3588
      %v3635 = vpack.c.b16 %v3593, %v3591
      %v3636 = vpack.c.b16 %v3594, %v3592
      %v3637 = vpack.c.b16 %v3597, %v3595
      %v3638 = vpack.c.b16 %v3598, %v3596
      %v3639 = vpack.c.b16 %v3601, %v3599
      %v3640 = vpack.c.b16 %v3602, %v3600
      %v3641 = vpack.c.b16 %v3605, %v3603
      %v3642 = vpack.c.b16 %v3606, %v3604
      %v3643 = vpack.c.b16 %v3609, %v3607
      %v3644 = vpack.c.b16 %v3610, %v3608
      %v3645 = vpack.c.b16 %v3613, %v3611
      %v3646 = vpack.c.b16 %v3614, %v3612
      %v3647 = vpack.c.b16 %v3617, %v3615
      %v3648 = vpack.c.b16 %v3618, %v3616
      %v3649 = vpack.c.b16 %v3619, %v3619
      %v3650 = vpack.c.b16 %v3620, %v3620
      %v3680 = vsel %vm3016, %v3497, 0
      %v3683 = vsel %vm3016, %v3499, 0
      %v3686 = vsel %vm3016, %v3501, 0
      %v3689 = vsel %vm3016, %v3503, 0
      %v3692 = vsel %vm3029, %v3649, 0
      %v3695 = vsel %vm3029, %v3650, 0
      %3697 = vmatpush.bf16.msra.mxu0 %v3635
      %3698 = vmatpush.bf16.msra.mxu0 %v3633
      %3699 = vmatpush.bf16.msra.mxu0 %v3631
      %3700 = vmatpush.bf16.msra.mxu0 %v3629
      %3701 = vmatpush.bf16.msra.mxu0 %v3627
      %3702 = vmatpush.bf16.msra.mxu0 %v3625
      %3703 = vmatpush.bf16.msra.mxu0 %v3623
      %3704 = vmatpush.bf16.msra.mxu0 %v3621
      %3705 = vmatmul.bf16.gmra.mxu0 %v3496
      %v3706 = vpop.f32.mrf.mxu0
      %v3707 = vadd.f32 0.0, %v3706
      %v3708 = vpop.f32.mrf.mxu0
      %v3709 = vadd.f32 0.0, %v3708
      %3710 = vmatmul.bf16.gmra.mxu0 %v3498
      %v3711 = vpop.f32.mrf.mxu0
      %v3712 = vadd.f32 0.0, %v3711
      %v3713 = vpop.f32.mrf.mxu0
      %v3714 = vadd.f32 0.0, %v3713
      %3715 = vmatmul.bf16.gmra.mxu0 %v3500
      %v3716 = vpop.f32.mrf.mxu0
      %v3717 = vadd.f32 0.0, %v3716
      %v3718 = vpop.f32.mrf.mxu0
      %v3719 = vadd.f32 0.0, %v3718
      %3720 = vmatmul.bf16.gmra.mxu0 %v3502
      %v3721 = vpop.f32.mrf.mxu0
      %v3722 = vadd.f32 0.0, %v3721
      %v3723 = vpop.f32.mrf.mxu0
      %v3724 = vadd.f32 0.0, %v3723
      %3725 = vdwg.mxu0
      %3726 = vmatpush.bf16.msra.mxu0 0
      %3727 = vmatpush.bf16.msra.mxu0 %v3692
      %3728 = vmatpush.bf16.msra.mxu0 %v3647
      %3729 = vmatpush.bf16.msra.mxu0 %v3645
      %3730 = vmatpush.bf16.msra.mxu0 %v3643
      %3731 = vmatpush.bf16.msra.mxu0 %v3641
      %3732 = vmatpush.bf16.msra.mxu0 %v3639
      %3733 = vmatpush.bf16.msra.mxu0 %v3637
      %3734 = vmatmul.bf16.gmra.mxu0 %v3680
      %v3735 = vpop.f32.mrf.mxu0
      %v3736 = vadd.f32 %v3707, %v3735
      %v3737 = vpop.f32.mrf.mxu0
      %v3738 = vadd.f32 %v3709, %v3737
      %3739 = vmatmul.bf16.gmra.mxu0 %v3683
      %v3740 = vpop.f32.mrf.mxu0
      %v3741 = vadd.f32 %v3712, %v3740
      %v3742 = vpop.f32.mrf.mxu0
      %v3743 = vadd.f32 %v3714, %v3742
      %3744 = vmatmul.bf16.gmra.mxu0 %v3686
      %v3745 = vpop.f32.mrf.mxu0
      %v3746 = vadd.f32 %v3717, %v3745
      %v3747 = vpop.f32.mrf.mxu0
      %v3748 = vadd.f32 %v3719, %v3747
      %3749 = vmatmul.bf16.gmra.mxu0 %v3689
      %v3750 = vpop.f32.mrf.mxu0
      %v3751 = vadd.f32 %v3722, %v3750
      %v3752 = vpop.f32.mrf.mxu0
      %v3753 = vadd.f32 %v3724, %v3752
      %3754 = vdwg.mxu0
      %3755 = vmatpush.bf16.msra.mxu0 %v3636
      %3756 = vmatpush.bf16.msra.mxu0 %v3634
      %3757 = vmatpush.bf16.msra.mxu0 %v3632
      %3758 = vmatpush.bf16.msra.mxu0 %v3630
      %3759 = vmatpush.bf16.msra.mxu0 %v3628
      %3760 = vmatpush.bf16.msra.mxu0 %v3626
      %3761 = vmatpush.bf16.msra.mxu0 %v3624
      %3762 = vmatpush.bf16.msra.mxu0 %v3622
      %3763 = vmatmul.bf16.gmra.mxu0 %v3496
      %v3764 = vpop.f32.mrf.mxu0
      %v3765 = vadd.f32 0.0, %v3764
      %v3766 = vpop.f32.mrf.mxu0
      %v3767 = vadd.f32 0.0, %v3766
      %3768 = vmatmul.bf16.gmra.mxu0 %v3498
      %v3769 = vpop.f32.mrf.mxu0
      %v3770 = vadd.f32 0.0, %v3769
      %v3771 = vpop.f32.mrf.mxu0
      %v3772 = vadd.f32 0.0, %v3771
      %3773 = vmatmul.bf16.gmra.mxu0 %v3500
      %v3774 = vpop.f32.mrf.mxu0
      %v3775 = vadd.f32 0.0, %v3774
      %v3776 = vpop.f32.mrf.mxu0
      %v3777 = vadd.f32 0.0, %v3776
      %3778 = vmatmul.bf16.gmra.mxu0 %v3502
      %v3779 = vpop.f32.mrf.mxu0
      %v3780 = vadd.f32 0.0, %v3779
      %v3781 = vpop.f32.mrf.mxu0
      %v3782 = vadd.f32 0.0, %v3781
      %3783 = vdwg.mxu0
      %3784 = vmatpush.bf16.msra.mxu0 0
      %3785 = vmatpush.bf16.msra.mxu0 %v3695
      %3786 = vmatpush.bf16.msra.mxu0 %v3648
      %3787 = vmatpush.bf16.msra.mxu0 %v3646
      %3788 = vmatpush.bf16.msra.mxu0 %v3644
      %3789 = vmatpush.bf16.msra.mxu0 %v3642
      %3790 = vmatpush.bf16.msra.mxu0 %v3640
      %3791 = vmatpush.bf16.msra.mxu0 %v3638
      %3792 = vmatmul.bf16.gmra.mxu0 %v3680
      %v3793 = vpop.f32.mrf.mxu0
      %v3794 = vadd.f32 %v3765, %v3793
      %v3795 = vpop.f32.mrf.mxu0
      %v3796 = vadd.f32 %v3767, %v3795
      %3797 = vmatmul.bf16.gmra.mxu0 %v3683
      %v3798 = vpop.f32.mrf.mxu0
      %v3799 = vadd.f32 %v3770, %v3798
      %v3800 = vpop.f32.mrf.mxu0
      %v3801 = vadd.f32 %v3772, %v3800
      %3802 = vmatmul.bf16.gmra.mxu0 %v3686
      %v3803 = vpop.f32.mrf.mxu0
      %v3804 = vadd.f32 %v3775, %v3803
      %v3805 = vpop.f32.mrf.mxu0
      %v3806 = vadd.f32 %v3777, %v3805
      %3807 = vmatmul.bf16.gmra.mxu0 %v3689
      %v3808 = vpop.f32.mrf.mxu0
      %v3809 = vadd.f32 %v3780, %v3808
      %v3810 = vpop.f32.mrf.mxu0
      %v3811 = vadd.f32 %v3782, %v3810
      %3812 = vdwg.mxu0
      %v3813 = vadd.f32 %v3354, %v3736
      %v3814 = vadd.f32 %v3412, %v3794
      %v3815 = vadd.f32 %v3356, %v3738
      %v3816 = vadd.f32 %v3414, %v3796
      %v3817 = vadd.f32 %v3359, %v3741
      %v3818 = vadd.f32 %v3417, %v3799
      %v3819 = vadd.f32 %v3361, %v3743
      %v3820 = vadd.f32 %v3419, %v3801
      %v3821 = vadd.f32 %v3364, %v3746
      %v3822 = vadd.f32 %v3422, %v3804
      %v3823 = vadd.f32 %v3366, %v3748
      %v3824 = vadd.f32 %v3424, %v3806
      %v3825 = vadd.f32 %v3369, %v3751
      %v3826 = vadd.f32 %v3427, %v3809
      %v3827 = vadd.f32 %v3371, %v3753
      %v3828 = vadd.f32 %v3429, %v3811
      %vm3829 = vcmask 1044480
      %v3830 = vrot.slane %v2668, 3
      %v3831 = vrot.slane %v2670, 3
      %v3832 = vsel %vm3829, %v3830, %v3831
      %v3833 = vrot.slane %v2669, 3
      %v3834 = vrot.slane %v2671, 3
      %v3835 = vsel %vm3829, %v3833, %v3834
      %v3836 = vrot.slane %v2672, 3
      %v3837 = vrot.slane %v2674, 3
      %v3838 = vsel %vm3829, %v3836, %v3837
      %v3839 = vrot.slane %v2673, 3
      %v3840 = vrot.slane %v2675, 3
      %v3841 = vsel %vm3829, %v3839, %v3840
      %v3842 = vrot.slane %v2676, 3
      %v3843 = vrot.slane %v2678, 3
      %v3844 = vsel %vm3829, %v3842, %v3843
      %v3845 = vrot.slane %v2677, 3
      %v3846 = vrot.slane %v2679, 3
      %v3847 = vsel %vm3829, %v3845, %v3846
      %v3848 = vrot.slane %v2680, 3
      %v3849 = vrot.slane %v2682, 3
      %v3850 = vsel %vm3829, %v3848, %v3849
      %v3851 = vrot.slane %v2681, 3
      %v3852 = vrot.slane %v2683, 3
      %v3853 = vsel %vm3829, %v3851, %v3852
      %v3854 = vrot.slane %v2684, 3
      %v3855 = vrot.slane %v2686, 3
      %v3856 = vsel %vm3829, %v3854, %v3855
      %v3857 = vrot.slane %v2685, 3
      %v3858 = vrot.slane %v2687, 3
      %v3859 = vsel %vm3829, %v3857, %v3858
      %v3860 = vrot.slane %v2688, 3
      %v3861 = vrot.slane %v2690, 3
      %v3862 = vsel %vm3829, %v3860, %v3861
      %v3863 = vrot.slane %v2689, 3
      %v3864 = vrot.slane %v2691, 3
      %v3865 = vsel %vm3829, %v3863, %v3864
      %v3866 = vrot.slane %v2692, 3
      %v3867 = vrot.slane %v2694, 3
      %v3868 = vsel %vm3829, %v3866, %v3867
      %v3869 = vrot.slane %v2693, 3
      %v3870 = vrot.slane %v2695, 3
      %v3871 = vsel %vm3829, %v3869, %v3870
      %v3872 = vrot.slane %v2696, 3
      %v3873 = vrot.slane %v2698, 3
      %v3874 = vsel %vm3829, %v3872, %v3873
      %v3875 = vrot.slane %v2697, 3
      %v3876 = vrot.slane %v2699, 3
      %v3877 = vsel %vm3829, %v3875, %v3876
      %v3894 = vpack.c.bf16 %v3838, %v3832
      %v3895 = vpack.c.bf16 %v3841, %v3835
      %v3896 = vpack.c.bf16 %v3850, %v3844
      %v3897 = vpack.c.bf16 %v3853, %v3847
      %v3898 = vpack.c.bf16 %v3862, %v3856
      %v3899 = vpack.c.bf16 %v3865, %v3859
      %v3900 = vpack.c.bf16 %v3874, %v3868
      %v3901 = vpack.c.bf16 %v3877, %v3871
      %s3902 = scalar_lea.vmem %s4, 696
      %v3903 = vld [vmem:[%s3902] sm:$0xff]
      %v3904 = vld [vmem:[%s3902 + $0x8] sm:$0xff]
      %v3905 = vld [vmem:[%s3902 + $0x10] sm:$0xff]
      %v3906 = vld [vmem:[%s3902 + $0x18] sm:$0xff]
      %v3907 = vld [vmem:[%s3902 + $0x20] sm:$0xff]
      %v3908 = vld [vmem:[%s3902 + $0x28] sm:$0xff]
      %v3909 = vld [vmem:[%s3902 + $0x30] sm:$0xff]
      %v3910 = vld [vmem:[%s3902 + $0x38] sm:$0xff]
      %v3911 = vld [vmem:[%s3902 + $0x40] sm:$0xff]
      %v3912 = vld [vmem:[%s3902 + $0x48] sm:$0xff]
      %v3913 = vld [vmem:[%s3902 + $0x50] sm:$0xff]
      %v3914 = vld [vmem:[%s3902 + $0x58] sm:$0xff]
      %v3915 = vld [vmem:[%s3902 + $0x60] sm:$0xff]
      %v3916 = vld [vmem:[%s3902 + $0x68] sm:$0xff]
      %v3917 = vld [vmem:[%s3902 + $0x70] sm:$0xff]
      %v3918 = vld [vmem:[%s3902 + $0x78] sm:$0xff]
      %v3919 = vld [vmem:[%s3902 + $0x80] sm:$0xff]
      %v3920 = vld [vmem:[%s3902 + $0x88] sm:$0xff]
      %v3921 = vld [vmem:[%s3902 + $0x90] sm:$0xff]
      %v3922 = vld [vmem:[%s3902 + $0x98] sm:$0xff]
      %v3923 = vld [vmem:[%s3902 + $0xa0] sm:$0xff]
      %v3924 = vld [vmem:[%s3902 + $0xa8] sm:$0xff]
      %v3925 = vld [vmem:[%s3902 + $0xb0] sm:$0xff]
      %v3926 = vld [vmem:[%s3902 + $0xb8] sm:$0xff]
      %v3927 = vld [vmem:[%s3902 + $0xc0] sm:$0xff]
      %v3928 = vld [vmem:[%s3902 + $0xc8] sm:$0xff]
      %v3929 = vld [vmem:[%s3902 + $0xd0] sm:$0xff]
      %v3930 = vld [vmem:[%s3902 + $0xd8] sm:$0xff]
      %v3931 = vld [vmem:[%s3902 + $0xe0] sm:$0x77]
      %v3961 = vunpack.c.l.b16 %v3903
      %v3962 = vunpack.c.h.b16 %v3903
      %v3963 = vunpack.c.l.b16 %v3904
      %v3964 = vunpack.c.h.b16 %v3904
      %v3965 = vunpack.c.l.b16 %v3905
      %v3966 = vunpack.c.h.b16 %v3905
      %v3967 = vunpack.c.l.b16 %v3906
      %v3968 = vunpack.c.h.b16 %v3906
      %v3969 = vunpack.c.l.b16 %v3907
      %v3970 = vunpack.c.h.b16 %v3907
      %v3971 = vunpack.c.l.b16 %v3908
      %v3972 = vunpack.c.h.b16 %v3908
      %v3973 = vunpack.c.l.b16 %v3909
      %v3974 = vunpack.c.h.b16 %v3909
      %v3975 = vunpack.c.l.b16 %v3910
      %v3976 = vunpack.c.h.b16 %v3910
      %v3977 = vunpack.c.l.b16 %v3911
      %v3978 = vunpack.c.h.b16 %v3911
      %v3979 = vunpack.c.l.b16 %v3912
      %v3980 = vunpack.c.h.b16 %v3912
      %v3981 = vunpack.c.l.b16 %v3913
      %v3982 = vunpack.c.h.b16 %v3913
      %v3983 = vunpack.c.l.b16 %v3914
      %v3984 = vunpack.c.h.b16 %v3914
      %v3985 = vunpack.c.l.b16 %v3915
      %v3986 = vunpack.c.h.b16 %v3915
      %v3987 = vunpack.c.l.b16 %v3916
      %v3988 = vunpack.c.h.b16 %v3916
      %v3989 = vunpack.c.l.b16 %v3917
      %v3990 = vunpack.c.h.b16 %v3917
      %v3991 = vunpack.c.l.b16 %v3918
      %v3992 = vunpack.c.h.b16 %v3918
      %v3993 = vunpack.c.l.b16 %v3919
      %v3994 = vunpack.c.h.b16 %v3919
      %v3995 = vunpack.c.l.b16 %v3920
      %v3996 = vunpack.c.h.b16 %v3920
      %v3997 = vunpack.c.l.b16 %v3921
      %v3998 = vunpack.c.h.b16 %v3921
      %v3999 = vunpack.c.l.b16 %v3922
      %v4000 = vunpack.c.h.b16 %v3922
      %v4001 = vunpack.c.l.b16 %v3923
      %v4002 = vunpack.c.h.b16 %v3923
      %v4003 = vunpack.c.l.b16 %v3924
      %v4004 = vunpack.c.h.b16 %v3924
      %v4005 = vunpack.c.l.b16 %v3925
      %v4006 = vunpack.c.h.b16 %v3925
      %v4007 = vunpack.c.l.b16 %v3926
      %v4008 = vunpack.c.h.b16 %v3926
      %v4009 = vunpack.c.l.b16 %v3927
      %v4010 = vunpack.c.h.b16 %v3927
      %v4011 = vunpack.c.l.b16 %v3928
      %v4012 = vunpack.c.h.b16 %v3928
      %v4013 = vunpack.c.l.b16 %v3929
      %v4014 = vunpack.c.h.b16 %v3929
      %v4015 = vunpack.c.l.b16 %v3930
      %v4016 = vunpack.c.h.b16 %v3930
      %v4017 = vunpack.c.l.b16 %v3931
      %v4018 = vunpack.c.h.b16 %v3931
      %v4019 = vpack.c.b16 %v3963, %v3961
      %v4020 = vpack.c.b16 %v3964, %v3962
      %v4021 = vpack.c.b16 %v3967, %v3965
      %v4022 = vpack.c.b16 %v3968, %v3966
      %v4023 = vpack.c.b16 %v3971, %v3969
      %v4024 = vpack.c.b16 %v3972, %v3970
      %v4025 = vpack.c.b16 %v3975, %v3973
      %v4026 = vpack.c.b16 %v3976, %v3974
      %v4027 = vpack.c.b16 %v3979, %v3977
      %v4028 = vpack.c.b16 %v3980, %v3978
      %v4029 = vpack.c.b16 %v3983, %v3981
      %v4030 = vpack.c.b16 %v3984, %v3982
      %v4031 = vpack.c.b16 %v3987, %v3985
      %v4032 = vpack.c.b16 %v3988, %v3986
      %v4033 = vpack.c.b16 %v3991, %v3989
      %v4034 = vpack.c.b16 %v3992, %v3990
      %v4035 = vpack.c.b16 %v3995, %v3993
      %v4036 = vpack.c.b16 %v3996, %v3994
      %v4037 = vpack.c.b16 %v3999, %v3997
      %v4038 = vpack.c.b16 %v4000, %v3998
      %v4039 = vpack.c.b16 %v4003, %v4001
      %v4040 = vpack.c.b16 %v4004, %v4002
      %v4041 = vpack.c.b16 %v4007, %v4005
      %v4042 = vpack.c.b16 %v4008, %v4006
      %v4043 = vpack.c.b16 %v4011, %v4009
      %v4044 = vpack.c.b16 %v4012, %v4010
      %v4045 = vpack.c.b16 %v4015, %v4013
      %v4046 = vpack.c.b16 %v4016, %v4014
      %v4047 = vpack.c.b16 %v4017, %v4017
      %v4048 = vpack.c.b16 %v4018, %v4018
      %v4078 = vsel %vm3016, %v3895, 0
      %v4081 = vsel %vm3016, %v3897, 0
      %v4084 = vsel %vm3016, %v3899, 0
      %v4087 = vsel %vm3016, %v3901, 0
      %v4090 = vsel %vm3029, %v4047, 0
      %v4093 = vsel %vm3029, %v4048, 0
      %4095 = vmatpush.bf16.msra.mxu0 %v4033
      %4096 = vmatpush.bf16.msra.mxu0 %v4031
      %4097 = vmatpush.bf16.msra.mxu0 %v4029
      %4098 = vmatpush.bf16.msra.mxu0 %v4027
      %4099 = vmatpush.bf16.msra.mxu0 %v4025
      %4100 = vmatpush.bf16.msra.mxu0 %v4023
      %4101 = vmatpush.bf16.msra.mxu0 %v4021
      %4102 = vmatpush.bf16.msra.mxu0 %v4019
      %4103 = vmatmul.bf16.gmra.mxu0 %v3894
      %v4104 = vpop.f32.mrf.mxu0
      %v4105 = vadd.f32 0.0, %v4104
      %v4106 = vpop.f32.mrf.mxu0
      %v4107 = vadd.f32 0.0, %v4106
      %4108 = vmatmul.bf16.gmra.mxu0 %v3896
      %v4109 = vpop.f32.mrf.mxu0
      %v4110 = vadd.f32 0.0, %v4109
      %v4111 = vpop.f32.mrf.mxu0
      %v4112 = vadd.f32 0.0, %v4111
      %4113 = vmatmul.bf16.gmra.mxu0 %v3898
      %v4114 = vpop.f32.mrf.mxu0
      %v4115 = vadd.f32 0.0, %v4114
      %v4116 = vpop.f32.mrf.mxu0
      %v4117 = vadd.f32 0.0, %v4116
      %4118 = vmatmul.bf16.gmra.mxu0 %v3900
      %v4119 = vpop.f32.mrf.mxu0
      %v4120 = vadd.f32 0.0, %v4119
      %v4121 = vpop.f32.mrf.mxu0
      %v4122 = vadd.f32 0.0, %v4121
      %4123 = vdwg.mxu0
      %4124 = vmatpush.bf16.msra.mxu0 0
      %4125 = vmatpush.bf16.msra.mxu0 %v4090
      %4126 = vmatpush.bf16.msra.mxu0 %v4045
      %4127 = vmatpush.bf16.msra.mxu0 %v4043
      %4128 = vmatpush.bf16.msra.mxu0 %v4041
      %4129 = vmatpush.bf16.msra.mxu0 %v4039
      %4130 = vmatpush.bf16.msra.mxu0 %v4037
      %4131 = vmatpush.bf16.msra.mxu0 %v4035
      %4132 = vmatmul.bf16.gmra.mxu0 %v4078
      %v4133 = vpop.f32.mrf.mxu0
      %v4134 = vadd.f32 %v4105, %v4133
      %v4135 = vpop.f32.mrf.mxu0
      %v4136 = vadd.f32 %v4107, %v4135
      %4137 = vmatmul.bf16.gmra.mxu0 %v4081
      %v4138 = vpop.f32.mrf.mxu0
      %v4139 = vadd.f32 %v4110, %v4138
      %v4140 = vpop.f32.mrf.mxu0
      %v4141 = vadd.f32 %v4112, %v4140
      %4142 = vmatmul.bf16.gmra.mxu0 %v4084
      %v4143 = vpop.f32.mrf.mxu0
      %v4144 = vadd.f32 %v4115, %v4143
      %v4145 = vpop.f32.mrf.mxu0
      %v4146 = vadd.f32 %v4117, %v4145
      %4147 = vmatmul.bf16.gmra.mxu0 %v4087
      %v4148 = vpop.f32.mrf.mxu0
      %v4149 = vadd.f32 %v4120, %v4148
      %v4150 = vpop.f32.mrf.mxu0
      %v4151 = vadd.f32 %v4122, %v4150
      %4152 = vdwg.mxu0
      %4153 = vmatpush.bf16.msra.mxu0 %v4034
      %4154 = vmatpush.bf16.msra.mxu0 %v4032
      %4155 = vmatpush.bf16.msra.mxu0 %v4030
      %4156 = vmatpush.bf16.msra.mxu0 %v4028
      %4157 = vmatpush.bf16.msra.mxu0 %v4026
      %4158 = vmatpush.bf16.msra.mxu0 %v4024
      %4159 = vmatpush.bf16.msra.mxu0 %v4022
      %4160 = vmatpush.bf16.msra.mxu0 %v4020
      %4161 = vmatmul.bf16.gmra.mxu0 %v3894
      %v4162 = vpop.f32.mrf.mxu0
      %v4163 = vadd.f32 0.0, %v4162
      %v4164 = vpop.f32.mrf.mxu0
      %v4165 = vadd.f32 0.0, %v4164
      %4166 = vmatmul.bf16.gmra.mxu0 %v3896
      %v4167 = vpop.f32.mrf.mxu0
      %v4168 = vadd.f32 0.0, %v4167
      %v4169 = vpop.f32.mrf.mxu0
      %v4170 = vadd.f32 0.0, %v4169
      %4171 = vmatmul.bf16.gmra.mxu0 %v3898
      %v4172 = vpop.f32.mrf.mxu0
      %v4173 = vadd.f32 0.0, %v4172
      %v4174 = vpop.f32.mrf.mxu0
      %v4175 = vadd.f32 0.0, %v4174
      %4176 = vmatmul.bf16.gmra.mxu0 %v3900
      %v4177 = vpop.f32.mrf.mxu0
      %v4178 = vadd.f32 0.0, %v4177
      %v4179 = vpop.f32.mrf.mxu0
      %v4180 = vadd.f32 0.0, %v4179
      %4181 = vdwg.mxu0
      %4182 = vmatpush.bf16.msra.mxu0 0
      %4183 = vmatpush.bf16.msra.mxu0 %v4093
      %4184 = vmatpush.bf16.msra.mxu0 %v4046
      %4185 = vmatpush.bf16.msra.mxu0 %v4044
      %4186 = vmatpush.bf16.msra.mxu0 %v4042
      %4187 = vmatpush.bf16.msra.mxu0 %v4040
      %4188 = vmatpush.bf16.msra.mxu0 %v4038
      %4189 = vmatpush.bf16.msra.mxu0 %v4036
      %4190 = vmatmul.bf16.gmra.mxu0 %v4078
      %v4191 = vpop.f32.mrf.mxu0
      %v4192 = vadd.f32 %v4163, %v4191
      %v4193 = vpop.f32.mrf.mxu0
      %v4194 = vadd.f32 %v4165, %v4193
      %4195 = vmatmul.bf16.gmra.mxu0 %v4081
      %v4196 = vpop.f32.mrf.mxu0
      %v4197 = vadd.f32 %v4168, %v4196
      %v4198 = vpop.f32.mrf.mxu0
      %v4199 = vadd.f32 %v4170, %v4198
      %4200 = vmatmul.bf16.gmra.mxu0 %v4084
      %v4201 = vpop.f32.mrf.mxu0
      %v4202 = vadd.f32 %v4173, %v4201
      %v4203 = vpop.f32.mrf.mxu0
      %v4204 = vadd.f32 %v4175, %v4203
      %4205 = vmatmul.bf16.gmra.mxu0 %v4087
      %v4206 = vpop.f32.mrf.mxu0
      %v4207 = vadd.f32 %v4178, %v4206
      %v4208 = vpop.f32.mrf.mxu0
      %v4209 = vadd.f32 %v4180, %v4208
      %4210 = vdwg.mxu0
      %v4211 = vadd.f32 %v3813, %v4134
      %v4212 = vadd.f32 %v3814, %v4192
      %v4213 = vadd.f32 %v3815, %v4136
      %v4214 = vadd.f32 %v3816, %v4194
      %v4215 = vadd.f32 %v3817, %v4139
      %v4216 = vadd.f32 %v3818, %v4197
      %v4217 = vadd.f32 %v3819, %v4141
      %v4218 = vadd.f32 %v3820, %v4199
      %v4219 = vadd.f32 %v3821, %v4144
      %v4220 = vadd.f32 %v3822, %v4202
      %v4221 = vadd.f32 %v3823, %v4146
      %v4222 = vadd.f32 %v3824, %v4204
      %v4223 = vadd.f32 %v3825, %v4149
      %v4224 = vadd.f32 %v3826, %v4207
      %v4225 = vadd.f32 %v3827, %v4151
      %v4226 = vadd.f32 %v3828, %v4209
      %v4227 = vrot.slane %v2668, 4
      %v4228 = vrot.slane %v2670, 4
      %v4229 = vsel %vm399, %v4227, %v4228
      %v4230 = vrot.slane %v2669, 4
      %v4231 = vrot.slane %v2671, 4
      %v4232 = vsel %vm399, %v4230, %v4231
      %v4233 = vrot.slane %v2672, 4
      %v4234 = vrot.slane %v2674, 4
      %v4235 = vsel %vm399, %v4233, %v4234
      %v4236 = vrot.slane %v2673, 4
      %v4237 = vrot.slane %v2675, 4
      %v4238 = vsel %vm399, %v4236, %v4237
      %v4239 = vrot.slane %v2676, 4
      %v4240 = vrot.slane %v2678, 4
      %v4241 = vsel %vm399, %v4239, %v4240
      %v4242 = vrot.slane %v2677, 4
      %v4243 = vrot.slane %v2679, 4
      %v4244 = vsel %vm399, %v4242, %v4243
      %v4245 = vrot.slane %v2680, 4
      %v4246 = vrot.slane %v2682, 4
      %v4247 = vsel %vm399, %v4245, %v4246
      %v4248 = vrot.slane %v2681, 4
      %v4249 = vrot.slane %v2683, 4
      %v4250 = vsel %vm399, %v4248, %v4249
      %v4251 = vrot.slane %v2684, 4
      %v4252 = vrot.slane %v2686, 4
      %v4253 = vsel %vm399, %v4251, %v4252
      %v4254 = vrot.slane %v2685, 4
      %v4255 = vrot.slane %v2687, 4
      %v4256 = vsel %vm399, %v4254, %v4255
      %v4257 = vrot.slane %v2688, 4
      %v4258 = vrot.slane %v2690, 4
      %v4259 = vsel %vm399, %v4257, %v4258
      %v4260 = vrot.slane %v2689, 4
      %v4261 = vrot.slane %v2691, 4
      %v4262 = vsel %vm399, %v4260, %v4261
      %v4263 = vrot.slane %v2692, 4
      %v4264 = vrot.slane %v2694, 4
      %v4265 = vsel %vm399, %v4263, %v4264
      %v4266 = vrot.slane %v2693, 4
      %v4267 = vrot.slane %v2695, 4
      %v4268 = vsel %vm399, %v4266, %v4267
      %v4269 = vrot.slane %v2696, 4
      %v4270 = vrot.slane %v2698, 4
      %v4271 = vsel %vm399, %v4269, %v4270
      %v4272 = vrot.slane %v2697, 4
      %v4273 = vrot.slane %v2699, 4
      %v4274 = vsel %vm399, %v4272, %v4273
      %v4291 = vpack.c.bf16 %v4235, %v4229
      %v4292 = vpack.c.bf16 %v4238, %v4232
      %v4293 = vpack.c.bf16 %v4247, %v4241
      %v4294 = vpack.c.bf16 %v4250, %v4244
      %v4295 = vpack.c.bf16 %v4259, %v4253
      %v4296 = vpack.c.bf16 %v4262, %v4256
      %v4297 = vpack.c.bf16 %v4271, %v4265
      %v4298 = vpack.c.bf16 %v4274, %v4268
      %s4299 = scalar_lea.vmem %s4, 928
      %v4300 = vld [vmem:[%s4299] sm:$0xff]
      %v4301 = vld [vmem:[%s4299 + $0x8] sm:$0xff]
      %v4302 = vld [vmem:[%s4299 + $0x10] sm:$0xff]
      %v4303 = vld [vmem:[%s4299 + $0x18] sm:$0xff]
      %v4304 = vld [vmem:[%s4299 + $0x20] sm:$0xff]
      %v4305 = vld [vmem:[%s4299 + $0x28] sm:$0xff]
      %v4306 = vld [vmem:[%s4299 + $0x30] sm:$0xff]
      %v4307 = vld [vmem:[%s4299 + $0x38] sm:$0xff]
      %v4308 = vld [vmem:[%s4299 + $0x40] sm:$0xff]
      %v4309 = vld [vmem:[%s4299 + $0x48] sm:$0xff]
      %v4310 = vld [vmem:[%s4299 + $0x50] sm:$0xff]
      %v4311 = vld [vmem:[%s4299 + $0x58] sm:$0xff]
      %v4312 = vld [vmem:[%s4299 + $0x60] sm:$0xff]
      %v4313 = vld [vmem:[%s4299 + $0x68] sm:$0xff]
      %v4314 = vld [vmem:[%s4299 + $0x70] sm:$0xff]
      %v4315 = vld [vmem:[%s4299 + $0x78] sm:$0xff]
      %v4316 = vld [vmem:[%s4299 + $0x80] sm:$0xff]
      %v4317 = vld [vmem:[%s4299 + $0x88] sm:$0xff]
      %v4318 = vld [vmem:[%s4299 + $0x90] sm:$0xff]
      %v4319 = vld [vmem:[%s4299 + $0x98] sm:$0xff]
      %v4320 = vld [vmem:[%s4299 + $0xa0] sm:$0xff]
      %v4321 = vld [vmem:[%s4299 + $0xa8] sm:$0xff]
      %v4322 = vld [vmem:[%s4299 + $0xb0] sm:$0xff]
      %v4323 = vld [vmem:[%s4299 + $0xb8] sm:$0xff]
      %v4324 = vld [vmem:[%s4299 + $0xc0] sm:$0xff]
      %v4325 = vld [vmem:[%s4299 + $0xc8] sm:$0xff]
      %v4326 = vld [vmem:[%s4299 + $0xd0] sm:$0xff]
      %v4327 = vld [vmem:[%s4299 + $0xd8] sm:$0xff]
      %v4328 = vld [vmem:[%s4299 + $0xe0] sm:$0x77]
      %v4358 = vunpack.c.l.b16 %v4300
      %v4359 = vunpack.c.h.b16 %v4300
      %v4360 = vunpack.c.l.b16 %v4301
      %v4361 = vunpack.c.h.b16 %v4301
      %v4362 = vunpack.c.l.b16 %v4302
      %v4363 = vunpack.c.h.b16 %v4302
      %v4364 = vunpack.c.l.b16 %v4303
      %v4365 = vunpack.c.h.b16 %v4303
      %v4366 = vunpack.c.l.b16 %v4304
      %v4367 = vunpack.c.h.b16 %v4304
      %v4368 = vunpack.c.l.b16 %v4305
      %v4369 = vunpack.c.h.b16 %v4305
      %v4370 = vunpack.c.l.b16 %v4306
      %v4371 = vunpack.c.h.b16 %v4306
      %v4372 = vunpack.c.l.b16 %v4307
      %v4373 = vunpack.c.h.b16 %v4307
      %v4374 = vunpack.c.l.b16 %v4308
      %v4375 = vunpack.c.h.b16 %v4308
      %v4376 = vunpack.c.l.b16 %v4309
      %v4377 = vunpack.c.h.b16 %v4309
      %v4378 = vunpack.c.l.b16 %v4310
      %v4379 = vunpack.c.h.b16 %v4310
      %v4380 = vunpack.c.l.b16 %v4311
      %v4381 = vunpack.c.h.b16 %v4311
      %v4382 = vunpack.c.l.b16 %v4312
      %v4383 = vunpack.c.h.b16 %v4312
      %v4384 = vunpack.c.l.b16 %v4313
      %v4385 = vunpack.c.h.b16 %v4313
      %v4386 = vunpack.c.l.b16 %v4314
      %v4387 = vunpack.c.h.b16 %v4314
      %v4388 = vunpack.c.l.b16 %v4315
      %v4389 = vunpack.c.h.b16 %v4315
      %v4390 = vunpack.c.l.b16 %v4316
      %v4391 = vunpack.c.h.b16 %v4316
      %v4392 = vunpack.c.l.b16 %v4317
      %v4393 = vunpack.c.h.b16 %v4317
      %v4394 = vunpack.c.l.b16 %v4318
      %v4395 = vunpack.c.h.b16 %v4318
      %v4396 = vunpack.c.l.b16 %v4319
      %v4397 = vunpack.c.h.b16 %v4319
      %v4398 = vunpack.c.l.b16 %v4320
      %v4399 = vunpack.c.h.b16 %v4320
      %v4400 = vunpack.c.l.b16 %v4321
      %v4401 = vunpack.c.h.b16 %v4321
      %v4402 = vunpack.c.l.b16 %v4322
      %v4403 = vunpack.c.h.b16 %v4322
      %v4404 = vunpack.c.l.b16 %v4323
      %v4405 = vunpack.c.h.b16 %v4323
      %v4406 = vunpack.c.l.b16 %v4324
      %v4407 = vunpack.c.h.b16 %v4324
      %v4408 = vunpack.c.l.b16 %v4325
      %v4409 = vunpack.c.h.b16 %v4325
      %v4410 = vunpack.c.l.b16 %v4326
      %v4411 = vunpack.c.h.b16 %v4326
      %v4412 = vunpack.c.l.b16 %v4327
      %v4413 = vunpack.c.h.b16 %v4327
      %v4414 = vunpack.c.l.b16 %v4328
      %v4415 = vunpack.c.h.b16 %v4328
      %v4416 = vpack.c.b16 %v4360, %v4358
      %v4417 = vpack.c.b16 %v4361, %v4359
      %v4418 = vpack.c.b16 %v4364, %v4362
      %v4419 = vpack.c.b16 %v4365, %v4363
      %v4420 = vpack.c.b16 %v4368, %v4366
      %v4421 = vpack.c.b16 %v4369, %v4367
      %v4422 = vpack.c.b16 %v4372, %v4370
      %v4423 = vpack.c.b16 %v4373, %v4371
      %v4424 = vpack.c.b16 %v4376, %v4374
      %v4425 = vpack.c.b16 %v4377, %v4375
      %v4426 = vpack.c.b16 %v4380, %v4378
      %v4427 = vpack.c.b16 %v4381, %v4379
      %v4428 = vpack.c.b16 %v4384, %v4382
      %v4429 = vpack.c.b16 %v4385, %v4383
      %v4430 = vpack.c.b16 %v4388, %v4386
      %v4431 = vpack.c.b16 %v4389, %v4387
      %v4432 = vpack.c.b16 %v4392, %v4390
      %v4433 = vpack.c.b16 %v4393, %v4391
      %v4434 = vpack.c.b16 %v4396, %v4394
      %v4435 = vpack.c.b16 %v4397, %v4395
      %v4436 = vpack.c.b16 %v4400, %v4398
      %v4437 = vpack.c.b16 %v4401, %v4399
      %v4438 = vpack.c.b16 %v4404, %v4402
      %v4439 = vpack.c.b16 %v4405, %v4403
      %v4440 = vpack.c.b16 %v4408, %v4406
      %v4441 = vpack.c.b16 %v4409, %v4407
      %v4442 = vpack.c.b16 %v4412, %v4410
      %v4443 = vpack.c.b16 %v4413, %v4411
      %v4444 = vpack.c.b16 %v4414, %v4414
      %v4445 = vpack.c.b16 %v4415, %v4415
      %v4475 = vsel %vm3016, %v4292, 0
      %v4478 = vsel %vm3016, %v4294, 0
      %v4481 = vsel %vm3016, %v4296, 0
      %v4484 = vsel %vm3016, %v4298, 0
      %v4487 = vsel %vm3029, %v4444, 0
      %v4490 = vsel %vm3029, %v4445, 0
      %4492 = vmatpush.bf16.msra.mxu0 %v4430
      %4493 = vmatpush.bf16.msra.mxu0 %v4428
      %4494 = vmatpush.bf16.msra.mxu0 %v4426
      %4495 = vmatpush.bf16.msra.mxu0 %v4424
      %4496 = vmatpush.bf16.msra.mxu0 %v4422
      %4497 = vmatpush.bf16.msra.mxu0 %v4420
      %4498 = vmatpush.bf16.msra.mxu0 %v4418
      %4499 = vmatpush.bf16.msra.mxu0 %v4416
      %4500 = vmatmul.bf16.gmra.mxu0 %v4291
      %v4501 = vpop.f32.mrf.mxu0
      %v4502 = vadd.f32 0.0, %v4501
      %v4503 = vpop.f32.mrf.mxu0
      %v4504 = vadd.f32 0.0, %v4503
      %4505 = vmatmul.bf16.gmra.mxu0 %v4293
      %v4506 = vpop.f32.mrf.mxu0
      %v4507 = vadd.f32 0.0, %v4506
      %v4508 = vpop.f32.mrf.mxu0
      %v4509 = vadd.f32 0.0, %v4508
      %4510 = vmatmul.bf16.gmra.mxu0 %v4295
      %v4511 = vpop.f32.mrf.mxu0
      %v4512 = vadd.f32 0.0, %v4511
      %v4513 = vpop.f32.mrf.mxu0
      %v4514 = vadd.f32 0.0, %v4513
      %4515 = vmatmul.bf16.gmra.mxu0 %v4297
      %v4516 = vpop.f32.mrf.mxu0
      %v4517 = vadd.f32 0.0, %v4516
      %v4518 = vpop.f32.mrf.mxu0
      %v4519 = vadd.f32 0.0, %v4518
      %4520 = vdwg.mxu0
      %4521 = vmatpush.bf16.msra.mxu0 0
      %4522 = vmatpush.bf16.msra.mxu0 %v4487
      %4523 = vmatpush.bf16.msra.mxu0 %v4442
      %4524 = vmatpush.bf16.msra.mxu0 %v4440
      %4525 = vmatpush.bf16.msra.mxu0 %v4438
      %4526 = vmatpush.bf16.msra.mxu0 %v4436
      %4527 = vmatpush.bf16.msra.mxu0 %v4434
      %4528 = vmatpush.bf16.msra.mxu0 %v4432
      %4529 = vmatmul.bf16.gmra.mxu0 %v4475
      %v4530 = vpop.f32.mrf.mxu0
      %v4531 = vadd.f32 %v4502, %v4530
      %v4532 = vpop.f32.mrf.mxu0
      %v4533 = vadd.f32 %v4504, %v4532
      %4534 = vmatmul.bf16.gmra.mxu0 %v4478
      %v4535 = vpop.f32.mrf.mxu0
      %v4536 = vadd.f32 %v4507, %v4535
      %v4537 = vpop.f32.mrf.mxu0
      %v4538 = vadd.f32 %v4509, %v4537
      %4539 = vmatmul.bf16.gmra.mxu0 %v4481
      %v4540 = vpop.f32.mrf.mxu0
      %v4541 = vadd.f32 %v4512, %v4540
      %v4542 = vpop.f32.mrf.mxu0
      %v4543 = vadd.f32 %v4514, %v4542
      %4544 = vmatmul.bf16.gmra.mxu0 %v4484
      %v4545 = vpop.f32.mrf.mxu0
      %v4546 = vadd.f32 %v4517, %v4545
      %v4547 = vpop.f32.mrf.mxu0
      %v4548 = vadd.f32 %v4519, %v4547
      %4549 = vdwg.mxu0
      %4550 = vmatpush.bf16.msra.mxu0 %v4431
      %4551 = vmatpush.bf16.msra.mxu0 %v4429
      %4552 = vmatpush.bf16.msra.mxu0 %v4427
      %4553 = vmatpush.bf16.msra.mxu0 %v4425
      %4554 = vmatpush.bf16.msra.mxu0 %v4423
      %4555 = vmatpush.bf16.msra.mxu0 %v4421
      %4556 = vmatpush.bf16.msra.mxu0 %v4419
      %4557 = vmatpush.bf16.msra.mxu0 %v4417
      %4558 = vmatmul.bf16.gmra.mxu0 %v4291
      %v4559 = vpop.f32.mrf.mxu0
      %v4560 = vadd.f32 0.0, %v4559
      %v4561 = vpop.f32.mrf.mxu0
      %v4562 = vadd.f32 0.0, %v4561
      %4563 = vmatmul.bf16.gmra.mxu0 %v4293
      %v4564 = vpop.f32.mrf.mxu0
      %v4565 = vadd.f32 0.0, %v4564
      %v4566 = vpop.f32.mrf.mxu0
      %v4567 = vadd.f32 0.0, %v4566
      %4568 = vmatmul.bf16.gmra.mxu0 %v4295
      %v4569 = vpop.f32.mrf.mxu0
      %v4570 = vadd.f32 0.0, %v4569
      %v4571 = vpop.f32.mrf.mxu0
      %v4572 = vadd.f32 0.0, %v4571
      %4573 = vmatmul.bf16.gmra.mxu0 %v4297
      %v4574 = vpop.f32.mrf.mxu0
      %v4575 = vadd.f32 0.0, %v4574
      %v4576 = vpop.f32.mrf.mxu0
      %v4577 = vadd.f32 0.0, %v4576
      %4578 = vdwg.mxu0
      %4579 = vmatpush.bf16.msra.mxu0 0
      %4580 = vmatpush.bf16.msra.mxu0 %v4490
      %4581 = vmatpush.bf16.msra.mxu0 %v4443
      %4582 = vmatpush.bf16.msra.mxu0 %v4441
      %4583 = vmatpush.bf16.msra.mxu0 %v4439
      %4584 = vmatpush.bf16.msra.mxu0 %v4437
      %4585 = vmatpush.bf16.msra.mxu0 %v4435
      %4586 = vmatpush.bf16.msra.mxu0 %v4433
      %4587 = vmatmul.bf16.gmra.mxu0 %v4475
      %v4588 = vpop.f32.mrf.mxu0
      %v4589 = vadd.f32 %v4560, %v4588
      %v4590 = vpop.f32.mrf.mxu0
      %v4591 = vadd.f32 %v4562, %v4590
      %4592 = vmatmul.bf16.gmra.mxu0 %v4478
      %v4593 = vpop.f32.mrf.mxu0
      %v4594 = vadd.f32 %v4565, %v4593
      %v4595 = vpop.f32.mrf.mxu0
      %v4596 = vadd.f32 %v4567, %v4595
      %4597 = vmatmul.bf16.gmra.mxu0 %v4481
      %v4598 = vpop.f32.mrf.mxu0
      %v4599 = vadd.f32 %v4570, %v4598
      %v4600 = vpop.f32.mrf.mxu0
      %v4601 = vadd.f32 %v4572, %v4600
      %4602 = vmatmul.bf16.gmra.mxu0 %v4484
      %v4603 = vpop.f32.mrf.mxu0
      %v4604 = vadd.f32 %v4575, %v4603
      %v4605 = vpop.f32.mrf.mxu0
      %v4606 = vadd.f32 %v4577, %v4605
      %4607 = vdwg.mxu0
      %v4608 = vadd.f32 %v4211, %v4531
      %v4609 = vadd.f32 %v4212, %v4589
      %v4610 = vadd.f32 %v4213, %v4533
      %v4611 = vadd.f32 %v4214, %v4591
      %v4612 = vadd.f32 %v4215, %v4536
      %v4613 = vadd.f32 %v4216, %v4594
      %v4614 = vadd.f32 %v4217, %v4538
      %v4615 = vadd.f32 %v4218, %v4596
      %v4616 = vadd.f32 %v4219, %v4541
      %v4617 = vadd.f32 %v4220, %v4599
      %v4618 = vadd.f32 %v4221, %v4543
      %v4619 = vadd.f32 %v4222, %v4601
      %v4620 = vadd.f32 %v4223, %v4546
      %v4621 = vadd.f32 %v4224, %v4604
      %v4622 = vadd.f32 %v4225, %v4548
      %v4623 = vadd.f32 %v4226, %v4606
      %v4624 = vld [vmem:[%s5] sm:$0x3]
      %v4626 = vperm.slane %v4624, 0
      %v4627 = vperm.slane %v4624, 1
      %v4630 = vadd.f32 %v4608, %v4626
      %v4631 = vadd.f32 %v4609, %v4627
      %v4632 = vadd.f32 %v4610, %v4626
      %v4633 = vadd.f32 %v4611, %v4627
      %v4634 = vadd.f32 %v4612, %v4626
      %v4635 = vadd.f32 %v4613, %v4627
      %v4636 = vadd.f32 %v4614, %v4626
      %v4637 = vadd.f32 %v4615, %v4627
      %v4638 = vadd.f32 %v4616, %v4626
      %v4639 = vadd.f32 %v4617, %v4627
      %v4640 = vadd.f32 %v4618, %v4626
      %v4641 = vadd.f32 %v4619, %v4627
      %v4642 = vadd.f32 %v4620, %v4626
      %v4643 = vadd.f32 %v4621, %v4627
      %v4644 = vadd.f32 %v4622, %v4626
      %v4645 = vadd.f32 %v4623, %v4627
      %v4646 = vmax.f32 %v4630, 0.0
      %v4647 = vmax.f32 %v4631, 0.0
      %v4648 = vmax.f32 %v4632, 0.0
      %v4649 = vmax.f32 %v4633, 0.0
      %v4650 = vmax.f32 %v4634, 0.0
      %v4651 = vmax.f32 %v4635, 0.0
      %v4652 = vmax.f32 %v4636, 0.0
      %v4653 = vmax.f32 %v4637, 0.0
      %v4654 = vmax.f32 %v4638, 0.0
      %v4655 = vmax.f32 %v4639, 0.0
      %v4656 = vmax.f32 %v4640, 0.0
      %v4657 = vmax.f32 %v4641, 0.0
      %v4658 = vmax.f32 %v4642, 0.0
      %v4659 = vmax.f32 %v4643, 0.0
      %v4660 = vmax.f32 %v4644, 0.0
      %v4661 = vmax.f32 %v4645, 0.0
      %4662 = vst [vmem:[%s258] sm:$0xff] %v4646
      %vm4663 = vcmask 261120
      %4664 = vst.msk [vmem:[%s258 + $0x8] sm:$0xff] %vm4663, %v4647
      %4665 = vst [vmem:[%s258 + $0x10] sm:$0xff] %v4648
      %4666 = vst.msk [vmem:[%s258 + $0x18] sm:$0xff] %vm4663, %v4649
      %4667 = vst [vmem:[%s258 + $0x20] sm:$0xff] %v4650
      %4668 = vst.msk [vmem:[%s258 + $0x28] sm:$0xff] %vm4663, %v4651
      %4669 = vst [vmem:[%s258 + $0x30] sm:$0xff] %v4652
      %4670 = vst.msk [vmem:[%s258 + $0x38] sm:$0xff] %vm4663, %v4653
      %4671 = vst [vmem:[%s258 + $0x40] sm:$0xff] %v4654
      %4672 = vst.msk [vmem:[%s258 + $0x48] sm:$0xff] %vm4663, %v4655
      %4673 = vst [vmem:[%s258 + $0x50] sm:$0xff] %v4656
      %4674 = vst.msk [vmem:[%s258 + $0x58] sm:$0xff] %vm4663, %v4657
      %4675 = vst [vmem:[%s258 + $0x60] sm:$0xff] %v4658
      %4676 = vst.msk [vmem:[%s258 + $0x68] sm:$0xff] %vm4663, %v4659
      %4677 = vst [vmem:[%s258 + $0x70] sm:$0xff] %v4660
      %4678 = vst.msk [vmem:[%s258 + $0x78] sm:$0xff] %vm4663, %v4661
      %s4679 = smul.u32 8, %s17
      %p4680 = scmp.lt.s32.totalorder %s4679, 15
      %s4681 = scalar_select %p4680, %s4679, 15
      %s4682 = smul.addr %s4681, 2
      %s4683 = smul.addr %s4682, 8
      %s4684 = scalar_lea.vmem %s6, %s4683
      // Predicated region
      $region45: #{emnist_forward.2} parent=43 // pred_check
        %p4685 = pneg %p166
      $region46: #{emnist_forward.2} parent=43 // pred_check_branch
        %4687 = sbr.rel (%p4685) target = $region48
      $region47: #{emnist_forward.2} parent=43 // pred_region
        %s4688 = smul.u32 8, %s17
      $region48: #{emnist_forward.2} parent=43 // pred_fallthru
        _
    $region44: #{emnist_forward.2} parent=5 // pred_fallthru
      _
    %p4689 = scmp.le.s32.totalorder 2, %s12
    // Predicated region
    $region49: #{emnist_forward.2} parent=5 // pred_check
      %p4690 = pneg %p4689
    $region50: #{emnist_forward.2} parent=5 // pred_check_branch
      %4692 = sbr.rel (%p4690) target = $region52
    $region51: #{emnist_forward.2} parent=5 // pred_region
      %s4693 = ssub.s32 %s12, 2
      // Predicated region
      $region53: #{emnist_forward.2} parent=51 // pred_check
        %p4694 = pneg %p172
      $region54: #{emnist_forward.2} parent=51 // pred_check_branch
        %4696 = sbr.rel (%p4694) target = $region56
      $region55: #{emnist_forward.2} parent=51 // pred_region
        %s4697 = smul.u32 8, %s18
        %p4698 = scmp.lt.s32.totalorder %s4697, 15
        %s4699 = scalar_select %p4698, %s4697, 15
        %s4700 = smul.addr %s4699, 2
        %s4701 = smul.addr %s4700, 8
        %s4702 = scalar_lea.vmem %s6, %s4701
      $region56: #{emnist_forward.2} parent=51 // pred_fallthru
        _
    $region52: #{emnist_forward.2} parent=5 // pred_fallthru
      _
  $region6: #{emnist_forward.2} parent=0 // loop_footer
    %s16 = sadd.s32 1, %s12
  $region7: #{emnist_forward.2} parent=0 // loop_footer_branch
    %11 = sbr.rel target = $region3
  $region8: #{emnist_forward.2} parent=0 // loop_exit
    _

</llo_original>
